<compile_context>
chip_gen: v6e
topology: v6e:2x2x1
jax: 0.10.0
libtpu: 0.0.40
codegen_flags: <defaults>
</compile_context>

<pallas_src>
import functools
import math

import jax
import jax.numpy as jnp
from jax.experimental import pallas as pl
from jax.experimental.pallas import tpu as pltpu

_VMEM_LIMIT = 48 * 1024 * 1024          # safe cap on v5e/v6e/v7x
_LN_EPS = 1e-5
_NEG_INF = -1e20


# ---------------------------------------------------------------------------
# In-kernel helpers (traced inside the fused kernels)
# ---------------------------------------------------------------------------

def _layernorm(x, g, b, eps):
    mu = jnp.mean(x, axis=-1, keepdims=True)
    xc = x - mu
    var = jnp.mean(xc * xc, axis=-1, keepdims=True)
    return xc * jax.lax.rsqrt(var + eps) * g + b


def _attention(x_q, x_kv, w_qkv, wo_t, bo, *, heads, head_dim,
               pad_bool, causal, shared_qkv):
    """Multi-head attention.

    x_q: (Lq, E), x_kv: (Lk, E).
    w_qkv: (E, 3E) bf16 block-diagonal per-head weights [Wq|Wk|Wv], pre-transposed;
           the Wq part already carries the 1/sqrt(embed_size) scale.
    wo_t: (E, E) bf16 (fc_out weight pre-transposed), bo: (1, E) f32.
    pad_bool: (1, Lk) bool key-padding mask (True = masked) or None.
    causal: apply in-kernel lower-triangular mask.
    shared_qkv: True when x_q is x_kv (self-attention) -> single fused matmul.
    """
    E = heads * head_dim
    qb = x_q.astype(jnp.bfloat16)
    if shared_qkv:
        qkv = jnp.dot(qb, w_qkv, preferred_element_type=jnp.float32)   # (L, 3E)
        q_all = qkv[:, :E]
        k_all = qkv[:, E:2 * E]
        v_all = qkv[:, 2 * E:]
    else:
        kvb = x_kv.astype(jnp.bfloat16)
        q_all = jnp.dot(qb, w_qkv[:, :E], preferred_element_type=jnp.float32)
        kv = jnp.dot(kvb, w_qkv[:, E:], preferred_element_type=jnp.float32)
        k_all = kv[:, :E]
        v_all = kv[:, E:]

    lq = x_q.shape[0]
    lk = x_kv.shape[0]

    # Hoisted mask work (computed ONCE, reused for every head).
    keep = None
    if causal:
        row = jax.lax.broadcasted_iota(jnp.int32, (lq, lk), 0)
        col = jax.lax.broadcasted_iota(jnp.int32, (lq, lk), 1)
        keep = row >= col

    head_outs = []
    for h in range(heads):
        sl = slice(h * head_dim, (h + 1) * head_dim)
        qh = q_all[:, sl].astype(jnp.bfloat16)
        kh = k_all[:, sl].astype(jnp.bfloat16)
        vh = v_all[:, sl].astype(jnp.bfloat16)
        # energy = qh @ kh^T without an explicit transpose.
        energy = jax.lax.dot_general(qh, kh, (((1,), (1,)), ((), ())),
                                     preferred_element_type=jnp.float32)
        if pad_bool is not None:
            energy = jnp.where(pad_bool, _NEG_INF, energy)      # masked_fill
        if keep is not None:
            energy = jnp.where(keep, energy, _NEG_INF)
        m = jnp.max(energy, axis=-1, keepdims=True)
        p = jnp.exp(energy - m)
        inv = pl.reciprocal(jnp.sum(p, axis=-1, keepdims=True), approx=True)
        att = (p * inv).astype(jnp.bfloat16)
        head_outs.append(jnp.dot(att, vh, preferred_element_type=jnp.float32))

    # One lane-dense (Lq, E) value; no masked column stores, no scratch.
    concat = jnp.concatenate(head_outs, axis=-1).astype(jnp.bfloat16)
    return jnp.dot(concat, wo_t, preferred_element_type=jnp.float32) + bo


def _block_body(q, kv, pad_bool, w_qkv, wo, bo, g1, be1,
                w1, b1, w2, b2, g2, be2, *, heads, head_dim, eps, shared_qkv):
    """TransformerBlock.forward: attention -> LN(+res) -> FFN -> LN(+res)."""
    a = _attention(q, kv, w_qkv, wo, bo, heads=heads, head_dim=head_dim,
                   pad_bool=pad_bool, causal=False, shared_qkv=shared_qkv)
    x = _layernorm(a + q, g1, be1, eps)
    h = jnp.dot(x.astype(jnp.bfloat16), w1,
                preferred_element_type=jnp.float32) + b1
    h = jnp.maximum(h, 0.0)
    f = jnp.dot(h.astype(jnp.bfloat16), w2,
                preferred_element_type=jnp.float32) + b2
    return _layernorm(f + x, g2, be2, eps)


# ---------------------------------------------------------------------------
# Fused stack kernels: grid = (batch, layer), activation resident in VMEM
# ---------------------------------------------------------------------------

def _encoder_stack_kernel(x_ref, mask_ref,
                          wqkv_ref, wo_ref, bo_ref,
                          g1_ref, be1_ref,
                          w1_ref, b1_ref, w2_ref, b2_ref,
                          g2_ref, be2_ref,
                          out_ref, state_ref, *, heads, head_dim, eps,
                          num_layers):
    layer = pl.program_id(1)

    @pl.when(layer == 0)
    def _():
        state_ref[...] = x_ref[...].astype(jnp.float32)

    x = state_ref[...]                          # (Ls, E) f32 carried in VMEM
    pad_bool = mask_ref[...] == 0               # (1, Ls)

    y = _block_body(
        x, x, pad_bool,
        wqkv_ref[...], wo_ref[...], bo_ref[...],
        g1_ref[...], be1_ref[...],
        w1_ref[...], b1_ref[...], w2_ref[...], b2_ref[...],
        g2_ref[...], be2_ref[...],
        heads=heads, head_dim=head_dim, eps=eps, shared_qkv=True)

    state_ref[...] = y

    @pl.when(layer == num_layers - 1)
    def _():
        out_ref[...] = y.astype(out_ref.dtype)


def _decoder_stack_kernel(x_ref, enc_ref, mask_ref,
                          s_wqkv_ref, s_wo_ref, s_bo_ref,
                          ng_ref, nb_ref,
                          wqkv_ref, wo_ref, bo_ref,
                          g1_ref, be1_ref,
                          w1_ref, b1_ref, w2_ref, b2_ref,
                          g2_ref, be2_ref,
                          out_ref, state_ref, *, heads, head_dim, eps,
                          num_layers):
    layer = pl.program_id(1)

    @pl.when(layer == 0)
    def _():
        state_ref[...] = x_ref[...].astype(jnp.float32)

    x = state_ref[...]                          # (Lt, E) f32 carried in VMEM
    enc = enc_ref[...]                          # (Ls, E) bf16
    pad_bool = mask_ref[...] == 0               # (1, Ls) src padding mask

    # Causal self-attention (trg mask generated in-kernel).
    a = _attention(x, x, s_wqkv_ref[...], s_wo_ref[...], s_bo_ref[...],
                   heads=heads, head_dim=head_dim,
                   pad_bool=None, causal=True, shared_qkv=True)
    query = _layernorm(a + x, ng_ref[...], nb_ref[...], eps)

    # Cross-attention transformer block (value = key = enc_out).
    y = _block_body(
        query, enc, pad_bool,
        wqkv_ref[...], wo_ref[...], bo_ref[...],
        g1_ref[...], be1_ref[...],
        w1_ref[...], b1_ref[...], w2_ref[...], b2_ref[...],
        g2_ref[...], be2_ref[...],
        heads=heads, head_dim=head_dim, eps=eps, shared_qkv=False)

    state_ref[...] = y

    @pl.when(layer == num_layers - 1)
    def _():
        out_ref[...] = y.astype(out_ref.dtype)


def _linear_kernel(x_ref, w_ref, b_ref, out_ref):
    """y = x @ W_t + b.  x: (tm, E) bf16; W_t: (E, tv) bf16; b: (1, tv) f32."""
    out_ref[...] = jnp.dot(x_ref[...].astype(jnp.bfloat16), w_ref[...],
                           preferred_element_type=jnp.float32) + b_ref[...]


# ---------------------------------------------------------------------------
# pallas_call wrappers
# ---------------------------------------------------------------------------

def _layer_spec(shape):
    """BlockSpec for a per-layer stacked weight (leading dim = layer index)."""
    nd = len(shape)
    block = (None,) + tuple(shape[1:])
    return pl.BlockSpec(block, lambda n, l, _nd=nd: (l,) + (0,) * (_nd - 1))


def encoder_stack(x, src_mask, stacked, heads):
    """x: (N, Ls, E) f32; src_mask: (N, 1, Ls) int32; stacked: 11 stacked weights."""
    N, L, E = x.shape
    Ls = src_mask.shape[2]
    NL = stacked[0].shape[0]
    D = E // heads
    kern = functools.partial(_encoder_stack_kernel, heads=heads, head_dim=D,
                             eps=_LN_EPS, num_layers=NL)
    in_specs = [pl.BlockSpec((None, L, E), lambda n, l: (n, 0, 0)),
                pl.BlockSpec((None, 1, Ls), lambda n, l: (n, 0, 0))]
    in_specs += [_layer_spec(w.shape) for w in stacked]
    return pl.pallas_call(
        kern,
        out_shape=jax.ShapeDtypeStruct((N, L, E), jnp.bfloat16),
        grid=(N, NL),
        in_specs=in_specs,
        out_specs=pl.BlockSpec((None, L, E), lambda n, l: (n, 0, 0)),
        scratch_shapes=[pltpu.VMEM((L, E), jnp.float32)],
        compiler_params=pltpu.CompilerParams(
            dimension_semantics=("parallel", "arbitrary"),
            vmem_limit_bytes=_VMEM_LIMIT),
    )(x, src_mask, *stacked)


def decoder_stack(x, enc_out, src_mask, stacked, heads):
    """x: (N, Lt, E) f32; enc_out: (N, Ls, E) bf16; src_mask: (N,1,Ls) int32."""
    N, Lt, E = x.shape
    Ls = enc_out.shape[1]
    NL = stacked[0].shape[0]
    D = E // heads
    kern = functools.partial(_decoder_stack_kernel, heads=heads, head_dim=D,
                             eps=_LN_EPS, num_layers=NL)
    in_specs = [pl.BlockSpec((None, Lt, E), lambda n, l: (n, 0, 0)),
                pl.BlockSpec((None, Ls, E), lambda n, l: (n, 0, 0)),
                pl.BlockSpec((None, 1, Ls), lambda n, l: (n, 0, 0))]
    in_specs += [_layer_spec(w.shape) for w in stacked]
    return pl.pallas_call(
        kern,
        out_shape=jax.ShapeDtypeStruct((N, Lt, E), jnp.bfloat16),
        grid=(N, NL),
        in_specs=in_specs,
        out_specs=pl.BlockSpec((None, Lt, E), lambda n, l: (n, 0, 0)),
        scratch_shapes=[pltpu.VMEM((Lt, E), jnp.float32)],
        compiler_params=pltpu.CompilerParams(
            dimension_semantics=("parallel", "arbitrary"),
            vmem_limit_bytes=_VMEM_LIMIT),
    )(x, enc_out, src_mask, *stacked)


def _round_up(x, q):
    return ((x + q - 1) // q) * q


def _pick_tile(total, pref, quantum):
    """Largest tile <= pref that is a multiple of `quantum` and divides `total`."""
    if total <= pref:
        return total
    t = (pref // quantum) * quantum
    while t >= quantum:
        if total % t == 0:
            return t
        t -= quantum
    return total


def vocab_projection(x, w_t_pad, b_pad, vocab):
    """Final fc_out, tiled over (row tiles, vocab tiles); lane-dense output."""
    N, L, E = x.shape
    M = N * L
    Vp = w_t_pad.shape[1]
    x2 = x.reshape(M, E)
    Mp = _round_up(M, 8)
    if Mp != M:
        x2 = jnp.pad(x2, ((0, Mp - M), (0, 0)))
    tm = _pick_tile(Mp, 256, 8)
    tv = _pick_tile(Vp, 512, 128)
    out = pl.pallas_call(
        _linear_kernel,
        out_shape=jax.ShapeDtypeStruct((Mp, Vp), jnp.float32),
        grid=(Mp // tm, Vp // tv),
        in_specs=[pl.BlockSpec((tm, E), lambda i, j: (i, 0)),
                  pl.BlockSpec((E, tv), lambda i, j: (0, j)),
                  pl.BlockSpec((1, tv), lambda i, j: (0, j))],
        out_specs=pl.BlockSpec((tm, tv), lambda i, j: (i, j)),
        compiler_params=pltpu.CompilerParams(
            dimension_semantics=("parallel", "parallel"),
            vmem_limit_bytes=_VMEM_LIMIT),
    )(x2, w_t_pad, b_pad)
    return out[:M, :vocab].reshape(N, L, vocab)


# ---------------------------------------------------------------------------
# Model forward (mirrors the PyTorch module, dropout p=0 => identity)
# ---------------------------------------------------------------------------

def encoder_fwd(src, src_mask, p, heads):
    Ls = src.shape[1]
    x = p['word_emb'][src] + p['pos_emb'][jnp.arange(Ls)][None, :, :]
    return encoder_stack(x, src_mask, p['layers'], heads)        # bf16 out


def decoder_fwd(trg, enc_out, src_mask, p, heads, trg_vocab):
    Lt = trg.shape[1]
    x = p['word_emb'][trg] + p['pos_emb'][jnp.arange(Lt)][None, :, :]
    y = decoder_stack(x, enc_out, src_mask, p['layers'], heads)  # bf16 out
    return vocab_projection(y, p['fc_w'], p['fc_b'], trg_vocab)


def transformer_forward(src, trg, params, src_pad_idx, heads, trg_vocab):
    N, Ls = src.shape
    # key-padding mask kept as a tiny (N, 1, Ls) int row, never an (N, L, L) tensor.
    src_mask = (src != src_pad_idx).astype(jnp.int32).reshape(N, 1, Ls)
    enc = encoder_fwd(src, src_mask, params['encoder'], heads)
    return decoder_fwd(trg, enc, src_mask, params['decoder'], heads, trg_vocab)


# ---------------------------------------------------------------------------
# Parameter init (PyTorch-style shapes) and kernel-ready preparation
# ---------------------------------------------------------------------------

def init_params(key, src_vocab, trg_vocab, E, num_layers, H, fe, max_len):
    keys = iter(jax.random.split(key, 512))

    def rnd(shape, scale=0.1):
        return jax.random.normal(next(keys), shape, jnp.float32) * scale

    D = E // H

    def attn():
        return dict(wq=rnd((D, D)), wk=rnd((D, D)), wv=rnd((D, D)),
                    wo=rnd((E, E)), bo=rnd((1, E)))

    def tblock():
        return dict(attn=attn(),
                    norm1_g=jnp.ones((1, E), jnp.float32),
                    norm1_b=jnp.zeros((1, E), jnp.float32),
                    norm2_g=jnp.ones((1, E), jnp.float32),
                    norm2_b=jnp.zeros((1, E), jnp.float32),
                    ff_w1=rnd((fe * E, E)), ff_b1=rnd((1, fe * E)),
                    ff_w2=rnd((E, fe * E)), ff_b2=rnd((1, E)))

    def dblock():
        return dict(self_attn=attn(),
                    norm_g=jnp.ones((1, E), jnp.float32),
                    norm_b=jnp.zeros((1, E), jnp.float32),
                    block=tblock())

    encoder = dict(word_emb=rnd((src_vocab, E), 1.0),
                   pos_emb=rnd((max_len, E), 1.0),
                   layers=[tblock() for _ in range(num_layers)])
    decoder = dict(word_emb=rnd((trg_vocab, E), 1.0),
                   pos_emb=rnd((max_len, E), 1.0),
                   layers=[dblock() for _ in range(num_layers)],
                   fc_w=rnd((trg_vocab, E)), fc_b=rnd((1, trg_vocab)))
    return dict(encoder=encoder, decoder=decoder)


def _prep_attn(a, E, H):
    """Fused (E,3E) block-diagonal pre-transposed bf16 QKV weight; scale in Wq."""
    eye_h = jnp.eye(H, dtype=jnp.float32)

    def bd(w):                      # x(L,E) @ bd == per-head x_h @ w.T
        return jnp.kron(eye_h, w.T)

    scale = 1.0 / math.sqrt(E)      # reference scales by sqrt(embed_size)
    w_qkv = jnp.concatenate([bd(a['wq']) * scale, bd(a['wk']), bd(a['wv'])],
                            axis=1)
    return (w_qkv.astype(jnp.bfloat16),
            a['wo'].T.astype(jnp.bfloat16),
            a['bo'].astype(jnp.float32))


def _prep_block(b, E, H):
    return _prep_attn(b['attn'], E, H) + (
        b['norm1_g'], b['norm1_b'],
        b['ff_w1'].T.astype(jnp.bfloat16), b['ff_b1'],
        b['ff_w2'].T.astype(jnp.bfloat16), b['ff_b2'],
        b['norm2_g'], b['norm2_b'])


def _prep_dec_layer(d, E, H):
    return (_prep_attn(d['self_attn'], E, H)
            + (d['norm_g'], d['norm_b'])
            + _prep_block(d['block'], E, H))


def _stack(layers_prepped):
    """Stack each per-layer weight along a new leading layer axis."""
    n_items = len(layers_prepped[0])
    return tuple(jnp.stack([lp[i] for lp in layers_prepped], axis=0)
                 for i in range(n_items))


def prepare_params(raw, E, H, trg_vocab):
    enc, dec = raw['encoder'], raw['decoder']
    enc_layers = [_prep_block(b, E, H) for b in enc['layers']]
    dec_layers = [_prep_dec_layer(d, E, H) for d in dec['layers']]
    Vp = _round_up(trg_vocab, 128)             # lane-dense vocab projection
    fc_w_t = jnp.zeros((E, Vp), jnp.float32).at[:, :trg_vocab].set(dec['fc_w'].T)
    fc_b = jnp.zeros((1, Vp), jnp.float32).at[:, :trg_vocab].set(dec['fc_b'])
    return dict(
        encoder=dict(word_emb=enc['word_emb'], pos_emb=enc['pos_emb'],
                     layers=_stack(enc_layers)),
        decoder=dict(word_emb=dec['word_emb'], pos_emb=dec['pos_emb'],
                     layers=_stack(dec_layers),
                     fc_w=fc_w_t.astype(jnp.bfloat16), fc_b=fc_b))


# ---------------------------------------------------------------------------

if __name__ == "__main__":
    SRC_VOCAB, TRG_VOCAB = 50, 50
    SRC_PAD, TRG_PAD = 0, 0
    EMBED, LAYERS, HEADS, FWD_EXP, MAX_LEN = 32, 2, 4, 2, 16
    N, LS, LT = 2, 8, 8

    root = jax.random.PRNGKey(0)
    k_src, k_trg, k_par = jax.random.split(root, 3)

    src = jax.random.randint(k_src, (N, LS), 1, SRC_VOCAB)
    src = src.at[:, -2:].set(SRC_PAD)            # padding to exercise src mask
    trg = jax.random.randint(k_trg, (N, LT), 1, TRG_VOCAB)

    raw_params = init_params(k_par, SRC_VOCAB, TRG_VOCAB, EMBED, LAYERS, HEADS,
                             FWD_EXP, MAX_LEN)
    params = prepare_params(raw_params, EMBED, HEADS, TRG_VOCAB)

    fwd = jax.jit(lambda s, t, p: transformer_forward(s, t, p, SRC_PAD, HEADS,
                                                      TRG_VOCAB))
    out = fwd(src, trg, params)
    out = jax.block_until_ready(out)

    assert out.shape == (N, LT, TRG_VOCAB), out.shape
    assert bool(jnp.all(jnp.isfinite(out)))
    print("KERNEL_OK")
</pallas_src>

<mosaic_0001>
module attributes {stable_mosaic.version = 11 : i64} {
  func.func @_linear_kernel(%arg0: i32, %arg1: i32, %arg2: memref<16x32xbf16, #tpu.memory_space<vmem>>, %arg3: memref<32x128xbf16, #tpu.memory_space<vmem>>, %arg4: memref<1x128xf32, #tpu.memory_space<vmem>>, %arg5: memref<16x128xf32, #tpu.memory_space<vmem>>) attributes {dimension_semantics = [#tpu.dimension_semantics<parallel>, #tpu.dimension_semantics<parallel>], iteration_bounds = array<i64: 1, 1>, scalar_prefetch = 0 : i64, scratch_operands = 0 : i64, tpu.core_type = #tpu.core_type<tc>, window_params = [{transform_indices = @transform_0, window_bounds = array<i64: 16, 32>}, {transform_indices = @transform_1, window_bounds = array<i64: 32, 128>}, {transform_indices = @transform_2, window_bounds = array<i64: 1, 128>}, {transform_indices = @transform_3, window_bounds = array<i64: 16, 128>}]} {
    %c0 = arith.constant 0 : index
    %c0_0 = arith.constant 0 : index
    %0 = vector.load %arg2[%c0, %c0_0] : memref<16x32xbf16, #tpu.memory_space<vmem>>, vector<16x32xbf16>
    %c0_1 = arith.constant 0 : index
    %c0_2 = arith.constant 0 : index
    %1 = vector.load %arg3[%c0_1, %c0_2] : memref<32x128xbf16, #tpu.memory_space<vmem>>, vector<32x128xbf16>
    %cst = arith.constant dense<0.000000e+00> : vector<16x128xf32>
    %2 = tpu.matmul %0, %1, %cst {dimension_numbers = #tpu.dot_dimension_numbers<[1], [0], [0], [1], [0, 0, 1, 1], [], []>} : vector<16x32xbf16>, vector<32x128xbf16>, vector<16x128xf32> -> vector<16x128xf32>
    %c0_3 = arith.constant 0 : index
    %c0_4 = arith.constant 0 : index
    %3 = vector.load %arg4[%c0_3, %c0_4] : memref<1x128xf32, #tpu.memory_space<vmem>>, vector<1x128xf32>
    %4 = vector.broadcast %3 : vector<1x128xf32> to vector<16x128xf32>
    %5 = arith.addf %2, %4 : vector<16x128xf32>
    %c0_5 = arith.constant 0 : index
    %c0_6 = arith.constant 0 : index
    %6 = vector.load %arg5[%c0_5, %c0_6] : memref<16x128xf32, #tpu.memory_space<vmem>>, vector<16x128xf32>
    tpu.vector_store %arg5[%c0_5, %c0_6], %5 {strides = array<i32>} : memref<16x128xf32, #tpu.memory_space<vmem>>, vector<16x128xf32>,
    return
  }
  func.func @transform_0(%arg0: i32, %arg1: i32) -> (i32, i32) {
    %c0_i32 = arith.constant 0 : i32
    %c0_i32_0 = arith.constant 0 : i32
    return %arg0, %c0_i32 : i32, i32
  }
  func.func @transform_1(%arg0: i32, %arg1: i32) -> (i32, i32) {
    %c0_i32 = arith.constant 0 : i32
    %c0_i32_0 = arith.constant 0 : i32
    return %c0_i32, %arg1 : i32, i32
  }
  func.func @transform_2(%arg0: i32, %arg1: i32) -> (i32, i32) {
    %c0_i32 = arith.constant 0 : i32
    %c0_i32_0 = arith.constant 0 : i32
    return %c0_i32, %arg1 : i32, i32
  }
  func.func @transform_3(%arg0: i32, %arg1: i32) -> (i32, i32) {
    %c0_i32 = arith.constant 0 : i32
    return %arg0, %arg1 : i32, i32
  }
}

module attributes {stable_mosaic.version = 11 : i64} {
  func.func @_encoder_stack_kernel(%arg0: i32, %arg1: i32, %arg2: memref<1x8x32xf32, #tpu.memory_space<vmem>>, %arg3: memref<1x1x8xi32, #tpu.memory_space<vmem>>, %arg4: memref<1x32x96xbf16, #tpu.memory_space<vmem>>, %arg5: memref<1x32x32xbf16, #tpu.memory_space<vmem>>, %arg6: memref<1x1x32xf32, #tpu.memory_space<vmem>>, %arg7: memref<1x1x32xf32, #tpu.memory_space<vmem>>, %arg8: memref<1x1x32xf32, #tpu.memory_space<vmem>>, %arg9: memref<1x32x64xbf16, #tpu.memory_space<vmem>>, %arg10: memref<1x1x64xf32, #tpu.memory_space<vmem>>, %arg11: memref<1x64x32xbf16, #tpu.memory_space<vmem>>, %arg12: memref<1x1x32xf32, #tpu.memory_space<vmem>>, %arg13: memref<1x1x32xf32, #tpu.memory_space<vmem>>, %arg14: memref<1x1x32xf32, #tpu.memory_space<vmem>>, %arg15: memref<1x8x32xbf16, #tpu.memory_space<vmem>>, %arg16: memref<8x32xf32, #tpu.memory_space<vmem>>) attributes {dimension_semantics = [#tpu.dimension_semantics<parallel>, #tpu.dimension_semantics<arbitrary>], iteration_bounds = array<i64: 2, 2>, scalar_prefetch = 0 : i64, scratch_operands = 1 : i64, tpu.core_type = #tpu.core_type<tc>, window_params = [{transform_indices = @transform_0, window_bounds = array<i64: 1, 8, 32>}, {transform_indices = @transform_1, window_bounds = array<i64: 1, 1, 8>}, {transform_indices = @transform_2, window_bounds = array<i64: 1, 32, 96>}, {transform_indices = @transform_3, window_bounds = array<i64: 1, 32, 32>}, {transform_indices = @transform_4, window_bounds = array<i64: 1, 1, 32>}, {transform_indices = @transform_5, window_bounds = array<i64: 1, 1, 32>}, {transform_indices = @transform_6, window_bounds = array<i64: 1, 1, 32>}, {transform_indices = @transform_7, window_bounds = array<i64: 1, 32, 64>}, {transform_indices = @transform_8, window_bounds = array<i64: 1, 1, 64>}, {transform_indices = @transform_9, window_bounds = array<i64: 1, 64, 32>}, {transform_indices = @transform_10, window_bounds = array<i64: 1, 1, 32>}, {transform_indices = @transform_11, window_bounds = array<i64: 1, 1, 32>}, {transform_indices = @transform_12, window_bounds = array<i64: 1, 1, 32>}, {transform_indices = @transform_13, window_bounds = array<i64: 1, 8, 32>}]} {
    %c0_i32 = arith.constant 0 : i32
    %0 = arith.cmpi eq, %arg1, %c0_i32 : i32
    %1 = arith.extui %0 : i1 to i32
    %c0_i32_0 = arith.constant 0 : i32
    %2 = arith.cmpi ne, %1, %c0_i32_0 : i32
    scf.if %2 {
      %c0_76 = arith.constant 0 : index
      %c0_77 = arith.constant 0 : index
      %c0_78 = arith.constant 0 : index
      %188 = vector.load %arg2[%c0_76, %c0_77, %c0_78] : memref<1x8x32xf32, #tpu.memory_space<vmem>>, vector<1x8x32xf32>
      %189 = vector.shape_cast %188 : vector<1x8x32xf32> to vector<8x32xf32>
      %c0_79 = arith.constant 0 : index
      %c0_80 = arith.constant 0 : index
      %190 = vector.load %arg16[%c0_79, %c0_80] : memref<8x32xf32, #tpu.memory_space<vmem>>, vector<8x32xf32>
      tpu.vector_store %arg16[%c0_79, %c0_80], %189 {strides = array<i32>} : memref<8x32xf32, #tpu.memory_space<vmem>>, vector<8x32xf32>,
    } else {
    }
    %c0 = arith.constant 0 : index
    %c0_1 = arith.constant 0 : index
    %3 = vector.load %arg16[%c0, %c0_1] : memref<8x32xf32, #tpu.memory_space<vmem>>, vector<8x32xf32>
    %c0_2 = arith.constant 0 : index
    %c0_3 = arith.constant 0 : index
    %c0_4 = arith.constant 0 : index
    %4 = vector.load %arg3[%c0_2, %c0_3, %c0_4] : memref<1x1x8xi32, #tpu.memory_space<vmem>>, vector<1x1x8xi32>
    %5 = vector.shape_cast %4 : vector<1x1x8xi32> to vector<1x8xi32>
    %c0_i32_5 = arith.constant 0 : i32
    %6 = vector.broadcast %c0_i32_5 : i32 to vector<1x8xi32>
    %7 = arith.cmpi eq, %5, %6 : vector<1x8xi32>
    %c0_6 = arith.constant 0 : index
    %c0_7 = arith.constant 0 : index
    %c0_8 = arith.constant 0 : index
    %8 = vector.load %arg4[%c0_6, %c0_7, %c0_8] : memref<1x32x96xbf16, #tpu.memory_space<vmem>>, vector<1x32x96xbf16>
    %9 = vector.shape_cast %8 : vector<1x32x96xbf16> to vector<32x96xbf16>
    %c0_9 = arith.constant 0 : index
    %c0_10 = arith.constant 0 : index
    %c0_11 = arith.constant 0 : index
    %10 = vector.load %arg5[%c0_9, %c0_10, %c0_11] : memref<1x32x32xbf16, #tpu.memory_space<vmem>>, vector<1x32x32xbf16>
    %11 = vector.shape_cast %10 : vector<1x32x32xbf16> to vector<32x32xbf16>
    %c0_12 = arith.constant 0 : index
    %c0_13 = arith.constant 0 : index
    %c0_14 = arith.constant 0 : index
    %12 = vector.load %arg6[%c0_12, %c0_13, %c0_14] : memref<1x1x32xf32, #tpu.memory_space<vmem>>, vector<1x1x32xf32>
    %13 = vector.shape_cast %12 : vector<1x1x32xf32> to vector<1x32xf32>
    %c0_15 = arith.constant 0 : index
    %c0_16 = arith.constant 0 : index
    %c0_17 = arith.constant 0 : index
    %14 = vector.load %arg7[%c0_15, %c0_16, %c0_17] : memref<1x1x32xf32, #tpu.memory_space<vmem>>, vector<1x1x32xf32>
    %15 = vector.shape_cast %14 : vector<1x1x32xf32> to vector<1x32xf32>
    %c0_18 = arith.constant 0 : index
    %c0_19 = arith.constant 0 : index
    %c0_20 = arith.constant 0 : index
    %16 = vector.load %arg8[%c0_18, %c0_19, %c0_20] : memref<1x1x32xf32, #tpu.memory_space<vmem>>, vector<1x1x32xf32>
    %17 = vector.shape_cast %16 : vector<1x1x32xf32> to vector<1x32xf32>
    %c0_21 = arith.constant 0 : index
    %c0_22 = arith.constant 0 : index
    %c0_23 = arith.constant 0 : index
    %18 = vector.load %arg9[%c0_21, %c0_22, %c0_23] : memref<1x32x64xbf16, #tpu.memory_space<vmem>>, vector<1x32x64xbf16>
    %19 = vector.shape_cast %18 : vector<1x32x64xbf16> to vector<32x64xbf16>
    %c0_24 = arith.constant 0 : index
    %c0_25 = arith.constant 0 : index
    %c0_26 = arith.constant 0 : index
    %20 = vector.load %arg10[%c0_24, %c0_25, %c0_26] : memref<1x1x64xf32, #tpu.memory_space<vmem>>, vector<1x1x64xf32>
    %21 = vector.shape_cast %20 : vector<1x1x64xf32> to vector<1x64xf32>
    %c0_27 = arith.constant 0 : index
    %c0_28 = arith.constant 0 : index
    %c0_29 = arith.constant 0 : index
    %22 = vector.load %arg11[%c0_27, %c0_28, %c0_29] : memref<1x64x32xbf16, #tpu.memory_space<vmem>>, vector<1x64x32xbf16>
    %23 = vector.shape_cast %22 : vector<1x64x32xbf16> to vector<64x32xbf16>
    %c0_30 = arith.constant 0 : index
    %c0_31 = arith.constant 0 : index
    %c0_32 = arith.constant 0 : index
    %24 = vector.load %arg12[%c0_30, %c0_31, %c0_32] : memref<1x1x32xf32, #tpu.memory_space<vmem>>, vector<1x1x32xf32>
    %25 = vector.shape_cast %24 : vector<1x1x32xf32> to vector<1x32xf32>
    %c0_33 = arith.constant 0 : index
    %c0_34 = arith.constant 0 : index
    %c0_35 = arith.constant 0 : index
    %26 = vector.load %arg13[%c0_33, %c0_34, %c0_35] : memref<1x1x32xf32, #tpu.memory_space<vmem>>, vector<1x1x32xf32>
    %27 = vector.shape_cast %26 : vector<1x1x32xf32> to vector<1x32xf32>
    %c0_36 = arith.constant 0 : index
    %c0_37 = arith.constant 0 : index
    %c0_38 = arith.constant 0 : index
    %28 = vector.load %arg14[%c0_36, %c0_37, %c0_38] : memref<1x1x32xf32, #tpu.memory_space<vmem>>, vector<1x1x32xf32>
    %29 = vector.shape_cast %28 : vector<1x1x32xf32> to vector<1x32xf32>
    %30 = arith.truncf %3 : vector<8x32xf32> to vector<8x32xbf16>
    %cst = arith.constant dense<0.000000e+00> : vector<8x96xf32>
    %31 = tpu.matmul %30, %9, %cst {dimension_numbers = #tpu.dot_dimension_numbers<[1], [0], [0], [1], [0, 0, 1, 1], [], []>} : vector<8x32xbf16>, vector<32x96xbf16>, vector<8x96xf32> -> vector<8x96xf32>
    %32 = vector.extract_strided_slice %31 {offsets = [0, 0], sizes = [8, 32], strides = [1, 1]} : vector<8x96xf32> to vector<8x32xf32>
    %33 = vector.extract_strided_slice %31 {offsets = [0, 32], sizes = [8, 32], strides = [1, 1]} : vector<8x96xf32> to vector<8x32xf32>
    %34 = vector.extract_strided_slice %31 {offsets = [0, 64], sizes = [8, 32], strides = [1, 1]} : vector<8x96xf32> to vector<8x32xf32>
    %35 = vector.extract_strided_slice %32 {offsets = [0, 0], sizes = [8, 8], strides = [1, 1]} : vector<8x32xf32> to vector<8x8xf32>
    %36 = arith.truncf %35 : vector<8x8xf32> to vector<8x8xbf16>
    %37 = vector.extract_strided_slice %33 {offsets = [0, 0], sizes = [8, 8], strides = [1, 1]} : vector<8x32xf32> to vector<8x8xf32>
    %38 = arith.truncf %37 : vector<8x8xf32> to vector<8x8xbf16>
    %39 = vector.extract_strided_slice %34 {offsets = [0, 0], sizes = [8, 8], strides = [1, 1]} : vector<8x32xf32> to vector<8x8xf32>
    %40 = arith.truncf %39 : vector<8x8xf32> to vector<8x8xbf16>
    %cst_39 = arith.constant dense<0.000000e+00> : vector<8x8xf32>
    %41 = tpu.matmul %36, %38, %cst_39 {dimension_numbers = #tpu.dot_dimension_numbers<[1], [1], [0], [0], [0, 0, 1, 0], [], []>} : vector<8x8xbf16>, vector<8x8xbf16>, vector<8x8xf32> -> vector<8x8xf32>
    %cst_40 = arith.constant -1.000000e+20 : f32
    %42 = vector.shape_cast %7 : vector<1x8xi1> to vector<1x8xi1>
    %43 = vector.broadcast %42 : vector<1x8xi1> to vector<8x8xi1>
    %44 = vector.broadcast %cst_40 : f32 to vector<8x8xf32>
    %45 = arith.select %43, %44, %41 : vector<8x8xi1>, vector<8x8xf32>
    %cst_41 = arith.constant dense<0xFF800000> : vector<8xf32>
    %46 = vector.multi_reduction <maximumf>, %45, %cst_41 [1] : vector<8x8xf32> to vector<8xf32>
    %47 = vector.shape_cast %46 : vector<8xf32> to vector<8x1xf32>
    %48 = vector.broadcast %47 : vector<8x1xf32> to vector<8x8xf32>
    %49 = arith.subf %45, %48 : vector<8x8xf32>
    %50 = math.exp %49 : vector<8x8xf32>
    %cst_42 = arith.constant dense<0.000000e+00> : vector<8xf32>
    %51 = vector.multi_reduction <add>, %50, %cst_42 [1] : vector<8x8xf32> to vector<8xf32>
    %52 = vector.shape_cast %51 : vector<8xf32> to vector<8x1xf32>
    %53 = tpu.reciprocal %52 {approx = true} : vector<8x1xf32> -> vector<8x1xf32>
    %54 = vector.broadcast %53 : vector<8x1xf32> to vector<8x8xf32>
    %55 = arith.mulf %50, %54 : vector<8x8xf32>
    %56 = arith.truncf %55 : vector<8x8xf32> to vector<8x8xbf16>
    %cst_43 = arith.constant dense<0.000000e+00> : vector<8x8xf32>
    %57 = tpu.matmul %56, %40, %cst_43 {dimension_numbers = #tpu.dot_dimension_numbers<[1], [0], [0], [1], [0, 0, 1, 1], [], []>} : vector<8x8xbf16>, vector<8x8xbf16>, vector<8x8xf32> -> vector<8x8xf32>
    %58 = vector.extract_strided_slice %32 {offsets = [0, 8], sizes = [8, 8], strides = [1, 1]} : vector<8x32xf32> to vector<8x8xf32>
    %59 = arith.truncf %58 : vector<8x8xf32> to vector<8x8xbf16>
    %60 = vector.extract_strided_slice %33 {offsets = [0, 8], sizes = [8, 8], strides = [1, 1]} : vector<8x32xf32> to vector<8x8xf32>
    %61 = arith.truncf %60 : vector<8x8xf32> to vector<8x8xbf16>
    %62 = vector.extract_strided_slice %34 {offsets = [0, 8], sizes = [8, 8], strides = [1, 1]} : vector<8x32xf32> to vector<8x8xf32>
    %63 = arith.truncf %62 : vector<8x8xf32> to vector<8x8xbf16>
    %cst_44 = arith.constant dense<0.000000e+00> : vector<8x8xf32>
    %64 = tpu.matmul %59, %61, %cst_44 {dimension_numbers = #tpu.dot_dimension_numbers<[1], [1], [0], [0], [0, 0, 1, 0], [], []>} : vector<8x8xbf16>, vector<8x8xbf16>, vector<8x8xf32> -> vector<8x8xf32>
    %cst_45 = arith.constant -1.000000e+20 : f32
    %65 = vector.shape_cast %7 : vector<1x8xi1> to vector<1x8xi1>
    %66 = vector.broadcast %65 : vector<1x8xi1> to vector<8x8xi1>
    %67 = vector.broadcast %cst_45 : f32 to vector<8x8xf32>
    %68 = arith.select %66, %67, %64 : vector<8x8xi1>, vector<8x8xf32>
    %cst_46 = arith.constant dense<0xFF800000> : vector<8xf32>
    %69 = vector.multi_reduction <maximumf>, %68, %cst_46 [1] : vector<8x8xf32> to vector<8xf32>
    %70 = vector.shape_cast %69 : vector<8xf32> to vector<8x1xf32>
    %71 = vector.broadcast %70 : vector<8x1xf32> to vector<8x8xf32>
    %72 = arith.subf %68, %71 : vector<8x8xf32>
    %73 = math.exp %72 : vector<8x8xf32>
    %cst_47 = arith.constant dense<0.000000e+00> : vector<8xf32>
    %74 = vector.multi_reduction <add>, %73, %cst_47 [1] : vector<8x8xf32> to vector<8xf32>
    %75 = vector.shape_cast %74 : vector<8xf32> to vector<8x1xf32>
    %76 = tpu.reciprocal %75 {approx = true} : vector<8x1xf32> -> vector<8x1xf32>
    %77 = vector.broadcast %76 : vector<8x1xf32> to vector<8x8xf32>
    %78 = arith.mulf %73, %77 : vector<8x8xf32>
    %79 = arith.truncf %78 : vector<8x8xf32> to vector<8x8xbf16>
    %cst_48 = arith.constant dense<0.000000e+00> : vector<8x8xf32>
    %80 = tpu.matmul %79, %63, %cst_48 {dimension_numbers = #tpu.dot_dimension_numbers<[1], [0], [0], [1], [0, 0, 1, 1], [], []>} : vector<8x8xbf16>, vector<8x8xbf16>, vector<8x8xf32> -> vector<8x8xf32>
    %81 = vector.extract_strided_slice %32 {offsets = [0, 16], sizes = [8, 8], strides = [1, 1]} : vector<8x32xf32> to vector<8x8xf32>
    %82 = arith.truncf %81 : vector<8x8xf32> to vector<8x8xbf16>
    %83 = vector.extract_strided_slice %33 {offsets = [0, 16], sizes = [8, 8], strides = [1, 1]} : vector<8x32xf32> to vector<8x8xf32>
    %84 = arith.truncf %83 : vector<8x8xf32> to vector<8x8xbf16>
    %85 = vector.extract_strided_slice %34 {offsets = [0, 16], sizes = [8, 8], strides = [1, 1]} : vector<8x32xf32> to vector<8x8xf32>
    %86 = arith.truncf %85 : vector<8x8xf32> to vector<8x8xbf16>
    %cst_49 = arith.constant dense<0.000000e+00> : vector<8x8xf32>
    %87 = tpu.matmul %82, %84, %cst_49 {dimension_numbers = #tpu.dot_dimension_numbers<[1], [1], [0], [0], [0, 0, 1, 0], [], []>} : vector<8x8xbf16>, vector<8x8xbf16>, vector<8x8xf32> -> vector<8x8xf32>
    %cst_50 = arith.constant -1.000000e+20 : f32
    %88 = vector.shape_cast %7 : vector<1x8xi1> to vector<1x8xi1>
    %89 = vector.broadcast %88 : vector<1x8xi1> to vector<8x8xi1>
    %90 = vector.broadcast %cst_50 : f32 to vector<8x8xf32>
    %91 = arith.select %89, %90, %87 : vector<8x8xi1>, vector<8x8xf32>
    %cst_51 = arith.constant dense<0xFF800000> : vector<8xf32>
    %92 = vector.multi_reduction <maximumf>, %91, %cst_51 [1] : vector<8x8xf32> to vector<8xf32>
    %93 = vector.shape_cast %92 : vector<8xf32> to vector<8x1xf32>
    %94 = vector.broadcast %93 : vector<8x1xf32> to vector<8x8xf32>
    %95 = arith.subf %91, %94 : vector<8x8xf32>
    %96 = math.exp %95 : vector<8x8xf32>
    %cst_52 = arith.constant dense<0.000000e+00> : vector<8xf32>
    %97 = vector.multi_reduction <add>, %96, %cst_52 [1] : vector<8x8xf32> to vector<8xf32>
    %98 = vector.shape_cast %97 : vector<8xf32> to vector<8x1xf32>
    %99 = tpu.reciprocal %98 {approx = true} : vector<8x1xf32> -> vector<8x1xf32>
    %100 = vector.broadcast %99 : vector<8x1xf32> to vector<8x8xf32>
    %101 = arith.mulf %96, %100 : vector<8x8xf32>
    %102 = arith.truncf %101 : vector<8x8xf32> to vector<8x8xbf16>
    %cst_53 = arith.constant dense<0.000000e+00> : vector<8x8xf32>
    %103 = tpu.matmul %102, %86, %cst_53 {dimension_numbers = #tpu.dot_dimension_numbers<[1], [0], [0], [1], [0, 0, 1, 1], [], []>} : vector<8x8xbf16>, vector<8x8xbf16>, vector<8x8xf32> -> vector<8x8xf32>
    %104 = vector.extract_strided_slice %32 {offsets = [0, 24], sizes = [8, 8], strides = [1, 1]} : vector<8x32xf32> to vector<8x8xf32>
    %105 = arith.truncf %104 : vector<8x8xf32> to vector<8x8xbf16>
    %106 = vector.extract_strided_slice %33 {offsets = [0, 24], sizes = [8, 8], strides = [1, 1]} : vector<8x32xf32> to vector<8x8xf32>
    %107 = arith.truncf %106 : vector<8x8xf32> to vector<8x8xbf16>
    %108 = vector.extract_strided_slice %34 {offsets = [0, 24], sizes = [8, 8], strides = [1, 1]} : vector<8x32xf32> to vector<8x8xf32>
    %109 = arith.truncf %108 : vector<8x8xf32> to vector<8x8xbf16>
    %cst_54 = arith.constant dense<0.000000e+00> : vector<8x8xf32>
    %110 = tpu.matmul %105, %107, %cst_54 {dimension_numbers = #tpu.dot_dimension_numbers<[1], [1], [0], [0], [0, 0, 1, 0], [], []>} : vector<8x8xbf16>, vector<8x8xbf16>, vector<8x8xf32> -> vector<8x8xf32>
    %cst_55 = arith.constant -1.000000e+20 : f32
    %111 = vector.shape_cast %7 : vector<1x8xi1> to vector<1x8xi1>
    %112 = vector.broadcast %111 : vector<1x8xi1> to vector<8x8xi1>
    %113 = vector.broadcast %cst_55 : f32 to vector<8x8xf32>
    %114 = arith.select %112, %113, %110 : vector<8x8xi1>, vector<8x8xf32>
    %cst_56 = arith.constant dense<0xFF800000> : vector<8xf32>
    %115 = vector.multi_reduction <maximumf>, %114, %cst_56 [1] : vector<8x8xf32> to vector<8xf32>
    %116 = vector.shape_cast %115 : vector<8xf32> to vector<8x1xf32>
    %117 = vector.broadcast %116 : vector<8x1xf32> to vector<8x8xf32>
    %118 = arith.subf %114, %117 : vector<8x8xf32>
    %119 = math.exp %118 : vector<8x8xf32>
    %cst_57 = arith.constant dense<0.000000e+00> : vector<8xf32>
    %120 = vector.multi_reduction <add>, %119, %cst_57 [1] : vector<8x8xf32> to vector<8xf32>
    %121 = vector.shape_cast %120 : vector<8xf32> to vector<8x1xf32>
    %122 = tpu.reciprocal %121 {approx = true} : vector<8x1xf32> -> vector<8x1xf32>
    %123 = vector.broadcast %122 : vector<8x1xf32> to vector<8x8xf32>
    %124 = arith.mulf %119, %123 : vector<8x8xf32>
    %125 = arith.truncf %124 : vector<8x8xf32> to vector<8x8xbf16>
    %cst_58 = arith.constant dense<0.000000e+00> : vector<8x8xf32>
    %126 = tpu.matmul %125, %109, %cst_58 {dimension_numbers = #tpu.dot_dimension_numbers<[1], [0], [0], [1], [0, 0, 1, 1], [], []>} : vector<8x8xbf16>, vector<8x8xbf16>, vector<8x8xf32> -> vector<8x8xf32>
    %127 = tpu.concatenate %57, %80, %103, %126 in 1 : vector<8x8xf32>, vector<8x8xf32>, vector<8x8xf32>, vector<8x8xf32> -> vector<8x32xf32>
    %128 = arith.truncf %127 : vector<8x32xf32> to vector<8x32xbf16>
    %cst_59 = arith.constant dense<0.000000e+00> : vector<8x32xf32>
    %129 = tpu.matmul %128, %11, %cst_59 {dimension_numbers = #tpu.dot_dimension_numbers<[1], [0], [0], [1], [0, 0, 1, 1], [], []>} : vector<8x32xbf16>, vector<32x32xbf16>, vector<8x32xf32> -> vector<8x32xf32>
    %130 = vector.broadcast %13 : vector<1x32xf32> to vector<8x32xf32>
    %131 = arith.addf %129, %130 : vector<8x32xf32>
    %132 = arith.addf %131, %3 : vector<8x32xf32>
    %cst_60 = arith.constant dense<0.000000e+00> : vector<8xf32>
    %133 = vector.multi_reduction <add>, %132, %cst_60 [1] : vector<8x32xf32> to vector<8xf32>
    %134 = vector.shape_cast %133 : vector<8xf32> to vector<8x1xf32>
    %cst_61 = arith.constant 3.200000e+01 : f32
    %135 = vector.broadcast %cst_61 : f32 to vector<8x1xf32>
    %136 = arith.divf %134, %135 : vector<8x1xf32>
    %137 = vector.broadcast %136 : vector<8x1xf32> to vector<8x32xf32>
    %138 = arith.subf %132, %137 : vector<8x32xf32>
    %139 = arith.mulf %138, %138 : vector<8x32xf32>
    %cst_62 = arith.constant dense<0.000000e+00> : vector<8xf32>
    %140 = vector.multi_reduction <add>, %139, %cst_62 [1] : vector<8x32xf32> to vector<8xf32>
    %141 = vector.shape_cast %140 : vector<8xf32> to vector<8x1xf32>
    %cst_63 = arith.constant 3.200000e+01 : f32
    %142 = vector.broadcast %cst_63 : f32 to vector<8x1xf32>
    %143 = arith.divf %141, %142 : vector<8x1xf32>
    %cst_64 = arith.constant 9.99999974E-6 : f32
    %144 = vector.broadcast %cst_64 : f32 to vector<8x1xf32>
    %145 = arith.addf %143, %144 : vector<8x1xf32>
    %146 = math.rsqrt %145 : vector<8x1xf32>
    %147 = vector.broadcast %146 : vector<8x1xf32> to vector<8x32xf32>
    %148 = arith.mulf %138, %147 : vector<8x32xf32>
    %149 = vector.broadcast %15 : vector<1x32xf32> to vector<8x32xf32>
    %150 = arith.mulf %148, %149 : vector<8x32xf32>
    %151 = vector.broadcast %17 : vector<1x32xf32> to vector<8x32xf32>
    %152 = arith.addf %150, %151 : vector<8x32xf32>
    %153 = arith.truncf %152 : vector<8x32xf32> to vector<8x32xbf16>
    %cst_65 = arith.constant dense<0.000000e+00> : vector<8x64xf32>
    %154 = tpu.matmul %153, %19, %cst_65 {dimension_numbers = #tpu.dot_dimension_numbers<[1], [0], [0], [1], [0, 0, 1, 1], [], []>} : vector<8x32xbf16>, vector<32x64xbf16>, vector<8x64xf32> -> vector<8x64xf32>
    %155 = vector.broadcast %21 : vector<1x64xf32> to vector<8x64xf32>
    %156 = arith.addf %154, %155 : vector<8x64xf32>
    %cst_66 = arith.constant 0.000000e+00 : f32
    %157 = vector.broadcast %cst_66 : f32 to vector<8x64xf32>
    %158 = arith.maximumf %156, %157 : vector<8x64xf32>
    %159 = arith.truncf %158 : vector<8x64xf32> to vector<8x64xbf16>
    %cst_67 = arith.constant dense<0.000000e+00> : vector<8x32xf32>
    %160 = tpu.matmul %159, %23, %cst_67 {dimension_numbers = #tpu.dot_dimension_numbers<[1], [0], [0], [1], [0, 0, 1, 1], [], []>} : vector<8x64xbf16>, vector<64x32xbf16>, vector<8x32xf32> -> vector<8x32xf32>
    %161 = vector.broadcast %25 : vector<1x32xf32> to vector<8x32xf32>
    %162 = arith.addf %160, %161 : vector<8x32xf32>
    %163 = arith.addf %162, %152 : vector<8x32xf32>
    %cst_68 = arith.constant dense<0.000000e+00> : vector<8xf32>
    %164 = vector.multi_reduction <add>, %163, %cst_68 [1] : vector<8x32xf32> to vector<8xf32>
    %165 = vector.shape_cast %164 : vector<8xf32> to vector<8x1xf32>
    %cst_69 = arith.constant 3.200000e+01 : f32
    %166 = vector.broadcast %cst_69 : f32 to vector<8x1xf32>
    %167 = arith.divf %165, %166 : vector<8x1xf32>
    %168 = vector.broadcast %167 : vector<8x1xf32> to vector<8x32xf32>
    %169 = arith.subf %163, %168 : vector<8x32xf32>
    %170 = arith.mulf %169, %169 : vector<8x32xf32>
    %cst_70 = arith.constant dense<0.000000e+00> : vector<8xf32>
    %171 = vector.multi_reduction <add>, %170, %cst_70 [1] : vector<8x32xf32> to vector<8xf32>
    %172 = vector.shape_cast %171 : vector<8xf32> to vector<8x1xf32>
    %cst_71 = arith.constant 3.200000e+01 : f32
    %173 = vector.broadcast %cst_71 : f32 to vector<8x1xf32>
    %174 = arith.divf %172, %173 : vector<8x1xf32>
    %cst_72 = arith.constant 9.99999974E-6 : f32
    %175 = vector.broadcast %cst_72 : f32 to vector<8x1xf32>
    %176 = arith.addf %174, %175 : vector<8x1xf32>
    %177 = math.rsqrt %176 : vector<8x1xf32>
    %178 = vector.broadcast %177 : vector<8x1xf32> to vector<8x32xf32>
    %179 = arith.mulf %169, %178 : vector<8x32xf32>
    %180 = vector.broadcast %27 : vector<1x32xf32> to vector<8x32xf32>
    %181 = arith.mulf %179, %180 : vector<8x32xf32>
    %182 = vector.broadcast %29 : vector<1x32xf32> to vector<8x32xf32>
    %183 = arith.addf %181, %182 : vector<8x32xf32>
    %c0_73 = arith.constant 0 : index
    %c0_74 = arith.constant 0 : index
    %184 = vector.load %arg16[%c0_73, %c0_74] : memref<8x32xf32, #tpu.memory_space<vmem>>, vector<8x32xf32>
    tpu.vector_store %arg16[%c0_73, %c0_74], %183 {strides = array<i32>} : memref<8x32xf32, #tpu.memory_space<vmem>>, vector<8x32xf32>,
    %c1_i32 = arith.constant 1 : i32
    %185 = arith.cmpi eq, %arg1, %c1_i32 : i32
    %186 = arith.extui %185 : i1 to i32
    %c0_i32_75 = arith.constant 0 : i32
    %187 = arith.cmpi ne, %186, %c0_i32_75 : i32
    scf.if %187 {
      %188 = arith.truncf %183 : vector<8x32xf32> to vector<8x32xbf16>
      %c0_76 = arith.constant 0 : index
      %c0_77 = arith.constant 0 : index
      %c0_78 = arith.constant 0 : index
      %189 = vector.load %arg15[%c0_76, %c0_77, %c0_78] : memref<1x8x32xbf16, #tpu.memory_space<vmem>>, vector<1x8x32xbf16>
      %190 = vector.shape_cast %189 : vector<1x8x32xbf16> to vector<8x32xbf16>
      %191 = vector.shape_cast %188 : vector<8x32xbf16> to vector<1x8x32xbf16>
      tpu.vector_store %arg15[%c0_76, %c0_77, %c0_78], %191 {strides = array<i32>} : memref<1x8x32xbf16, #tpu.memory_space<vmem>>, vector<1x8x32xbf16>,
    } else {
    }
    return
  }
  func.func @transform_0(%arg0: i32, %arg1: i32) -> (i32, i32, i32) {
    %c0_i32 = arith.constant 0 : i32
    %c0_i32_0 = arith.constant 0 : i32
    %c0_i32_1 = arith.constant 0 : i32
    return %arg0, %c0_i32, %c0_i32_0 : i32, i32, i32
  }
  func.func @transform_1(%arg0: i32, %arg1: i32) -> (i32, i32, i32) {
    %c0_i32 = arith.constant 0 : i32
    %c0_i32_0 = arith.constant 0 : i32
    %c0_i32_1 = arith.constant 0 : i32
    return %arg0, %c0_i32, %c0_i32_0 : i32, i32, i32
  }
  func.func @transform_2(%arg0: i32, %arg1: i32) -> (i32, i32, i32) {
    %c0_i32 = arith.constant 0 : i32
    %c0_i32_0 = arith.constant 0 : i32
    %c0_i32_1 = arith.constant 0 : i32
    return %arg1, %c0_i32, %c0_i32_0 : i32, i32, i32
  }
  func.func @transform_3(%arg0: i32, %arg1: i32) -> (i32, i32, i32) {
    %c0_i32 = arith.constant 0 : i32
    %c0_i32_0 = arith.constant 0 : i32
    %c0_i32_1 = arith.constant 0 : i32
    return %arg1, %c0_i32, %c0_i32_0 : i32, i32, i32
  }
  func.func @transform_4(%arg0: i32, %arg1: i32) -> (i32, i32, i32) {
    %c0_i32 = arith.constant 0 : i32
    %c0_i32_0 = arith.constant 0 : i32
    %c0_i32_1 = arith.constant 0 : i32
    return %arg1, %c0_i32, %c0_i32_0 : i32, i32, i32
  }
  func.func @transform_5(%arg0: i32, %arg1: i32) -> (i32, i32, i32) {
    %c0_i32 = arith.constant 0 : i32
    %c0_i32_0 = arith.constant 0 : i32
    %c0_i32_1 = arith.constant 0 : i32
    return %arg1, %c0_i32, %c0_i32_0 : i32, i32, i32
  }
  func.func @transform_6(%arg0: i32, %arg1: i32) -> (i32, i32, i32) {
    %c0_i32 = arith.constant 0 : i32
    %c0_i32_0 = arith.constant 0 : i32
    %c0_i32_1 = arith.constant 0 : i32
    return %arg1, %c0_i32, %c0_i32_0 : i32, i32, i32
  }
  func.func @transform_7(%arg0: i32, %arg1: i32) -> (i32, i32, i32) {
    %c0_i32 = arith.constant 0 : i32
    %c0_i32_0 = arith.constant 0 : i32
    %c0_i32_1 = arith.constant 0 : i32
    return %arg1, %c0_i32, %c0_i32_0 : i32, i32, i32
  }
  func.func @transform_8(%arg0: i32, %arg1: i32) -> (i32, i32, i32) {
    %c0_i32 = arith.constant 0 : i32
    %c0_i32_0 = arith.constant 0 : i32
    %c0_i32_1 = arith.constant 0 : i32
    return %arg1, %c0_i32, %c0_i32_0 : i32, i32, i32
  }
  func.func @transform_9(%arg0: i32, %arg1: i32) -> (i32, i32, i32) {
    %c0_i32 = arith.constant 0 : i32
    %c0_i32_0 = arith.constant 0 : i32
    %c0_i32_1 = arith.constant 0 : i32
    return %arg1, %c0_i32, %c0_i32_0 : i32, i32, i32
  }
  func.func @transform_10(%arg0: i32, %arg1: i32) -> (i32, i32, i32) {
    %c0_i32 = arith.constant 0 : i32
    %c0_i32_0 = arith.constant 0 : i32
    %c0_i32_1 = arith.constant 0 : i32
    return %arg1, %c0_i32, %c0_i32_0 : i32, i32, i32
  }
  func.func @transform_11(%arg0: i32, %arg1: i32) -> (i32, i32, i32) {
    %c0_i32 = arith.constant 0 : i32
    %c0_i32_0 = arith.constant 0 : i32
    %c0_i32_1 = arith.constant 0 : i32
    return %arg1, %c0_i32, %c0_i32_0 : i32, i32, i32
  }
  func.func @transform_12(%arg0: i32, %arg1: i32) -> (i32, i32, i32) {
    %c0_i32 = arith.constant 0 : i32
    %c0_i32_0 = arith.constant 0 : i32
    %c0_i32_1 = arith.constant 0 : i32
    return %arg1, %c0_i32, %c0_i32_0 : i32, i32, i32
  }
  func.func @transform_13(%arg0: i32, %arg1: i32) -> (i32, i32, i32) {
    %c0_i32 = arith.constant 0 : i32
    %c0_i32_0 = arith.constant 0 : i32
    %c0_i32_1 = arith.constant 0 : i32
    return %arg0, %c0_i32, %c0_i32_0 : i32, i32, i32
  }
}

module attributes {stable_mosaic.version = 11 : i64} {
  func.func @_decoder_stack_kernel(%arg0: i32, %arg1: i32, %arg2: memref<1x8x32xf32, #tpu.memory_space<vmem>>, %arg3: memref<1x8x32xbf16, #tpu.memory_space<vmem>>, %arg4: memref<1x1x8xi32, #tpu.memory_space<vmem>>, %arg5: memref<1x32x96xbf16, #tpu.memory_space<vmem>>, %arg6: memref<1x32x32xbf16, #tpu.memory_space<vmem>>, %arg7: memref<1x1x32xf32, #tpu.memory_space<vmem>>, %arg8: memref<1x1x32xf32, #tpu.memory_space<vmem>>, %arg9: memref<1x1x32xf32, #tpu.memory_space<vmem>>, %arg10: memref<1x32x96xbf16, #tpu.memory_space<vmem>>, %arg11: memref<1x32x32xbf16, #tpu.memory_space<vmem>>, %arg12: memref<1x1x32xf32, #tpu.memory_space<vmem>>, %arg13: memref<1x1x32xf32, #tpu.memory_space<vmem>>, %arg14: memref<1x1x32xf32, #tpu.memory_space<vmem>>, %arg15: memref<1x32x64xbf16, #tpu.memory_space<vmem>>, %arg16: memref<1x1x64xf32, #tpu.memory_space<vmem>>, %arg17: memref<1x64x32xbf16, #tpu.memory_space<vmem>>, %arg18: memref<1x1x32xf32, #tpu.memory_space<vmem>>, %arg19: memref<1x1x32xf32, #tpu.memory_space<vmem>>, %arg20: memref<1x1x32xf32, #tpu.memory_space<vmem>>, %arg21: memref<1x8x32xbf16, #tpu.memory_space<vmem>>, %arg22: memref<8x32xf32, #tpu.memory_space<vmem>>) attributes {dimension_semantics = [#tpu.dimension_semantics<parallel>, #tpu.dimension_semantics<arbitrary>], iteration_bounds = array<i64: 2, 2>, scalar_prefetch = 0 : i64, scratch_operands = 1 : i64, tpu.core_type = #tpu.core_type<tc>, window_params = [{transform_indices = @transform_0, window_bounds = array<i64: 1, 8, 32>}, {transform_indices = @transform_1, window_bounds = array<i64: 1, 8, 32>}, {transform_indices = @transform_2, window_bounds = array<i64: 1, 1, 8>}, {transform_indices = @transform_3, window_bounds = array<i64: 1, 32, 96>}, {transform_indices = @transform_4, window_bounds = array<i64: 1, 32, 32>}, {transform_indices = @transform_5, window_bounds = array<i64: 1, 1, 32>}, {transform_indices = @transform_6, window_bounds = array<i64: 1, 1, 32>}, {transform_indices = @transform_7, window_bounds = array<i64: 1, 1, 32>}, {transform_indices = @transform_8, window_bounds = array<i64: 1, 32, 96>}, {transform_indices = @transform_9, window_bounds = array<i64: 1, 32, 32>}, {transform_indices = @transform_10, window_bounds = array<i64: 1, 1, 32>}, {transform_indices = @transform_11, window_bounds = array<i64: 1, 1, 32>}, {transform_indices = @transform_12, window_bounds = array<i64: 1, 1, 32>}, {transform_indices = @transform_13, window_bounds = array<i64: 1, 32, 64>}, {transform_indices = @transform_14, window_bounds = array<i64: 1, 1, 64>}, {transform_indices = @transform_15, window_bounds = array<i64: 1, 64, 32>}, {transform_indices = @transform_16, window_bounds = array<i64: 1, 1, 32>}, {transform_indices = @transform_17, window_bounds = array<i64: 1, 1, 32>}, {transform_indices = @transform_18, window_bounds = array<i64: 1, 1, 32>}, {transform_indices = @transform_19, window_bounds = array<i64: 1, 8, 32>}]} {
    %c0_i32 = arith.constant 0 : i32
    %0 = arith.cmpi eq, %arg1, %c0_i32 : i32
    %1 = arith.extui %0 : i1 to i32
    %c0_i32_0 = arith.constant 0 : i32
    %2 = arith.cmpi ne, %1, %c0_i32_0 : i32
    scf.if %2 {
      %c0_122 = arith.constant 0 : index
      %c0_123 = arith.constant 0 : index
      %c0_124 = arith.constant 0 : index
      %320 = vector.load %arg2[%c0_122, %c0_123, %c0_124] : memref<1x8x32xf32, #tpu.memory_space<vmem>>, vector<1x8x32xf32>
      %321 = vector.shape_cast %320 : vector<1x8x32xf32> to vector<8x32xf32>
      %c0_125 = arith.constant 0 : index
      %c0_126 = arith.constant 0 : index
      %322 = vector.load %arg22[%c0_125, %c0_126] : memref<8x32xf32, #tpu.memory_space<vmem>>, vector<8x32xf32>
      tpu.vector_store %arg22[%c0_125, %c0_126], %321 {strides = array<i32>} : memref<8x32xf32, #tpu.memory_space<vmem>>, vector<8x32xf32>,
    } else {
    }
    %c0 = arith.constant 0 : index
    %c0_1 = arith.constant 0 : index
    %3 = vector.load %arg22[%c0, %c0_1] : memref<8x32xf32, #tpu.memory_space<vmem>>, vector<8x32xf32>
    %c0_2 = arith.constant 0 : index
    %c0_3 = arith.constant 0 : index
    %c0_4 = arith.constant 0 : index
    %4 = vector.load %arg3[%c0_2, %c0_3, %c0_4] : memref<1x8x32xbf16, #tpu.memory_space<vmem>>, vector<1x8x32xbf16>
    %5 = vector.shape_cast %4 : vector<1x8x32xbf16> to vector<8x32xbf16>
    %c0_5 = arith.constant 0 : index
    %c0_6 = arith.constant 0 : index
    %c0_7 = arith.constant 0 : index
    %6 = vector.load %arg4[%c0_5, %c0_6, %c0_7] : memref<1x1x8xi32, #tpu.memory_space<vmem>>, vector<1x1x8xi32>
    %7 = vector.shape_cast %6 : vector<1x1x8xi32> to vector<1x8xi32>
    %c0_i32_8 = arith.constant 0 : i32
    %8 = vector.broadcast %c0_i32_8 : i32 to vector<1x8xi32>
    %9 = arith.cmpi eq, %7, %8 : vector<1x8xi32>
    %c0_9 = arith.constant 0 : index
    %c0_10 = arith.constant 0 : index
    %c0_11 = arith.constant 0 : index
    %10 = vector.load %arg5[%c0_9, %c0_10, %c0_11] : memref<1x32x96xbf16, #tpu.memory_space<vmem>>, vector<1x32x96xbf16>
    %11 = vector.shape_cast %10 : vector<1x32x96xbf16> to vector<32x96xbf16>
    %c0_12 = arith.constant 0 : index
    %c0_13 = arith.constant 0 : index
    %c0_14 = arith.constant 0 : index
    %12 = vector.load %arg6[%c0_12, %c0_13, %c0_14] : memref<1x32x32xbf16, #tpu.memory_space<vmem>>, vector<1x32x32xbf16>
    %13 = vector.shape_cast %12 : vector<1x32x32xbf16> to vector<32x32xbf16>
    %c0_15 = arith.constant 0 : index
    %c0_16 = arith.constant 0 : index
    %c0_17 = arith.constant 0 : index
    %14 = vector.load %arg7[%c0_15, %c0_16, %c0_17] : memref<1x1x32xf32, #tpu.memory_space<vmem>>, vector<1x1x32xf32>
    %15 = vector.shape_cast %14 : vector<1x1x32xf32> to vector<1x32xf32>
    %16 = arith.truncf %3 : vector<8x32xf32> to vector<8x32xbf16>
    %cst = arith.constant dense<0.000000e+00> : vector<8x96xf32>
    %17 = tpu.matmul %16, %11, %cst {dimension_numbers = #tpu.dot_dimension_numbers<[1], [0], [0], [1], [0, 0, 1, 1], [], []>} : vector<8x32xbf16>, vector<32x96xbf16>, vector<8x96xf32> -> vector<8x96xf32>
    %18 = vector.extract_strided_slice %17 {offsets = [0, 0], sizes = [8, 32], strides = [1, 1]} : vector<8x96xf32> to vector<8x32xf32>
    %19 = vector.extract_strided_slice %17 {offsets = [0, 32], sizes = [8, 32], strides = [1, 1]} : vector<8x96xf32> to vector<8x32xf32>
    %20 = vector.extract_strided_slice %17 {offsets = [0, 64], sizes = [8, 32], strides = [1, 1]} : vector<8x96xf32> to vector<8x32xf32>
    %21 = tpu.iota {dimensions = array<i32: 0>} : vector<8x8xi32>
    %22 = tpu.iota {dimensions = array<i32: 1>} : vector<8x8xi32>
    %23 = arith.cmpi sge, %21, %22 : vector<8x8xi32>
    %24 = vector.extract_strided_slice %18 {offsets = [0, 0], sizes = [8, 8], strides = [1, 1]} : vector<8x32xf32> to vector<8x8xf32>
    %25 = arith.truncf %24 : vector<8x8xf32> to vector<8x8xbf16>
    %26 = vector.extract_strided_slice %19 {offsets = [0, 0], sizes = [8, 8], strides = [1, 1]} : vector<8x32xf32> to vector<8x8xf32>
    %27 = arith.truncf %26 : vector<8x8xf32> to vector<8x8xbf16>
    %28 = vector.extract_strided_slice %20 {offsets = [0, 0], sizes = [8, 8], strides = [1, 1]} : vector<8x32xf32> to vector<8x8xf32>
    %29 = arith.truncf %28 : vector<8x8xf32> to vector<8x8xbf16>
    %cst_18 = arith.constant dense<0.000000e+00> : vector<8x8xf32>
    %30 = tpu.matmul %25, %27, %cst_18 {dimension_numbers = #tpu.dot_dimension_numbers<[1], [1], [0], [0], [0, 0, 1, 0], [], []>} : vector<8x8xbf16>, vector<8x8xbf16>, vector<8x8xf32> -> vector<8x8xf32>
    %cst_19 = arith.constant -1.000000e+20 : f32
    %31 = vector.broadcast %cst_19 : f32 to vector<8x8xf32>
    %32 = arith.select %23, %30, %31 : vector<8x8xi1>, vector<8x8xf32>
    %cst_20 = arith.constant dense<0xFF800000> : vector<8xf32>
    %33 = vector.multi_reduction <maximumf>, %32, %cst_20 [1] : vector<8x8xf32> to vector<8xf32>
    %34 = vector.shape_cast %33 : vector<8xf32> to vector<8x1xf32>
    %35 = vector.broadcast %34 : vector<8x1xf32> to vector<8x8xf32>
    %36 = arith.subf %32, %35 : vector<8x8xf32>
    %37 = math.exp %36 : vector<8x8xf32>
    %cst_21 = arith.constant dense<0.000000e+00> : vector<8xf32>
    %38 = vector.multi_reduction <add>, %37, %cst_21 [1] : vector<8x8xf32> to vector<8xf32>
    %39 = vector.shape_cast %38 : vector<8xf32> to vector<8x1xf32>
    %40 = tpu.reciprocal %39 {approx = true} : vector<8x1xf32> -> vector<8x1xf32>
    %41 = vector.broadcast %40 : vector<8x1xf32> to vector<8x8xf32>
    %42 = arith.mulf %37, %41 : vector<8x8xf32>
    %43 = arith.truncf %42 : vector<8x8xf32> to vector<8x8xbf16>
    %cst_22 = arith.constant dense<0.000000e+00> : vector<8x8xf32>
    %44 = tpu.matmul %43, %29, %cst_22 {dimension_numbers = #tpu.dot_dimension_numbers<[1], [0], [0], [1], [0, 0, 1, 1], [], []>} : vector<8x8xbf16>, vector<8x8xbf16>, vector<8x8xf32> -> vector<8x8xf32>
    %45 = vector.extract_strided_slice %18 {offsets = [0, 8], sizes = [8, 8], strides = [1, 1]} : vector<8x32xf32> to vector<8x8xf32>
    %46 = arith.truncf %45 : vector<8x8xf32> to vector<8x8xbf16>
    %47 = vector.extract_strided_slice %19 {offsets = [0, 8], sizes = [8, 8], strides = [1, 1]} : vector<8x32xf32> to vector<8x8xf32>
    %48 = arith.truncf %47 : vector<8x8xf32> to vector<8x8xbf16>
    %49 = vector.extract_strided_slice %20 {offsets = [0, 8], sizes = [8, 8], strides = [1, 1]} : vector<8x32xf32> to vector<8x8xf32>
    %50 = arith.truncf %49 : vector<8x8xf32> to vector<8x8xbf16>
    %cst_23 = arith.constant dense<0.000000e+00> : vector<8x8xf32>
    %51 = tpu.matmul %46, %48, %cst_23 {dimension_numbers = #tpu.dot_dimension_numbers<[1], [1], [0], [0], [0, 0, 1, 0], [], []>} : vector<8x8xbf16>, vector<8x8xbf16>, vector<8x8xf32> -> vector<8x8xf32>
    %cst_24 = arith.constant -1.000000e+20 : f32
    %52 = vector.broadcast %cst_24 : f32 to vector<8x8xf32>
    %53 = arith.select %23, %51, %52 : vector<8x8xi1>, vector<8x8xf32>
    %cst_25 = arith.constant dense<0xFF800000> : vector<8xf32>
    %54 = vector.multi_reduction <maximumf>, %53, %cst_25 [1] : vector<8x8xf32> to vector<8xf32>
    %55 = vector.shape_cast %54 : vector<8xf32> to vector<8x1xf32>
    %56 = vector.broadcast %55 : vector<8x1xf32> to vector<8x8xf32>
    %57 = arith.subf %53, %56 : vector<8x8xf32>
    %58 = math.exp %57 : vector<8x8xf32>
    %cst_26 = arith.constant dense<0.000000e+00> : vector<8xf32>
    %59 = vector.multi_reduction <add>, %58, %cst_26 [1] : vector<8x8xf32> to vector<8xf32>
    %60 = vector.shape_cast %59 : vector<8xf32> to vector<8x1xf32>
    %61 = tpu.reciprocal %60 {approx = true} : vector<8x1xf32> -> vector<8x1xf32>
    %62 = vector.broadcast %61 : vector<8x1xf32> to vector<8x8xf32>
    %63 = arith.mulf %58, %62 : vector<8x8xf32>
    %64 = arith.truncf %63 : vector<8x8xf32> to vector<8x8xbf16>
    %cst_27 = arith.constant dense<0.000000e+00> : vector<8x8xf32>
    %65 = tpu.matmul %64, %50, %cst_27 {dimension_numbers = #tpu.dot_dimension_numbers<[1], [0], [0], [1], [0, 0, 1, 1], [], []>} : vector<8x8xbf16>, vector<8x8xbf16>, vector<8x8xf32> -> vector<8x8xf32>
    %66 = vector.extract_strided_slice %18 {offsets = [0, 16], sizes = [8, 8], strides = [1, 1]} : vector<8x32xf32> to vector<8x8xf32>
    %67 = arith.truncf %66 : vector<8x8xf32> to vector<8x8xbf16>
    %68 = vector.extract_strided_slice %19 {offsets = [0, 16], sizes = [8, 8], strides = [1, 1]} : vector<8x32xf32> to vector<8x8xf32>
    %69 = arith.truncf %68 : vector<8x8xf32> to vector<8x8xbf16>
    %70 = vector.extract_strided_slice %20 {offsets = [0, 16], sizes = [8, 8], strides = [1, 1]} : vector<8x32xf32> to vector<8x8xf32>
    %71 = arith.truncf %70 : vector<8x8xf32> to vector<8x8xbf16>
    %cst_28 = arith.constant dense<0.000000e+00> : vector<8x8xf32>
    %72 = tpu.matmul %67, %69, %cst_28 {dimension_numbers = #tpu.dot_dimension_numbers<[1], [1], [0], [0], [0, 0, 1, 0], [], []>} : vector<8x8xbf16>, vector<8x8xbf16>, vector<8x8xf32> -> vector<8x8xf32>
    %cst_29 = arith.constant -1.000000e+20 : f32
    %73 = vector.broadcast %cst_29 : f32 to vector<8x8xf32>
    %74 = arith.select %23, %72, %73 : vector<8x8xi1>, vector<8x8xf32>
    %cst_30 = arith.constant dense<0xFF800000> : vector<8xf32>
    %75 = vector.multi_reduction <maximumf>, %74, %cst_30 [1] : vector<8x8xf32> to vector<8xf32>
    %76 = vector.shape_cast %75 : vector<8xf32> to vector<8x1xf32>
    %77 = vector.broadcast %76 : vector<8x1xf32> to vector<8x8xf32>
    %78 = arith.subf %74, %77 : vector<8x8xf32>
    %79 = math.exp %78 : vector<8x8xf32>
    %cst_31 = arith.constant dense<0.000000e+00> : vector<8xf32>
    %80 = vector.multi_reduction <add>, %79, %cst_31 [1] : vector<8x8xf32> to vector<8xf32>
    %81 = vector.shape_cast %80 : vector<8xf32> to vector<8x1xf32>
    %82 = tpu.reciprocal %81 {approx = true} : vector<8x1xf32> -> vector<8x1xf32>
    %83 = vector.broadcast %82 : vector<8x1xf32> to vector<8x8xf32>
    %84 = arith.mulf %79, %83 : vector<8x8xf32>
    %85 = arith.truncf %84 : vector<8x8xf32> to vector<8x8xbf16>
    %cst_32 = arith.constant dense<0.000000e+00> : vector<8x8xf32>
    %86 = tpu.matmul %85, %71, %cst_32 {dimension_numbers = #tpu.dot_dimension_numbers<[1], [0], [0], [1], [0, 0, 1, 1], [], []>} : vector<8x8xbf16>, vector<8x8xbf16>, vector<8x8xf32> -> vector<8x8xf32>
    %87 = vector.extract_strided_slice %18 {offsets = [0, 24], sizes = [8, 8], strides = [1, 1]} : vector<8x32xf32> to vector<8x8xf32>
    %88 = arith.truncf %87 : vector<8x8xf32> to vector<8x8xbf16>
    %89 = vector.extract_strided_slice %19 {offsets = [0, 24], sizes = [8, 8], strides = [1, 1]} : vector<8x32xf32> to vector<8x8xf32>
    %90 = arith.truncf %89 : vector<8x8xf32> to vector<8x8xbf16>
    %91 = vector.extract_strided_slice %20 {offsets = [0, 24], sizes = [8, 8], strides = [1, 1]} : vector<8x32xf32> to vector<8x8xf32>
    %92 = arith.truncf %91 : vector<8x8xf32> to vector<8x8xbf16>
    %cst_33 = arith.constant dense<0.000000e+00> : vector<8x8xf32>
    %93 = tpu.matmul %88, %90, %cst_33 {dimension_numbers = #tpu.dot_dimension_numbers<[1], [1], [0], [0], [0, 0, 1, 0], [], []>} : vector<8x8xbf16>, vector<8x8xbf16>, vector<8x8xf32> -> vector<8x8xf32>
    %cst_34 = arith.constant -1.000000e+20 : f32
    %94 = vector.broadcast %cst_34 : f32 to vector<8x8xf32>
    %95 = arith.select %23, %93, %94 : vector<8x8xi1>, vector<8x8xf32>
    %cst_35 = arith.constant dense<0xFF800000> : vector<8xf32>
    %96 = vector.multi_reduction <maximumf>, %95, %cst_35 [1] : vector<8x8xf32> to vector<8xf32>
    %97 = vector.shape_cast %96 : vector<8xf32> to vector<8x1xf32>
    %98 = vector.broadcast %97 : vector<8x1xf32> to vector<8x8xf32>
    %99 = arith.subf %95, %98 : vector<8x8xf32>
    %100 = math.exp %99 : vector<8x8xf32>
    %cst_36 = arith.constant dense<0.000000e+00> : vector<8xf32>
    %101 = vector.multi_reduction <add>, %100, %cst_36 [1] : vector<8x8xf32> to vector<8xf32>
    %102 = vector.shape_cast %101 : vector<8xf32> to vector<8x1xf32>
    %103 = tpu.reciprocal %102 {approx = true} : vector<8x1xf32> -> vector<8x1xf32>
    %104 = vector.broadcast %103 : vector<8x1xf32> to vector<8x8xf32>
    %105 = arith.mulf %100, %104 : vector<8x8xf32>
    %106 = arith.truncf %105 : vector<8x8xf32> to vector<8x8xbf16>
    %cst_37 = arith.constant dense<0.000000e+00> : vector<8x8xf32>
    %107 = tpu.matmul %106, %92, %cst_37 {dimension_numbers = #tpu.dot_dimension_numbers<[1], [0], [0], [1], [0, 0, 1, 1], [], []>} : vector<8x8xbf16>, vector<8x8xbf16>, vector<8x8xf32> -> vector<8x8xf32>
    %108 = tpu.concatenate %44, %65, %86, %107 in 1 : vector<8x8xf32>, vector<8x8xf32>, vector<8x8xf32>, vector<8x8xf32> -> vector<8x32xf32>
    %109 = arith.truncf %108 : vector<8x32xf32> to vector<8x32xbf16>
    %cst_38 = arith.constant dense<0.000000e+00> : vector<8x32xf32>
    %110 = tpu.matmul %109, %13, %cst_38 {dimension_numbers = #tpu.dot_dimension_numbers<[1], [0], [0], [1], [0, 0, 1, 1], [], []>} : vector<8x32xbf16>, vector<32x32xbf16>, vector<8x32xf32> -> vector<8x32xf32>
    %111 = vector.broadcast %15 : vector<1x32xf32> to vector<8x32xf32>
    %112 = arith.addf %110, %111 : vector<8x32xf32>
    %113 = arith.addf %112, %3 : vector<8x32xf32>
    %c0_39 = arith.constant 0 : index
    %c0_40 = arith.constant 0 : index
    %c0_41 = arith.constant 0 : index
    %114 = vector.load %arg8[%c0_39, %c0_40, %c0_41] : memref<1x1x32xf32, #tpu.memory_space<vmem>>, vector<1x1x32xf32>
    %115 = vector.shape_cast %114 : vector<1x1x32xf32> to vector<1x32xf32>
    %c0_42 = arith.constant 0 : index
    %c0_43 = arith.constant 0 : index
    %c0_44 = arith.constant 0 : index
    %116 = vector.load %arg9[%c0_42, %c0_43, %c0_44] : memref<1x1x32xf32, #tpu.memory_space<vmem>>, vector<1x1x32xf32>
    %117 = vector.shape_cast %116 : vector<1x1x32xf32> to vector<1x32xf32>
    %cst_45 = arith.constant dense<0.000000e+00> : vector<8xf32>
    %118 = vector.multi_reduction <add>, %113, %cst_45 [1] : vector<8x32xf32> to vector<8xf32>
    %119 = vector.shape_cast %118 : vector<8xf32> to vector<8x1xf32>
    %cst_46 = arith.constant 3.200000e+01 : f32
    %120 = vector.broadcast %cst_46 : f32 to vector<8x1xf32>
    %121 = arith.divf %119, %120 : vector<8x1xf32>
    %122 = vector.broadcast %121 : vector<8x1xf32> to vector<8x32xf32>
    %123 = arith.subf %113, %122 : vector<8x32xf32>
    %124 = arith.mulf %123, %123 : vector<8x32xf32>
    %cst_47 = arith.constant dense<0.000000e+00> : vector<8xf32>
    %125 = vector.multi_reduction <add>, %124, %cst_47 [1] : vector<8x32xf32> to vector<8xf32>
    %126 = vector.shape_cast %125 : vector<8xf32> to vector<8x1xf32>
    %cst_48 = arith.constant 3.200000e+01 : f32
    %127 = vector.broadcast %cst_48 : f32 to vector<8x1xf32>
    %128 = arith.divf %126, %127 : vector<8x1xf32>
    %cst_49 = arith.constant 9.99999974E-6 : f32
    %129 = vector.broadcast %cst_49 : f32 to vector<8x1xf32>
    %130 = arith.addf %128, %129 : vector<8x1xf32>
    %131 = math.rsqrt %130 : vector<8x1xf32>
    %132 = vector.broadcast %131 : vector<8x1xf32> to vector<8x32xf32>
    %133 = arith.mulf %123, %132 : vector<8x32xf32>
    %134 = vector.broadcast %115 : vector<1x32xf32> to vector<8x32xf32>
    %135 = arith.mulf %133, %134 : vector<8x32xf32>
    %136 = vector.broadcast %117 : vector<1x32xf32> to vector<8x32xf32>
    %137 = arith.addf %135, %136 : vector<8x32xf32>
    %c0_50 = arith.constant 0 : index
    %c0_51 = arith.constant 0 : index
    %c0_52 = arith.constant 0 : index
    %138 = vector.load %arg10[%c0_50, %c0_51, %c0_52] : memref<1x32x96xbf16, #tpu.memory_space<vmem>>, vector<1x32x96xbf16>
    %139 = vector.shape_cast %138 : vector<1x32x96xbf16> to vector<32x96xbf16>
    %c0_53 = arith.constant 0 : index
    %c0_54 = arith.constant 0 : index
    %c0_55 = arith.constant 0 : index
    %140 = vector.load %arg11[%c0_53, %c0_54, %c0_55] : memref<1x32x32xbf16, #tpu.memory_space<vmem>>, vector<1x32x32xbf16>
    %141 = vector.shape_cast %140 : vector<1x32x32xbf16> to vector<32x32xbf16>
    %c0_56 = arith.constant 0 : index
    %c0_57 = arith.constant 0 : index
    %c0_58 = arith.constant 0 : index
    %142 = vector.load %arg12[%c0_56, %c0_57, %c0_58] : memref<1x1x32xf32, #tpu.memory_space<vmem>>, vector<1x1x32xf32>
    %143 = vector.shape_cast %142 : vector<1x1x32xf32> to vector<1x32xf32>
    %c0_59 = arith.constant 0 : index
    %c0_60 = arith.constant 0 : index
    %c0_61 = arith.constant 0 : index
    %144 = vector.load %arg13[%c0_59, %c0_60, %c0_61] : memref<1x1x32xf32, #tpu.memory_space<vmem>>, vector<1x1x32xf32>
    %145 = vector.shape_cast %144 : vector<1x1x32xf32> to vector<1x32xf32>
    %c0_62 = arith.constant 0 : index
    %c0_63 = arith.constant 0 : index
    %c0_64 = arith.constant 0 : index
    %146 = vector.load %arg14[%c0_62, %c0_63, %c0_64] : memref<1x1x32xf32, #tpu.memory_space<vmem>>, vector<1x1x32xf32>
    %147 = vector.shape_cast %146 : vector<1x1x32xf32> to vector<1x32xf32>
    %c0_65 = arith.constant 0 : index
    %c0_66 = arith.constant 0 : index
    %c0_67 = arith.constant 0 : index
    %148 = vector.load %arg15[%c0_65, %c0_66, %c0_67] : memref<1x32x64xbf16, #tpu.memory_space<vmem>>, vector<1x32x64xbf16>
    %149 = vector.shape_cast %148 : vector<1x32x64xbf16> to vector<32x64xbf16>
    %c0_68 = arith.constant 0 : index
    %c0_69 = arith.constant 0 : index
    %c0_70 = arith.constant 0 : index
    %150 = vector.load %arg16[%c0_68, %c0_69, %c0_70] : memref<1x1x64xf32, #tpu.memory_space<vmem>>, vector<1x1x64xf32>
    %151 = vector.shape_cast %150 : vector<1x1x64xf32> to vector<1x64xf32>
    %c0_71 = arith.constant 0 : index
    %c0_72 = arith.constant 0 : index
    %c0_73 = arith.constant 0 : index
    %152 = vector.load %arg17[%c0_71, %c0_72, %c0_73] : memref<1x64x32xbf16, #tpu.memory_space<vmem>>, vector<1x64x32xbf16>
    %153 = vector.shape_cast %152 : vector<1x64x32xbf16> to vector<64x32xbf16>
    %c0_74 = arith.constant 0 : index
    %c0_75 = arith.constant 0 : index
    %c0_76 = arith.constant 0 : index
    %154 = vector.load %arg18[%c0_74, %c0_75, %c0_76] : memref<1x1x32xf32, #tpu.memory_space<vmem>>, vector<1x1x32xf32>
    %155 = vector.shape_cast %154 : vector<1x1x32xf32> to vector<1x32xf32>
    %c0_77 = arith.constant 0 : index
    %c0_78 = arith.constant 0 : index
    %c0_79 = arith.constant 0 : index
    %156 = vector.load %arg19[%c0_77, %c0_78, %c0_79] : memref<1x1x32xf32, #tpu.memory_space<vmem>>, vector<1x1x32xf32>
    %157 = vector.shape_cast %156 : vector<1x1x32xf32> to vector<1x32xf32>
    %c0_80 = arith.constant 0 : index
    %c0_81 = arith.constant 0 : index
    %c0_82 = arith.constant 0 : index
    %158 = vector.load %arg20[%c0_80, %c0_81, %c0_82] : memref<1x1x32xf32, #tpu.memory_space<vmem>>, vector<1x1x32xf32>
    %159 = vector.shape_cast %158 : vector<1x1x32xf32> to vector<1x32xf32>
    %160 = arith.truncf %137 : vector<8x32xf32> to vector<8x32xbf16>
    %161 = vector.extract_strided_slice %139 {offsets = [0, 0], sizes = [32, 32], strides = [1, 1]} : vector<32x96xbf16> to vector<32x32xbf16>
    %cst_83 = arith.constant dense<0.000000e+00> : vector<8x32xf32>
    %162 = tpu.matmul %160, %161, %cst_83 {dimension_numbers = #tpu.dot_dimension_numbers<[1], [0], [0], [1], [0, 0, 1, 1], [], []>} : vector<8x32xbf16>, vector<32x32xbf16>, vector<8x32xf32> -> vector<8x32xf32>
    %163 = vector.extract_strided_slice %139 {offsets = [0, 32], sizes = [32, 64], strides = [1, 1]} : vector<32x96xbf16> to vector<32x64xbf16>
    %cst_84 = arith.constant dense<0.000000e+00> : vector<8x64xf32>
    %164 = tpu.matmul %5, %163, %cst_84 {dimension_numbers = #tpu.dot_dimension_numbers<[1], [0], [0], [1], [0, 0, 1, 1], [], []>} : vector<8x32xbf16>, vector<32x64xbf16>, vector<8x64xf32> -> vector<8x64xf32>
    %165 = vector.extract_strided_slice %164 {offsets = [0, 0], sizes = [8, 32], strides = [1, 1]} : vector<8x64xf32> to vector<8x32xf32>
    %166 = vector.extract_strided_slice %164 {offsets = [0, 32], sizes = [8, 32], strides = [1, 1]} : vector<8x64xf32> to vector<8x32xf32>
    %167 = vector.extract_strided_slice %162 {offsets = [0, 0], sizes = [8, 8], strides = [1, 1]} : vector<8x32xf32> to vector<8x8xf32>
    %168 = arith.truncf %167 : vector<8x8xf32> to vector<8x8xbf16>
    %169 = vector.extract_strided_slice %165 {offsets = [0, 0], sizes = [8, 8], strides = [1, 1]} : vector<8x32xf32> to vector<8x8xf32>
    %170 = arith.truncf %169 : vector<8x8xf32> to vector<8x8xbf16>
    %171 = vector.extract_strided_slice %166 {offsets = [0, 0], sizes = [8, 8], strides = [1, 1]} : vector<8x32xf32> to vector<8x8xf32>
    %172 = arith.truncf %171 : vector<8x8xf32> to vector<8x8xbf16>
    %cst_85 = arith.constant dense<0.000000e+00> : vector<8x8xf32>
    %173 = tpu.matmul %168, %170, %cst_85 {dimension_numbers = #tpu.dot_dimension_numbers<[1], [1], [0], [0], [0, 0, 1, 0], [], []>} : vector<8x8xbf16>, vector<8x8xbf16>, vector<8x8xf32> -> vector<8x8xf32>
    %cst_86 = arith.constant -1.000000e+20 : f32
    %174 = vector.shape_cast %9 : vector<1x8xi1> to vector<1x8xi1>
    %175 = vector.broadcast %174 : vector<1x8xi1> to vector<8x8xi1>
    %176 = vector.broadcast %cst_86 : f32 to vector<8x8xf32>
    %177 = arith.select %175, %176, %173 : vector<8x8xi1>, vector<8x8xf32>
    %cst_87 = arith.constant dense<0xFF800000> : vector<8xf32>
    %178 = vector.multi_reduction <maximumf>, %177, %cst_87 [1] : vector<8x8xf32> to vector<8xf32>
    %179 = vector.shape_cast %178 : vector<8xf32> to vector<8x1xf32>
    %180 = vector.broadcast %179 : vector<8x1xf32> to vector<8x8xf32>
    %181 = arith.subf %177, %180 : vector<8x8xf32>
    %182 = math.exp %181 : vector<8x8xf32>
    %cst_88 = arith.constant dense<0.000000e+00> : vector<8xf32>
    %183 = vector.multi_reduction <add>, %182, %cst_88 [1] : vector<8x8xf32> to vector<8xf32>
    %184 = vector.shape_cast %183 : vector<8xf32> to vector<8x1xf32>
    %185 = tpu.reciprocal %184 {approx = true} : vector<8x1xf32> -> vector<8x1xf32>
    %186 = vector.broadcast %185 : vector<8x1xf32> to vector<8x8xf32>
    %187 = arith.mulf %182, %186 : vector<8x8xf32>
    %188 = arith.truncf %187 : vector<8x8xf32> to vector<8x8xbf16>
    %cst_89 = arith.constant dense<0.000000e+00> : vector<8x8xf32>
    %189 = tpu.matmul %188, %172, %cst_89 {dimension_numbers = #tpu.dot_dimension_numbers<[1], [0], [0], [1], [0, 0, 1, 1], [], []>} : vector<8x8xbf16>, vector<8x8xbf16>, vector<8x8xf32> -> vector<8x8xf32>
    %190 = vector.extract_strided_slice %162 {offsets = [0, 8], sizes = [8, 8], strides = [1, 1]} : vector<8x32xf32> to vector<8x8xf32>
    %191 = arith.truncf %190 : vector<8x8xf32> to vector<8x8xbf16>
    %192 = vector.extract_strided_slice %165 {offsets = [0, 8], sizes = [8, 8], strides = [1, 1]} : vector<8x32xf32> to vector<8x8xf32>
    %193 = arith.truncf %192 : vector<8x8xf32> to vector<8x8xbf16>
    %194 = vector.extract_strided_slice %166 {offsets = [0, 8], sizes = [8, 8], strides = [1, 1]} : vector<8x32xf32> to vector<8x8xf32>
    %195 = arith.truncf %194 : vector<8x8xf32> to vector<8x8xbf16>
    %cst_90 = arith.constant dense<0.000000e+00> : vector<8x8xf32>
    %196 = tpu.matmul %191, %193, %cst_90 {dimension_numbers = #tpu.dot_dimension_numbers<[1], [1], [0], [0], [0, 0, 1, 0], [], []>} : vector<8x8xbf16>, vector<8x8xbf16>, vector<8x8xf32> -> vector<8x8xf32>
    %cst_91 = arith.constant -1.000000e+20 : f32
    %197 = vector.shape_cast %9 : vector<1x8xi1> to vector<1x8xi1>
    %198 = vector.broadcast %197 : vector<1x8xi1> to vector<8x8xi1>
    %199 = vector.broadcast %cst_91 : f32 to vector<8x8xf32>
    %200 = arith.select %198, %199, %196 : vector<8x8xi1>, vector<8x8xf32>
    %cst_92 = arith.constant dense<0xFF800000> : vector<8xf32>
    %201 = vector.multi_reduction <maximumf>, %200, %cst_92 [1] : vector<8x8xf32> to vector<8xf32>
    %202 = vector.shape_cast %201 : vector<8xf32> to vector<8x1xf32>
    %203 = vector.broadcast %202 : vector<8x1xf32> to vector<8x8xf32>
    %204 = arith.subf %200, %203 : vector<8x8xf32>
    %205 = math.exp %204 : vector<8x8xf32>
    %cst_93 = arith.constant dense<0.000000e+00> : vector<8xf32>
    %206 = vector.multi_reduction <add>, %205, %cst_93 [1] : vector<8x8xf32> to vector<8xf32>
    %207 = vector.shape_cast %206 : vector<8xf32> to vector<8x1xf32>
    %208 = tpu.reciprocal %207 {approx = true} : vector<8x1xf32> -> vector<8x1xf32>
    %209 = vector.broadcast %208 : vector<8x1xf32> to vector<8x8xf32>
    %210 = arith.mulf %205, %209 : vector<8x8xf32>
    %211 = arith.truncf %210 : vector<8x8xf32> to vector<8x8xbf16>
    %cst_94 = arith.constant dense<0.000000e+00> : vector<8x8xf32>
    %212 = tpu.matmul %211, %195, %cst_94 {dimension_numbers = #tpu.dot_dimension_numbers<[1], [0], [0], [1], [0, 0, 1, 1], [], []>} : vector<8x8xbf16>, vector<8x8xbf16>, vector<8x8xf32> -> vector<8x8xf32>
    %213 = vector.extract_strided_slice %162 {offsets = [0, 16], sizes = [8, 8], strides = [1, 1]} : vector<8x32xf32> to vector<8x8xf32>
    %214 = arith.truncf %213 : vector<8x8xf32> to vector<8x8xbf16>
    %215 = vector.extract_strided_slice %165 {offsets = [0, 16], sizes = [8, 8], strides = [1, 1]} : vector<8x32xf32> to vector<8x8xf32>
    %216 = arith.truncf %215 : vector<8x8xf32> to vector<8x8xbf16>
    %217 = vector.extract_strided_slice %166 {offsets = [0, 16], sizes = [8, 8], strides = [1, 1]} : vector<8x32xf32> to vector<8x8xf32>
    %218 = arith.truncf %217 : vector<8x8xf32> to vector<8x8xbf16>
    %cst_95 = arith.constant dense<0.000000e+00> : vector<8x8xf32>
    %219 = tpu.matmul %214, %216, %cst_95 {dimension_numbers = #tpu.dot_dimension_numbers<[1], [1], [0], [0], [0, 0, 1, 0], [], []>} : vector<8x8xbf16>, vector<8x8xbf16>, vector<8x8xf32> -> vector<8x8xf32>
    %cst_96 = arith.constant -1.000000e+20 : f32
    %220 = vector.shape_cast %9 : vector<1x8xi1> to vector<1x8xi1>
    %221 = vector.broadcast %220 : vector<1x8xi1> to vector<8x8xi1>
    %222 = vector.broadcast %cst_96 : f32 to vector<8x8xf32>
    %223 = arith.select %221, %222, %219 : vector<8x8xi1>, vector<8x8xf32>
    %cst_97 = arith.constant dense<0xFF800000> : vector<8xf32>
    %224 = vector.multi_reduction <maximumf>, %223, %cst_97 [1] : vector<8x8xf32> to vector<8xf32>
    %225 = vector.shape_cast %224 : vector<8xf32> to vector<8x1xf32>
    %226 = vector.broadcast %225 : vector<8x1xf32> to vector<8x8xf32>
    %227 = arith.subf %223, %226 : vector<8x8xf32>
    %228 = math.exp %227 : vector<8x8xf32>
    %cst_98 = arith.constant dense<0.000000e+00> : vector<8xf32>
    %229 = vector.multi_reduction <add>, %228, %cst_98 [1] : vector<8x8xf32> to vector<8xf32>
    %230 = vector.shape_cast %229 : vector<8xf32> to vector<8x1xf32>
    %231 = tpu.reciprocal %230 {approx = true} : vector<8x1xf32> -> vector<8x1xf32>
    %232 = vector.broadcast %231 : vector<8x1xf32> to vector<8x8xf32>
    %233 = arith.mulf %228, %232 : vector<8x8xf32>
    %234 = arith.truncf %233 : vector<8x8xf32> to vector<8x8xbf16>
    %cst_99 = arith.constant dense<0.000000e+00> : vector<8x8xf32>
    %235 = tpu.matmul %234, %218, %cst_99 {dimension_numbers = #tpu.dot_dimension_numbers<[1], [0], [0], [1], [0, 0, 1, 1], [], []>} : vector<8x8xbf16>, vector<8x8xbf16>, vector<8x8xf32> -> vector<8x8xf32>
    %236 = vector.extract_strided_slice %162 {offsets = [0, 24], sizes = [8, 8], strides = [1, 1]} : vector<8x32xf32> to vector<8x8xf32>
    %237 = arith.truncf %236 : vector<8x8xf32> to vector<8x8xbf16>
    %238 = vector.extract_strided_slice %165 {offsets = [0, 24], sizes = [8, 8], strides = [1, 1]} : vector<8x32xf32> to vector<8x8xf32>
    %239 = arith.truncf %238 : vector<8x8xf32> to vector<8x8xbf16>
    %240 = vector.extract_strided_slice %166 {offsets = [0, 24], sizes = [8, 8], strides = [1, 1]} : vector<8x32xf32> to vector<8x8xf32>
    %241 = arith.truncf %240 : vector<8x8xf32> to vector<8x8xbf16>
    %cst_100 = arith.constant dense<0.000000e+00> : vector<8x8xf32>
    %242 = tpu.matmul %237, %239, %cst_100 {dimension_numbers = #tpu.dot_dimension_numbers<[1], [1], [0], [0], [0, 0, 1, 0], [], []>} : vector<8x8xbf16>, vector<8x8xbf16>, vector<8x8xf32> -> vector<8x8xf32>
    %cst_101 = arith.constant -1.000000e+20 : f32
    %243 = vector.shape_cast %9 : vector<1x8xi1> to vector<1x8xi1>
    %244 = vector.broadcast %243 : vector<1x8xi1> to vector<8x8xi1>
    %245 = vector.broadcast %cst_101 : f32 to vector<8x8xf32>
    %246 = arith.select %244, %245, %242 : vector<8x8xi1>, vector<8x8xf32>
    %cst_102 = arith.constant dense<0xFF800000> : vector<8xf32>
    %247 = vector.multi_reduction <maximumf>, %246, %cst_102 [1] : vector<8x8xf32> to vector<8xf32>
    %248 = vector.shape_cast %247 : vector<8xf32> to vector<8x1xf32>
    %249 = vector.broadcast %248 : vector<8x1xf32> to vector<8x8xf32>
    %250 = arith.subf %246, %249 : vector<8x8xf32>
    %251 = math.exp %250 : vector<8x8xf32>
    %cst_103 = arith.constant dense<0.000000e+00> : vector<8xf32>
    %252 = vector.multi_reduction <add>, %251, %cst_103 [1] : vector<8x8xf32> to vector<8xf32>
    %253 = vector.shape_cast %252 : vector<8xf32> to vector<8x1xf32>
    %254 = tpu.reciprocal %253 {approx = true} : vector<8x1xf32> -> vector<8x1xf32>
    %255 = vector.broadcast %254 : vector<8x1xf32> to vector<8x8xf32>
    %256 = arith.mulf %251, %255 : vector<8x8xf32>
    %257 = arith.truncf %256 : vector<8x8xf32> to vector<8x8xbf16>
    %cst_104 = arith.constant dense<0.000000e+00> : vector<8x8xf32>
    %258 = tpu.matmul %257, %241, %cst_104 {dimension_numbers = #tpu.dot_dimension_numbers<[1], [0], [0], [1], [0, 0, 1, 1], [], []>} : vector<8x8xbf16>, vector<8x8xbf16>, vector<8x8xf32> -> vector<8x8xf32>
    %259 = tpu.concatenate %189, %212, %235, %258 in 1 : vector<8x8xf32>, vector<8x8xf32>, vector<8x8xf32>, vector<8x8xf32> -> vector<8x32xf32>
    %260 = arith.truncf %259 : vector<8x32xf32> to vector<8x32xbf16>
    %cst_105 = arith.constant dense<0.000000e+00> : vector<8x32xf32>
    %261 = tpu.matmul %260, %141, %cst_105 {dimension_numbers = #tpu.dot_dimension_numbers<[1], [0], [0], [1], [0, 0, 1, 1], [], []>} : vector<8x32xbf16>, vector<32x32xbf16>, vector<8x32xf32> -> vector<8x32xf32>
    %262 = vector.broadcast %143 : vector<1x32xf32> to vector<8x32xf32>
    %263 = arith.addf %261, %262 : vector<8x32xf32>
    %264 = arith.addf %263, %137 : vector<8x32xf32>
    %cst_106 = arith.constant dense<0.000000e+00> : vector<8xf32>
    %265 = vector.multi_reduction <add>, %264, %cst_106 [1] : vector<8x32xf32> to vector<8xf32>
    %266 = vector.shape_cast %265 : vector<8xf32> to vector<8x1xf32>
    %cst_107 = arith.constant 3.200000e+01 : f32
    %267 = vector.broadcast %cst_107 : f32 to vector<8x1xf32>
    %268 = arith.divf %266, %267 : vector<8x1xf32>
    %269 = vector.broadcast %268 : vector<8x1xf32> to vector<8x32xf32>
    %270 = arith.subf %264, %269 : vector<8x32xf32>
    %271 = arith.mulf %270, %270 : vector<8x32xf32>
    %cst_108 = arith.constant dense<0.000000e+00> : vector<8xf32>
    %272 = vector.multi_reduction <add>, %271, %cst_108 [1] : vector<8x32xf32> to vector<8xf32>
    %273 = vector.shape_cast %272 : vector<8xf32> to vector<8x1xf32>
    %cst_109 = arith.constant 3.200000e+01 : f32
    %274 = vector.broadcast %cst_109 : f32 to vector<8x1xf32>
    %275 = arith.divf %273, %274 : vector<8x1xf32>
    %cst_110 = arith.constant 9.99999974E-6 : f32
    %276 = vector.broadcast %cst_110 : f32 to vector<8x1xf32>
    %277 = arith.addf %275, %276 : vector<8x1xf32>
    %278 = math.rsqrt %277 : vector<8x1xf32>
    %279 = vector.broadcast %278 : vector<8x1xf32> to vector<8x32xf32>
    %280 = arith.mulf %270, %279 : vector<8x32xf32>
    %281 = vector.broadcast %145 : vector<1x32xf32> to vector<8x32xf32>
    %282 = arith.mulf %280, %281 : vector<8x32xf32>
    %283 = vector.broadcast %147 : vector<1x32xf32> to vector<8x32xf32>
    %284 = arith.addf %282, %283 : vector<8x32xf32>
    %285 = arith.truncf %284 : vector<8x32xf32> to vector<8x32xbf16>
    %cst_111 = arith.constant dense<0.000000e+00> : vector<8x64xf32>
    %286 = tpu.matmul %285, %149, %cst_111 {dimension_numbers = #tpu.dot_dimension_numbers<[1], [0], [0], [1], [0, 0, 1, 1], [], []>} : vector<8x32xbf16>, vector<32x64xbf16>, vector<8x64xf32> -> vector<8x64xf32>
    %287 = vector.broadcast %151 : vector<1x64xf32> to vector<8x64xf32>
    %288 = arith.addf %286, %287 : vector<8x64xf32>
    %cst_112 = arith.constant 0.000000e+00 : f32
    %289 = vector.broadcast %cst_112 : f32 to vector<8x64xf32>
    %290 = arith.maximumf %288, %289 : vector<8x64xf32>
    %291 = arith.truncf %290 : vector<8x64xf32> to vector<8x64xbf16>
    %cst_113 = arith.constant dense<0.000000e+00> : vector<8x32xf32>
    %292 = tpu.matmul %291, %153, %cst_113 {dimension_numbers = #tpu.dot_dimension_numbers<[1], [0], [0], [1], [0, 0, 1, 1], [], []>} : vector<8x64xbf16>, vector<64x32xbf16>, vector<8x32xf32> -> vector<8x32xf32>
    %293 = vector.broadcast %155 : vector<1x32xf32> to vector<8x32xf32>
    %294 = arith.addf %292, %293 : vector<8x32xf32>
    %295 = arith.addf %294, %284 : vector<8x32xf32>
    %cst_114 = arith.constant dense<0.000000e+00> : vector<8xf32>
    %296 = vector.multi_reduction <add>, %295, %cst_114 [1] : vector<8x32xf32> to vector<8xf32>
    %297 = vector.shape_cast %296 : vector<8xf32> to vector<8x1xf32>
    %cst_115 = arith.constant 3.200000e+01 : f32
    %298 = vector.broadcast %cst_115 : f32 to vector<8x1xf32>
    %299 = arith.divf %297, %298 : vector<8x1xf32>
    %300 = vector.broadcast %299 : vector<8x1xf32> to vector<8x32xf32>
    %301 = arith.subf %295, %300 : vector<8x32xf32>
    %302 = arith.mulf %301, %301 : vector<8x32xf32>
    %cst_116 = arith.constant dense<0.000000e+00> : vector<8xf32>
    %303 = vector.multi_reduction <add>, %302, %cst_116 [1] : vector<8x32xf32> to vector<8xf32>
    %304 = vector.shape_cast %303 : vector<8xf32> to vector<8x1xf32>
    %cst_117 = arith.constant 3.200000e+01 : f32
    %305 = vector.broadcast %cst_117 : f32 to vector<8x1xf32>
    %306 = arith.divf %304, %305 : vector<8x1xf32>
    %cst_118 = arith.constant 9.99999974E-6 : f32
    %307 = vector.broadcast %cst_118 : f32 to vector<8x1xf32>
    %308 = arith.addf %306, %307 : vector<8x1xf32>
    %309 = math.rsqrt %308 : vector<8x1xf32>
    %310 = vector.broadcast %309 : vector<8x1xf32> to vector<8x32xf32>
    %311 = arith.mulf %301, %310 : vector<8x32xf32>
    %312 = vector.broadcast %157 : vector<1x32xf32> to vector<8x32xf32>
    %313 = arith.mulf %311, %312 : vector<8x32xf32>
    %314 = vector.broadcast %159 : vector<1x32xf32> to vector<8x32xf32>
    %315 = arith.addf %313, %314 : vector<8x32xf32>
    %c0_119 = arith.constant 0 : index
    %c0_120 = arith.constant 0 : index
    %316 = vector.load %arg22[%c0_119, %c0_120] : memref<8x32xf32, #tpu.memory_space<vmem>>, vector<8x32xf32>
    tpu.vector_store %arg22[%c0_119, %c0_120], %315 {strides = array<i32>} : memref<8x32xf32, #tpu.memory_space<vmem>>, vector<8x32xf32>,
    %c1_i32 = arith.constant 1 : i32
    %317 = arith.cmpi eq, %arg1, %c1_i32 : i32
    %318 = arith.extui %317 : i1 to i32
    %c0_i32_121 = arith.constant 0 : i32
    %319 = arith.cmpi ne, %318, %c0_i32_121 : i32
    scf.if %319 {
      %320 = arith.truncf %315 : vector<8x32xf32> to vector<8x32xbf16>
      %c0_122 = arith.constant 0 : index
      %c0_123 = arith.constant 0 : index
      %c0_124 = arith.constant 0 : index
      %321 = vector.load %arg21[%c0_122, %c0_123, %c0_124] : memref<1x8x32xbf16, #tpu.memory_space<vmem>>, vector<1x8x32xbf16>
      %322 = vector.shape_cast %321 : vector<1x8x32xbf16> to vector<8x32xbf16>
      %323 = vector.shape_cast %320 : vector<8x32xbf16> to vector<1x8x32xbf16>
      tpu.vector_store %arg21[%c0_122, %c0_123, %c0_124], %323 {strides = array<i32>} : memref<1x8x32xbf16, #tpu.memory_space<vmem>>, vector<1x8x32xbf16>,
    } else {
    }
    return
  }
  func.func @transform_0(%arg0: i32, %arg1: i32) -> (i32, i32, i32) {
    %c0_i32 = arith.constant 0 : i32
    %c0_i32_0 = arith.constant 0 : i32
    %c0_i32_1 = arith.constant 0 : i32
    return %arg0, %c0_i32, %c0_i32_0 : i32, i32, i32
  }
  func.func @transform_1(%arg0: i32, %arg1: i32) -> (i32, i32, i32) {
    %c0_i32 = arith.constant 0 : i32
    %c0_i32_0 = arith.constant 0 : i32
    %c0_i32_1 = arith.constant 0 : i32
    return %arg0, %c0_i32, %c0_i32_0 : i32, i32, i32
  }
  func.func @transform_2(%arg0: i32, %arg1: i32) -> (i32, i32, i32) {
    %c0_i32 = arith.constant 0 : i32
    %c0_i32_0 = arith.constant 0 : i32
    %c0_i32_1 = arith.constant 0 : i32
    return %arg0, %c0_i32, %c0_i32_0 : i32, i32, i32
  }
  func.func @transform_3(%arg0: i32, %arg1: i32) -> (i32, i32, i32) {
    %c0_i32 = arith.constant 0 : i32
    %c0_i32_0 = arith.constant 0 : i32
    %c0_i32_1 = arith.constant 0 : i32
    return %arg1, %c0_i32, %c0_i32_0 : i32, i32, i32
  }
  func.func @transform_4(%arg0: i32, %arg1: i32) -> (i32, i32, i32) {
    %c0_i32 = arith.constant 0 : i32
    %c0_i32_0 = arith.constant 0 : i32
    %c0_i32_1 = arith.constant 0 : i32
    return %arg1, %c0_i32, %c0_i32_0 : i32, i32, i32
  }
  func.func @transform_5(%arg0: i32, %arg1: i32) -> (i32, i32, i32) {
    %c0_i32 = arith.constant 0 : i32
    %c0_i32_0 = arith.constant 0 : i32
    %c0_i32_1 = arith.constant 0 : i32
    return %arg1, %c0_i32, %c0_i32_0 : i32, i32, i32
  }
  func.func @transform_6(%arg0: i32, %arg1: i32) -> (i32, i32, i32) {
    %c0_i32 = arith.constant 0 : i32
    %c0_i32_0 = arith.constant 0 : i32
    %c0_i32_1 = arith.constant 0 : i32
    return %arg1, %c0_i32, %c0_i32_0 : i32, i32, i32
  }
  func.func @transform_7(%arg0: i32, %arg1: i32) -> (i32, i32, i32) {
    %c0_i32 = arith.constant 0 : i32
    %c0_i32_0 = arith.constant 0 : i32
    %c0_i32_1 = arith.constant 0 : i32
    return %arg1, %c0_i32, %c0_i32_0 : i32, i32, i32
  }
  func.func @transform_8(%arg0: i32, %arg1: i32) -> (i32, i32, i32) {
    %c0_i32 = arith.constant 0 : i32
    %c0_i32_0 = arith.constant 0 : i32
    %c0_i32_1 = arith.constant 0 : i32
    return %arg1, %c0_i32, %c0_i32_0 : i32, i32, i32
  }
  func.func @transform_9(%arg0: i32, %arg1: i32) -> (i32, i32, i32) {
    %c0_i32 = arith.constant 0 : i32
    %c0_i32_0 = arith.constant 0 : i32
    %c0_i32_1 = arith.constant 0 : i32
    return %arg1, %c0_i32, %c0_i32_0 : i32, i32, i32
  }
  func.func @transform_10(%arg0: i32, %arg1: i32) -> (i32, i32, i32) {
    %c0_i32 = arith.constant 0 : i32
    %c0_i32_0 = arith.constant 0 : i32
    %c0_i32_1 = arith.constant 0 : i32
    return %arg1, %c0_i32, %c0_i32_0 : i32, i32, i32
  }
  func.func @transform_11(%arg0: i32, %arg1: i32) -> (i32, i32, i32) {
    %c0_i32 = arith.constant 0 : i32
    %c0_i32_0 = arith.constant 0 : i32
    %c0_i32_1 = arith.constant 0 : i32
    return %arg1, %c0_i32, %c0_i32_0 : i32, i32, i32
  }
  func.func @transform_12(%arg0: i32, %arg1: i32) -> (i32, i32, i32) {
    %c0_i32 = arith.constant 0 : i32
    %c0_i32_0 = arith.constant 0 : i32
    %c0_i32_1 = arith.constant 0 : i32
    return %arg1, %c0_i32, %c0_i32_0 : i32, i32, i32
  }
  func.func @transform_13(%arg0: i32, %arg1: i32) -> (i32, i32, i32) {
    %c0_i32 = arith.constant 0 : i32
    %c0_i32_0 = arith.constant 0 : i32
    %c0_i32_1 = arith.constant 0 : i32
    return %arg1, %c0_i32, %c0_i32_0 : i32, i32, i32
  }
  func.func @transform_14(%arg0: i32, %arg1: i32) -> (i32, i32, i32) {
    %c0_i32 = arith.constant 0 : i32
    %c0_i32_0 = arith.constant 0 : i32
    %c0_i32_1 = arith.constant 0 : i32
    return %arg1, %c0_i32, %c0_i32_0 : i32, i32, i32
  }
  func.func @transform_15(%arg0: i32, %arg1: i32) -> (i32, i32, i32) {
    %c0_i32 = arith.constant 0 : i32
    %c0_i32_0 = arith.constant 0 : i32
    %c0_i32_1 = arith.constant 0 : i32
    return %arg1, %c0_i32, %c0_i32_0 : i32, i32, i32
  }
  func.func @transform_16(%arg0: i32, %arg1: i32) -> (i32, i32, i32) {
    %c0_i32 = arith.constant 0 : i32
    %c0_i32_0 = arith.constant 0 : i32
    %c0_i32_1 = arith.constant 0 : i32
    return %arg1, %c0_i32, %c0_i32_0 : i32, i32, i32
  }
  func.func @transform_17(%arg0: i32, %arg1: i32) -> (i32, i32, i32) {
    %c0_i32 = arith.constant 0 : i32
    %c0_i32_0 = arith.constant 0 : i32
    %c0_i32_1 = arith.constant 0 : i32
    return %arg1, %c0_i32, %c0_i32_0 : i32, i32, i32
  }
  func.func @transform_18(%arg0: i32, %arg1: i32) -> (i32, i32, i32) {
    %c0_i32 = arith.constant 0 : i32
    %c0_i32_0 = arith.constant 0 : i32
    %c0_i32_1 = arith.constant 0 : i32
    return %arg1, %c0_i32, %c0_i32_0 : i32, i32, i32
  }
  func.func @transform_19(%arg0: i32, %arg1: i32) -> (i32, i32, i32) {
    %c0_i32 = arith.constant 0 : i32
    %c0_i32_0 = arith.constant 0 : i32
    %c0_i32_1 = arith.constant 0 : i32
    return %arg0, %c0_i32, %c0_i32_0 : i32, i32, i32
  }
}

</mosaic_0001>

<llo_original>
// kernel: _lambda_.5
$region0: #{_lambda_.5}
  #allocation0 [shape = 'u32[]', space=smem, size = 0x4, offset = 0x4, fixed_abs, tag = 'smem constant byte address 0x4 - core index']
  #allocation1 [shape = 'u32[144,128]{1,0:T(1,128)}', space=vmem, size = 0x12000, scoped, tag = 'internal scratch']
  %s0 = inlined_call_operand.vmem [shape: bf16[16,32], index: 0, kind: input, shape index: {}]
  %s1 = inlined_call_operand.vmem [shape: bf16[32,128], index: 1, kind: input, shape index: {}]
  %s2 = inlined_call_operand.vmem [shape: f32[1,128], index: 2, kind: input, shape index: {}]
  %s3 = inlined_call_operand.vmem [shape: f32[16,128], index: 3, kind: output, shape index: {}]
  %s4 = sld [smem:[#allocation0]]
  $region22: #{_lambda_.5} parent=0
    _
  %s6 = ssub.s32 1, %s4
  %s7 = scalar_select 0, %s6, %s4
  // Predicated region
  $region2: #{_lambda_.5} parent=0 // pred_check
    _
  $region3: #{_lambda_.5} parent=0 // pred_check_branch
    %9 = sbr.rel (0) target = $region5
  $region4: #{_lambda_.5} parent=0 // pred_region
    _
  $region5: #{_lambda_.5} parent=0 // pred_fallthru
    _
  // Predicated region
  $region6: #{_lambda_.5} parent=0 // pred_check
    _
  $region7: #{_lambda_.5} parent=0 // pred_check_branch
    %11 = sbr.rel (0) target = $region9
  $region8: #{_lambda_.5} parent=0 // pred_region
    _
  $region9: #{_lambda_.5} parent=0 // pred_fallthru
    _
  // Predicated region
  $region10: #{_lambda_.5} parent=0 // pred_check
    _
  $region11: #{_lambda_.5} parent=0 // pred_check_branch
    %13 = sbr.rel (0) target = $region13
  $region12: #{_lambda_.5} parent=0 // pred_region
    _
  $region13: #{_lambda_.5} parent=0 // pred_fallthru
    _
  %v15 = vld [vmem:[%s0] sm:$0xf]
  %v16 = vld [vmem:[%s0 + $0x4] sm:$0xf]
  %v17 = vld [vmem:[%s1] sm:$0xf]
  %v18 = vld [vmem:[%s1 + $0x4] sm:$0xf]
  %v19 = vld [vmem:[%s1 + $0x8] sm:$0xf]
  %v20 = vld [vmem:[%s1 + $0xc] sm:$0xf]
  %v21 = vld [vmem:[%s2] sm:$0x1]
  %v23 = vlaneseq
  %v24 = vshrl.u32 %v23, 7
  %v25 = vsub.s32 0, %v24
  %v26 = vrot.slane %v21, %v25
  %v30 = vunpack.c.l.b16 %v15
  %v31 = vunpack.c.l.b16 %v16
  %v32 = vpack.c.b16 %v31, %v30
  %v37 = vunpack.c.l.b16 %v17
  %v38 = vunpack.c.l.b16 %v18
  %v39 = vunpack.c.l.b16 %v19
  %v40 = vunpack.c.l.b16 %v20
  %v41 = vpack.c.b16 %v38, %v37
  %v42 = vpack.c.b16 %v40, %v39
  %vm45 = vcmask 261120
  %v47 = vsel %vm45, %v32, 0
  %49 = vmatprep.subr.bf16.mxu0 0
  %50 = vmatpush1.bf16.msra.mxu0 0
  %51 = vmatprep.subr.bf16.mxu0 0
  %52 = vmatpush1.bf16.msra.mxu0 0
  %53 = vmatprep.subr.bf16.mxu0 0
  %54 = vmatpush1.bf16.msra.mxu0 0
  %55 = vmatprep.subr.bf16.mxu0 0
  %56 = vmatpush1.bf16.msra.mxu0 0
  %57 = vmatprep.subr.bf16.mxu0 0
  %58 = vmatpush1.bf16.msra.mxu0 0
  %59 = vmatprep.subr.bf16.mxu0 0
  %60 = vmatpush1.bf16.msra.mxu0 0
  %61 = vmatprep.subr.bf16.mxu0 0
  %62 = vmatpush1.bf16.msra.mxu0 %v42
  %63 = vmatprep.subr.bf16.mxu0 0
  %64 = vmatpush1.bf16.msra.mxu0 %v41
  %65 = vmatprep.subr.bf16.mxu0 0
  %66 = vmatpush2.bf16.msra.mxu0 0
  %67 = vmatprep.subr.bf16.mxu0 0
  %68 = vmatpush2.bf16.msra.mxu0 0
  %69 = vmatprep.subr.bf16.mxu0 0
  %70 = vmatpush2.bf16.msra.mxu0 0
  %71 = vmatprep.subr.bf16.mxu0 0
  %72 = vmatpush2.bf16.msra.mxu0 0
  %73 = vmatprep.subr.bf16.mxu0 0
  %74 = vmatpush2.bf16.msra.mxu0 0
  %75 = vmatprep.subr.bf16.mxu0 0
  %76 = vmatpush2.bf16.msra.mxu0 0
  %77 = vmatprep.subr.bf16.mxu0 0
  %78 = vmatpush2.bf16.msra.mxu0 0
  %79 = vmatprep.subr.bf16.mxu0 0
  %80 = vmatpush2.bf16.msra.mxu0 0
  %81 = vmatprep.mubr.bf16.mxu0 0
  %82 = vmatmul.mubr.bf16.gmra.mxu0 %v47
  %v83 = vpop.f32.mrf.mxu0
  %v84 = vadd.f32 %v26, %v83
  %v85 = vpop.f32.mrf.mxu0
  %v86 = vpop.f32.mrf.mxu0
  %v87 = vadd.f32 %v26, %v86
  %v88 = vpop.f32.mrf.mxu0
  %89 = vdwg.mxu0
  %90 = vst [vmem:[%s3] sm:$0xff] %v84
  %91 = vst [vmem:[%s3 + $0x8] sm:$0xff] %v87
  // Predicated region
  $region14: #{_lambda_.5} parent=0 // pred_check
    _
  $region15: #{_lambda_.5} parent=0 // pred_check_branch
    %93 = sbr.rel (0) target = $region17
  $region16: #{_lambda_.5} parent=0 // pred_region
    _
  $region17: #{_lambda_.5} parent=0 // pred_fallthru
    _
  // Predicated region
  $region18: #{_lambda_.5} parent=0 // pred_check
    _
  $region19: #{_lambda_.5} parent=0 // pred_check_branch
    %95 = sbr.rel (0) target = $region21
  $region20: #{_lambda_.5} parent=0 // pred_region
    _
  $region21: #{_lambda_.5} parent=0 // pred_fallthru
    _

// kernel: _lambda_.3
$region0: #{_lambda_.3}
  #allocation0 [shape = 'u32[]', space=smem, size = 0x4, offset = 0x4, fixed_abs, tag = 'smem constant byte address 0x4 - core index']
  #allocation1 [shape = 'u32[144,128]{1,0:T(1,128)}', space=vmem, size = 0x12000, scoped, tag = 'internal scratch']
  #allocation2 [shape = 'f32[8,32]{1,0:T(8,128)}', space=vmem, size = 0x1000, scoped, tag = 'scratch operand']
  %s0 = inlined_call_operand.vmem [shape: f32[2,8,32], index: 0, kind: input, shape index: {}]
  %s1 = inlined_call_operand.vmem [shape: s32[2,1,8], index: 1, kind: input, shape index: {}]
  %s2 = inlined_call_operand.vmem [shape: bf16[2,32,96], index: 2, kind: input, shape index: {}]
  %s3 = inlined_call_operand.vmem [shape: bf16[2,32,32], index: 3, kind: input, shape index: {}]
  %s4 = inlined_call_operand.vmem [shape: f32[2,1,32], index: 4, kind: input, shape index: {}]
  %s5 = inlined_call_operand.vmem [shape: f32[2,1,32], index: 5, kind: input, shape index: {}]
  %s6 = inlined_call_operand.vmem [shape: f32[2,1,32], index: 6, kind: input, shape index: {}]
  %s7 = inlined_call_operand.vmem [shape: bf16[2,32,64], index: 7, kind: input, shape index: {}]
  %s8 = inlined_call_operand.vmem [shape: f32[2,1,64], index: 8, kind: input, shape index: {}]
  %s9 = inlined_call_operand.vmem [shape: bf16[2,64,32], index: 9, kind: input, shape index: {}]
  %s10 = inlined_call_operand.vmem [shape: f32[2,1,32], index: 10, kind: input, shape index: {}]
  %s11 = inlined_call_operand.vmem [shape: f32[2,1,32], index: 11, kind: input, shape index: {}]
  %s12 = inlined_call_operand.vmem [shape: f32[2,1,32], index: 12, kind: input, shape index: {}]
  %s13 = inlined_call_operand.vmem [shape: bf16[2,8,32], index: 13, kind: output, shape index: {}]
  %s14 = sld [smem:[#allocation0]]
  $region93: #{_lambda_.3} parent=0
    _
  %s16 = ssub.s32 1, %s14
  %s17 = scalar_select 0, %s16, %s14
  loop: start=0, step=1, limit=6
  $region2: #{_lambda_.3} parent=0 // loop_pre_header
    _
  $region3: #{_lambda_.3} parent=0 // loop_header
    %s19 = sphi 0, %s23
    %p20 = scmp.ge.s32.totalorder %s19, 6
    %s26 = sphi 0, %s38
    %s27 = sphi 0, %s34
    %s28 = sphi 0, %s26
    %s29 = sphi 0, %s27
    %s30 = sphi 0, %s28
    %s31 = sphi 0, %s29
    %s41 = sphi 0, %s43
    %s44 = sphi 0, %s41
    %s45 = sphi 0, %s44
    %s61 = sphi 0, %s45
    %s67 = sphi 0, %s69
    %s70 = sphi 0, %s67
    %s71 = sphi 0, %s70
    %s87 = sphi 0, %s71
    %s93 = sphi 0, %s95
    %s96 = sphi 0, %s93
    %s97 = sphi 0, %s96
    %s113 = sphi 0, %s97
    %s119 = sphi 0, %s121
    %s122 = sphi 0, %s119
    %s123 = sphi 0, %s122
    %s139 = sphi 0, %s123
    %s145 = sphi 0, %s147
    %s148 = sphi 0, %s145
    %s149 = sphi 0, %s148
    %s165 = sphi 0, %s149
    %s171 = sphi 0, %s173
    %s174 = sphi 0, %s171
    %s175 = sphi 0, %s174
    %s191 = sphi 0, %s175
    %s197 = sphi 0, %s199
    %s200 = sphi 0, %s197
    %s201 = sphi 0, %s200
    %s217 = sphi 0, %s201
    %s223 = sphi 0, %s225
    %s226 = sphi 0, %s223
    %s227 = sphi 0, %s226
    %s243 = sphi 0, %s227
    %s249 = sphi 0, %s251
    %s252 = sphi 0, %s249
    %s253 = sphi 0, %s252
    %s269 = sphi 0, %s253
    %s275 = sphi 0, %s277
    %s278 = sphi 0, %s275
    %s279 = sphi 0, %s278
    %s295 = sphi 0, %s279
    %s301 = sphi 0, %s303
    %s304 = sphi 0, %s301
    %s305 = sphi 0, %s304
    %s321 = sphi 0, %s305
    %s327 = sphi 0, %s329
    %s330 = sphi 0, %s327
    %s331 = sphi 0, %s330
    %s347 = sphi 0, %s331
    %s353 = sphi 0, %s355
    %s356 = sphi 0, %s353
    %s357 = sphi 0, %s356
    %s373 = sphi 0, %s357
    %s379 = sphi 0, %s381
    %s382 = sphi 0, %s379
    %s383 = sphi 0, %s382
    %s399 = sphi 0, %s383
  $region4: #{_lambda_.3} parent=0 // loop_header_branch
    %22 = sbr.rel (%p20) target = $region8
  $region5: #{_lambda_.3} parent=0 // loop_body
    %s24 = ssub.s32 %s19, 1
    %s25 = ssub.s32 %s19, 2
    %s32 = sadd.s32 1, %s27
    %p33 = scmp.ge.s32.totalorder %s32, 2
    %s34 = scalar_select %p33, 0, %s32
    %s35 = sadd.s32 1, %s26
    %s36 = scalar_select %p33, %s35, %s26
    %p37 = scmp.ge.s32.totalorder %s36, 2
    %s38 = scalar_select %p37, 0, %s36
    %s39 = ssub.s32 %s26, %s38
    %p40 = scmp.eq.s32.totalorder %s39, 0
    %s42 = sadd.s32 %s41, 1
    %s43 = scalar_select %p40, %s41, %s42
    %p46 = pneg %p40
    %p47 = scmp.eq.s32.totalorder %s19, 3
    %p48 = por %p46, %p47
    %p49 = scmp.ne.s32.totalorder %s41, %s44
    %p50 = scmp.eq.s32.totalorder %s19, 0
    %p51 = por %p49, %p50
    %p52 = scmp.ne.s32.totalorder %s41, %s44
    %p53 = scmp.eq.s32.totalorder %s24, 3
    %p54 = por %p52, %p53
    %p55 = scmp.ne.s32.totalorder %s44, %s45
    %p56 = scmp.eq.s32.totalorder %s24, 0
    %p57 = por %p55, %p56
    %p58 = scmp.ne.s32.totalorder %s44, %s45
    %p59 = scmp.eq.s32.totalorder %s25, 3
    %p60 = por %p58, %p59
    %p62 = scmp.ne.s32.totalorder %s45, %s61
    %p63 = scmp.eq.s32.totalorder %s25, 0
    %p64 = por %p62, %p63
    %s65 = ssub.s32 %s26, %s38
    %p66 = scmp.eq.s32.totalorder %s65, 0
    %s68 = sadd.s32 %s67, 1
    %s69 = scalar_select %p66, %s67, %s68
    %p72 = pneg %p66
    %p73 = scmp.eq.s32.totalorder %s19, 3
    %p74 = por %p72, %p73
    %p75 = scmp.ne.s32.totalorder %s67, %s70
    %p76 = scmp.eq.s32.totalorder %s19, 0
    %p77 = por %p75, %p76
    %p78 = scmp.ne.s32.totalorder %s67, %s70
    %p79 = scmp.eq.s32.totalorder %s24, 3
    %p80 = por %p78, %p79
    %p81 = scmp.ne.s32.totalorder %s70, %s71
    %p82 = scmp.eq.s32.totalorder %s24, 0
    %p83 = por %p81, %p82
    %p84 = scmp.ne.s32.totalorder %s70, %s71
    %p85 = scmp.eq.s32.totalorder %s25, 3
    %p86 = por %p84, %p85
    %p88 = scmp.ne.s32.totalorder %s71, %s87
    %p89 = scmp.eq.s32.totalorder %s25, 0
    %p90 = por %p88, %p89
    %s91 = ssub.s32 %s27, %s34
    %p92 = scmp.eq.s32.totalorder %s91, 0
    %s94 = sadd.s32 %s93, 1
    %s95 = scalar_select %p92, %s93, %s94
    %p98 = pneg %p92
    %p99 = scmp.eq.s32.totalorder %s19, 3
    %p100 = por %p98, %p99
    %p101 = scmp.ne.s32.totalorder %s93, %s96
    %p102 = scmp.eq.s32.totalorder %s19, 0
    %p103 = por %p101, %p102
    %p104 = scmp.ne.s32.totalorder %s93, %s96
    %p105 = scmp.eq.s32.totalorder %s24, 3
    %p106 = por %p104, %p105
    %p107 = scmp.ne.s32.totalorder %s96, %s97
    %p108 = scmp.eq.s32.totalorder %s24, 0
    %p109 = por %p107, %p108
    %p110 = scmp.ne.s32.totalorder %s96, %s97
    %p111 = scmp.eq.s32.totalorder %s25, 3
    %p112 = por %p110, %p111
    %p114 = scmp.ne.s32.totalorder %s97, %s113
    %p115 = scmp.eq.s32.totalorder %s25, 0
    %p116 = por %p114, %p115
    %s117 = ssub.s32 %s27, %s34
    %p118 = scmp.eq.s32.totalorder %s117, 0
    %s120 = sadd.s32 %s119, 1
    %s121 = scalar_select %p118, %s119, %s120
    %p124 = pneg %p118
    %p125 = scmp.eq.s32.totalorder %s19, 3
    %p126 = por %p124, %p125
    %p127 = scmp.ne.s32.totalorder %s119, %s122
    %p128 = scmp.eq.s32.totalorder %s19, 0
    %p129 = por %p127, %p128
    %p130 = scmp.ne.s32.totalorder %s119, %s122
    %p131 = scmp.eq.s32.totalorder %s24, 3
    %p132 = por %p130, %p131
    %p133 = scmp.ne.s32.totalorder %s122, %s123
    %p134 = scmp.eq.s32.totalorder %s24, 0
    %p135 = por %p133, %p134
    %p136 = scmp.ne.s32.totalorder %s122, %s123
    %p137 = scmp.eq.s32.totalorder %s25, 3
    %p138 = por %p136, %p137
    %p140 = scmp.ne.s32.totalorder %s123, %s139
    %p141 = scmp.eq.s32.totalorder %s25, 0
    %p142 = por %p140, %p141
    %s143 = ssub.s32 %s27, %s34
    %p144 = scmp.eq.s32.totalorder %s143, 0
    %s146 = sadd.s32 %s145, 1
    %s147 = scalar_select %p144, %s145, %s146
    %p150 = pneg %p144
    %p151 = scmp.eq.s32.totalorder %s19, 3
    %p152 = por %p150, %p151
    %p153 = scmp.ne.s32.totalorder %s145, %s148
    %p154 = scmp.eq.s32.totalorder %s19, 0
    %p155 = por %p153, %p154
    %p156 = scmp.ne.s32.totalorder %s145, %s148
    %p157 = scmp.eq.s32.totalorder %s24, 3
    %p158 = por %p156, %p157
    %p159 = scmp.ne.s32.totalorder %s148, %s149
    %p160 = scmp.eq.s32.totalorder %s24, 0
    %p161 = por %p159, %p160
    %p162 = scmp.ne.s32.totalorder %s148, %s149
    %p163 = scmp.eq.s32.totalorder %s25, 3
    %p164 = por %p162, %p163
    %p166 = scmp.ne.s32.totalorder %s149, %s165
    %p167 = scmp.eq.s32.totalorder %s25, 0
    %p168 = por %p166, %p167
    %s169 = ssub.s32 %s27, %s34
    %p170 = scmp.eq.s32.totalorder %s169, 0
    %s172 = sadd.s32 %s171, 1
    %s173 = scalar_select %p170, %s171, %s172
    %p176 = pneg %p170
    %p177 = scmp.eq.s32.totalorder %s19, 3
    %p178 = por %p176, %p177
    %p179 = scmp.ne.s32.totalorder %s171, %s174
    %p180 = scmp.eq.s32.totalorder %s19, 0
    %p181 = por %p179, %p180
    %p182 = scmp.ne.s32.totalorder %s171, %s174
    %p183 = scmp.eq.s32.totalorder %s24, 3
    %p184 = por %p182, %p183
    %p185 = scmp.ne.s32.totalorder %s174, %s175
    %p186 = scmp.eq.s32.totalorder %s24, 0
    %p187 = por %p185, %p186
    %p188 = scmp.ne.s32.totalorder %s174, %s175
    %p189 = scmp.eq.s32.totalorder %s25, 3
    %p190 = por %p188, %p189
    %p192 = scmp.ne.s32.totalorder %s175, %s191
    %p193 = scmp.eq.s32.totalorder %s25, 0
    %p194 = por %p192, %p193
    %s195 = ssub.s32 %s27, %s34
    %p196 = scmp.eq.s32.totalorder %s195, 0
    %s198 = sadd.s32 %s197, 1
    %s199 = scalar_select %p196, %s197, %s198
    %p202 = pneg %p196
    %p203 = scmp.eq.s32.totalorder %s19, 3
    %p204 = por %p202, %p203
    %p205 = scmp.ne.s32.totalorder %s197, %s200
    %p206 = scmp.eq.s32.totalorder %s19, 0
    %p207 = por %p205, %p206
    %p208 = scmp.ne.s32.totalorder %s197, %s200
    %p209 = scmp.eq.s32.totalorder %s24, 3
    %p210 = por %p208, %p209
    %p211 = scmp.ne.s32.totalorder %s200, %s201
    %p212 = scmp.eq.s32.totalorder %s24, 0
    %p213 = por %p211, %p212
    %p214 = scmp.ne.s32.totalorder %s200, %s201
    %p215 = scmp.eq.s32.totalorder %s25, 3
    %p216 = por %p214, %p215
    %p218 = scmp.ne.s32.totalorder %s201, %s217
    %p219 = scmp.eq.s32.totalorder %s25, 0
    %p220 = por %p218, %p219
    %s221 = ssub.s32 %s27, %s34
    %p222 = scmp.eq.s32.totalorder %s221, 0
    %s224 = sadd.s32 %s223, 1
    %s225 = scalar_select %p222, %s223, %s224
    %p228 = pneg %p222
    %p229 = scmp.eq.s32.totalorder %s19, 3
    %p230 = por %p228, %p229
    %p231 = scmp.ne.s32.totalorder %s223, %s226
    %p232 = scmp.eq.s32.totalorder %s19, 0
    %p233 = por %p231, %p232
    %p234 = scmp.ne.s32.totalorder %s223, %s226
    %p235 = scmp.eq.s32.totalorder %s24, 3
    %p236 = por %p234, %p235
    %p237 = scmp.ne.s32.totalorder %s226, %s227
    %p238 = scmp.eq.s32.totalorder %s24, 0
    %p239 = por %p237, %p238
    %p240 = scmp.ne.s32.totalorder %s226, %s227
    %p241 = scmp.eq.s32.totalorder %s25, 3
    %p242 = por %p240, %p241
    %p244 = scmp.ne.s32.totalorder %s227, %s243
    %p245 = scmp.eq.s32.totalorder %s25, 0
    %p246 = por %p244, %p245
    %s247 = ssub.s32 %s27, %s34
    %p248 = scmp.eq.s32.totalorder %s247, 0
    %s250 = sadd.s32 %s249, 1
    %s251 = scalar_select %p248, %s249, %s250
    %p254 = pneg %p248
    %p255 = scmp.eq.s32.totalorder %s19, 3
    %p256 = por %p254, %p255
    %p257 = scmp.ne.s32.totalorder %s249, %s252
    %p258 = scmp.eq.s32.totalorder %s19, 0
    %p259 = por %p257, %p258
    %p260 = scmp.ne.s32.totalorder %s249, %s252
    %p261 = scmp.eq.s32.totalorder %s24, 3
    %p262 = por %p260, %p261
    %p263 = scmp.ne.s32.totalorder %s252, %s253
    %p264 = scmp.eq.s32.totalorder %s24, 0
    %p265 = por %p263, %p264
    %p266 = scmp.ne.s32.totalorder %s252, %s253
    %p267 = scmp.eq.s32.totalorder %s25, 3
    %p268 = por %p266, %p267
    %p270 = scmp.ne.s32.totalorder %s253, %s269
    %p271 = scmp.eq.s32.totalorder %s25, 0
    %p272 = por %p270, %p271
    %s273 = ssub.s32 %s27, %s34
    %p274 = scmp.eq.s32.totalorder %s273, 0
    %s276 = sadd.s32 %s275, 1
    %s277 = scalar_select %p274, %s275, %s276
    %p280 = pneg %p274
    %p281 = scmp.eq.s32.totalorder %s19, 3
    %p282 = por %p280, %p281
    %p283 = scmp.ne.s32.totalorder %s275, %s278
    %p284 = scmp.eq.s32.totalorder %s19, 0
    %p285 = por %p283, %p284
    %p286 = scmp.ne.s32.totalorder %s275, %s278
    %p287 = scmp.eq.s32.totalorder %s24, 3
    %p288 = por %p286, %p287
    %p289 = scmp.ne.s32.totalorder %s278, %s279
    %p290 = scmp.eq.s32.totalorder %s24, 0
    %p291 = por %p289, %p290
    %p292 = scmp.ne.s32.totalorder %s278, %s279
    %p293 = scmp.eq.s32.totalorder %s25, 3
    %p294 = por %p292, %p293
    %p296 = scmp.ne.s32.totalorder %s279, %s295
    %p297 = scmp.eq.s32.totalorder %s25, 0
    %p298 = por %p296, %p297
    %s299 = ssub.s32 %s27, %s34
    %p300 = scmp.eq.s32.totalorder %s299, 0
    %s302 = sadd.s32 %s301, 1
    %s303 = scalar_select %p300, %s301, %s302
    %p306 = pneg %p300
    %p307 = scmp.eq.s32.totalorder %s19, 3
    %p308 = por %p306, %p307
    %p309 = scmp.ne.s32.totalorder %s301, %s304
    %p310 = scmp.eq.s32.totalorder %s19, 0
    %p311 = por %p309, %p310
    %p312 = scmp.ne.s32.totalorder %s301, %s304
    %p313 = scmp.eq.s32.totalorder %s24, 3
    %p314 = por %p312, %p313
    %p315 = scmp.ne.s32.totalorder %s304, %s305
    %p316 = scmp.eq.s32.totalorder %s24, 0
    %p317 = por %p315, %p316
    %p318 = scmp.ne.s32.totalorder %s304, %s305
    %p319 = scmp.eq.s32.totalorder %s25, 3
    %p320 = por %p318, %p319
    %p322 = scmp.ne.s32.totalorder %s305, %s321
    %p323 = scmp.eq.s32.totalorder %s25, 0
    %p324 = por %p322, %p323
    %s325 = ssub.s32 %s27, %s34
    %p326 = scmp.eq.s32.totalorder %s325, 0
    %s328 = sadd.s32 %s327, 1
    %s329 = scalar_select %p326, %s327, %s328
    %p332 = pneg %p326
    %p333 = scmp.eq.s32.totalorder %s19, 3
    %p334 = por %p332, %p333
    %p335 = scmp.ne.s32.totalorder %s327, %s330
    %p336 = scmp.eq.s32.totalorder %s19, 0
    %p337 = por %p335, %p336
    %p338 = scmp.ne.s32.totalorder %s327, %s330
    %p339 = scmp.eq.s32.totalorder %s24, 3
    %p340 = por %p338, %p339
    %p341 = scmp.ne.s32.totalorder %s330, %s331
    %p342 = scmp.eq.s32.totalorder %s24, 0
    %p343 = por %p341, %p342
    %p344 = scmp.ne.s32.totalorder %s330, %s331
    %p345 = scmp.eq.s32.totalorder %s25, 3
    %p346 = por %p344, %p345
    %p348 = scmp.ne.s32.totalorder %s331, %s347
    %p349 = scmp.eq.s32.totalorder %s25, 0
    %p350 = por %p348, %p349
    %s351 = ssub.s32 %s27, %s34
    %p352 = scmp.eq.s32.totalorder %s351, 0
    %s354 = sadd.s32 %s353, 1
    %s355 = scalar_select %p352, %s353, %s354
    %p358 = pneg %p352
    %p359 = scmp.eq.s32.totalorder %s19, 3
    %p360 = por %p358, %p359
    %p361 = scmp.ne.s32.totalorder %s353, %s356
    %p362 = scmp.eq.s32.totalorder %s19, 0
    %p363 = por %p361, %p362
    %p364 = scmp.ne.s32.totalorder %s353, %s356
    %p365 = scmp.eq.s32.totalorder %s24, 3
    %p366 = por %p364, %p365
    %p367 = scmp.ne.s32.totalorder %s356, %s357
    %p368 = scmp.eq.s32.totalorder %s24, 0
    %p369 = por %p367, %p368
    %p370 = scmp.ne.s32.totalorder %s356, %s357
    %p371 = scmp.eq.s32.totalorder %s25, 3
    %p372 = por %p370, %p371
    %p374 = scmp.ne.s32.totalorder %s357, %s373
    %p375 = scmp.eq.s32.totalorder %s25, 0
    %p376 = por %p374, %p375
    %s377 = ssub.s32 %s26, %s38
    %p378 = scmp.eq.s32.totalorder %s377, 0
    %s380 = sadd.s32 %s379, 1
    %s381 = scalar_select %p378, %s379, %s380
    %p384 = pneg %p378
    %p385 = scmp.eq.s32.totalorder %s19, 3
    %p386 = por %p384, %p385
    %p387 = scmp.ne.s32.totalorder %s379, %s382
    %p388 = scmp.eq.s32.totalorder %s19, 0
    %p389 = por %p387, %p388
    %p390 = scmp.ne.s32.totalorder %s379, %s382
    %p391 = scmp.eq.s32.totalorder %s24, 3
    %p392 = por %p390, %p391
    %p393 = scmp.ne.s32.totalorder %s382, %s383
    %p394 = scmp.eq.s32.totalorder %s24, 0
    %p395 = por %p393, %p394
    %p396 = scmp.ne.s32.totalorder %s382, %s383
    %p397 = scmp.eq.s32.totalorder %s25, 3
    %p398 = por %p396, %p397
    %p400 = scmp.ne.s32.totalorder %s383, %s399
    %p401 = scmp.eq.s32.totalorder %s25, 0
    %p402 = por %p400, %p401
    %p403 = scmp.le.s32.totalorder 1, %s19
    %p404 = scmp.lt.s32.totalorder %s19, 5
    %p405 = pnand %p403, %p404
    %p406 = pneg %p405
    // Predicated region
    $region9: #{_lambda_.3} parent=5 // pred_check
      _
    $region10: #{_lambda_.3} parent=5 // pred_check_branch
      %408 = sbr.rel (%p405) target = $region12
    $region11: #{_lambda_.3} parent=5 // pred_region
      %s409 = ssub.s32 %s19, 1
    $region12: #{_lambda_.3} parent=5 // pred_fallthru
      _
    %p410 = scmp.lt.s32.totalorder %s19, 4
    // Predicated region
    $region13: #{_lambda_.3} parent=5 // pred_check
      %p411 = pneg %p410
    $region14: #{_lambda_.3} parent=5 // pred_check_branch
      %413 = sbr.rel (%p411) target = $region16
    $region15: #{_lambda_.3} parent=5 // pred_region
      // Predicated region
      $region17: #{_lambda_.3} parent=15 // pred_check
        %p414 = pneg %p51
      $region18: #{_lambda_.3} parent=15 // pred_check_branch
        %416 = sbr.rel (%p414) target = $region20
      $region19: #{_lambda_.3} parent=15 // pred_region
        %p417 = scmp.lt.s32.totalorder %s26, 1
        %s418 = scalar_select %p417, %s26, 1
        %s419 = smul.addr %s418, 8
        %s420 = scalar_lea.vmem %s0, %s419
      $region20: #{_lambda_.3} parent=15 // pred_fallthru
        _
      // Predicated region
      $region21: #{_lambda_.3} parent=15 // pred_check
        %p421 = pneg %p77
      $region22: #{_lambda_.3} parent=15 // pred_check_branch
        %423 = sbr.rel (%p421) target = $region24
      $region23: #{_lambda_.3} parent=15 // pred_region
        %p424 = scmp.lt.s32.totalorder %s26, 1
        %s425 = scalar_select %p424, %s26, 1
        %s426 = scalar_lea.vmem %s1, %s425
      $region24: #{_lambda_.3} parent=15 // pred_fallthru
        _
      // Predicated region
      $region25: #{_lambda_.3} parent=15 // pred_check
        %p427 = pneg %p103
      $region26: #{_lambda_.3} parent=15 // pred_check_branch
        %429 = sbr.rel (%p427) target = $region28
      $region27: #{_lambda_.3} parent=15 // pred_region
        %p430 = scmp.lt.s32.totalorder %s27, 1
        %s431 = scalar_select %p430, %s27, 1
        %s432 = smul.addr %s431, 4
        %s433 = smul.addr %s432, 4
        %s434 = scalar_lea.vmem %s2, %s433
      $region28: #{_lambda_.3} parent=15 // pred_fallthru
        _
      // Predicated region
      $region29: #{_lambda_.3} parent=15 // pred_check
        %p435 = pneg %p129
      $region30: #{_lambda_.3} parent=15 // pred_check_branch
        %437 = sbr.rel (%p435) target = $region32
      $region31: #{_lambda_.3} parent=15 // pred_region
        %p438 = scmp.lt.s32.totalorder %s27, 1
        %s439 = scalar_select %p438, %s27, 1
        %s440 = smul.addr %s439, 4
        %s441 = smul.addr %s440, 4
        %s442 = scalar_lea.vmem %s3, %s441
      $region32: #{_lambda_.3} parent=15 // pred_fallthru
        _
      // Predicated region
      $region33: #{_lambda_.3} parent=15 // pred_check
        %p443 = pneg %p155
      $region34: #{_lambda_.3} parent=15 // pred_check_branch
        %445 = sbr.rel (%p443) target = $region36
      $region35: #{_lambda_.3} parent=15 // pred_region
        %p446 = scmp.lt.s32.totalorder %s27, 1
        %s447 = scalar_select %p446, %s27, 1
        %s448 = scalar_lea.vmem %s4, %s447
      $region36: #{_lambda_.3} parent=15 // pred_fallthru
        _
      // Predicated region
      $region37: #{_lambda_.3} parent=15 // pred_check
        %p449 = pneg %p181
      $region38: #{_lambda_.3} parent=15 // pred_check_branch
        %451 = sbr.rel (%p449) target = $region40
      $region39: #{_lambda_.3} parent=15 // pred_region
        %p452 = scmp.lt.s32.totalorder %s27, 1
        %s453 = scalar_select %p452, %s27, 1
        %s454 = scalar_lea.vmem %s5, %s453
      $region40: #{_lambda_.3} parent=15 // pred_fallthru
        _
      // Predicated region
      $region41: #{_lambda_.3} parent=15 // pred_check
        %p455 = pneg %p207
      $region42: #{_lambda_.3} parent=15 // pred_check_branch
        %457 = sbr.rel (%p455) target = $region44
      $region43: #{_lambda_.3} parent=15 // pred_region
        %p458 = scmp.lt.s32.totalorder %s27, 1
        %s459 = scalar_select %p458, %s27, 1
        %s460 = scalar_lea.vmem %s6, %s459
      $region44: #{_lambda_.3} parent=15 // pred_fallthru
        _
      // Predicated region
      $region45: #{_lambda_.3} parent=15 // pred_check
        %p461 = pneg %p233
      $region46: #{_lambda_.3} parent=15 // pred_check_branch
        %463 = sbr.rel (%p461) target = $region48
      $region47: #{_lambda_.3} parent=15 // pred_region
        %p464 = scmp.lt.s32.totalorder %s27, 1
        %s465 = scalar_select %p464, %s27, 1
        %s466 = smul.addr %s465, 4
        %s467 = smul.addr %s466, 4
        %s468 = scalar_lea.vmem %s7, %s467
      $region48: #{_lambda_.3} parent=15 // pred_fallthru
        _
      // Predicated region
      $region49: #{_lambda_.3} parent=15 // pred_check
        %p469 = pneg %p259
      $region50: #{_lambda_.3} parent=15 // pred_check_branch
        %471 = sbr.rel (%p469) target = $region52
      $region51: #{_lambda_.3} parent=15 // pred_region
        %p472 = scmp.lt.s32.totalorder %s27, 1
        %s473 = scalar_select %p472, %s27, 1
        %s474 = scalar_lea.vmem %s8, %s473
      $region52: #{_lambda_.3} parent=15 // pred_fallthru
        _
      // Predicated region
      $region53: #{_lambda_.3} parent=15 // pred_check
        %p475 = pneg %p285
      $region54: #{_lambda_.3} parent=15 // pred_check_branch
        %477 = sbr.rel (%p475) target = $region56
      $region55: #{_lambda_.3} parent=15 // pred_region
        %p478 = scmp.lt.s32.totalorder %s27, 1
        %s479 = scalar_select %p478, %s27, 1
        %s480 = smul.addr %s479, 8
        %s481 = smul.addr %s480, 4
        %s482 = scalar_lea.vmem %s9, %s481
      $region56: #{_lambda_.3} parent=15 // pred_fallthru
        _
      // Predicated region
      $region57: #{_lambda_.3} parent=15 // pred_check
        %p483 = pneg %p311
      $region58: #{_lambda_.3} parent=15 // pred_check_branch
        %485 = sbr.rel (%p483) target = $region60
      $region59: #{_lambda_.3} parent=15 // pred_region
        %p486 = scmp.lt.s32.totalorder %s27, 1
        %s487 = scalar_select %p486, %s27, 1
        %s488 = scalar_lea.vmem %s10, %s487
      $region60: #{_lambda_.3} parent=15 // pred_fallthru
        _
      // Predicated region
      $region61: #{_lambda_.3} parent=15 // pred_check
        %p489 = pneg %p337
      $region62: #{_lambda_.3} parent=15 // pred_check_branch
        %491 = sbr.rel (%p489) target = $region64
      $region63: #{_lambda_.3} parent=15 // pred_region
        %p492 = scmp.lt.s32.totalorder %s27, 1
        %s493 = scalar_select %p492, %s27, 1
        %s494 = scalar_lea.vmem %s11, %s493
      $region64: #{_lambda_.3} parent=15 // pred_fallthru
        _
      // Predicated region
      $region65: #{_lambda_.3} parent=15 // pred_check
        %p495 = pneg %p363
      $region66: #{_lambda_.3} parent=15 // pred_check_branch
        %497 = sbr.rel (%p495) target = $region68
      $region67: #{_lambda_.3} parent=15 // pred_region
        %p498 = scmp.lt.s32.totalorder %s27, 1
        %s499 = scalar_select %p498, %s27, 1
        %s500 = scalar_lea.vmem %s12, %s499
      $region68: #{_lambda_.3} parent=15 // pred_fallthru
        _
    $region16: #{_lambda_.3} parent=5 // pred_fallthru
      _
    %p501 = scmp.le.s32.totalorder 1, %s19
    %p502 = scmp.lt.s32.totalorder %s19, 5
    %p503 = pnand %p501, %p502
    %p504 = pneg %p503
    // Predicated region
    $region69: #{_lambda_.3} parent=5 // pred_check
      _
    $region70: #{_lambda_.3} parent=5 // pred_check_branch
      %506 = sbr.rel (%p503) target = $region72
    $region71: #{_lambda_.3} parent=5 // pred_region
      %s507 = ssub.s32 %s19, 1
      %p508 = scmp.lt.s32.totalorder %s28, 1
      %s509 = scalar_select %p508, %s28, 1
      %s510 = smul.addr %s509, 8
      %s511 = scalar_lea.vmem %s0, %s510
      %p512 = pneg %p57
      %p513 = pneg %p54
      %p514 = scmp.lt.s32.totalorder %s28, 1
      %s515 = scalar_select %p514, %s28, 1
      %s516 = scalar_lea.vmem %s1, %s515
      %p517 = pneg %p83
      %p518 = pneg %p80
      %p519 = scmp.lt.s32.totalorder %s29, 1
      %s520 = scalar_select %p519, %s29, 1
      %s521 = smul.addr %s520, 4
      %s522 = smul.addr %s521, 4
      %s523 = scalar_lea.vmem %s2, %s522
      %p524 = pneg %p109
      %p525 = pneg %p106
      %p526 = scmp.lt.s32.totalorder %s29, 1
      %s527 = scalar_select %p526, %s29, 1
      %s528 = smul.addr %s527, 4
      %s529 = smul.addr %s528, 4
      %s530 = scalar_lea.vmem %s3, %s529
      %p531 = pneg %p135
      %p532 = pneg %p132
      %p533 = scmp.lt.s32.totalorder %s29, 1
      %s534 = scalar_select %p533, %s29, 1
      %s535 = scalar_lea.vmem %s4, %s534
      %p536 = pneg %p161
      %p537 = pneg %p158
      %p538 = scmp.lt.s32.totalorder %s29, 1
      %s539 = scalar_select %p538, %s29, 1
      %s540 = scalar_lea.vmem %s5, %s539
      %p541 = pneg %p187
      %p542 = pneg %p184
      %p543 = scmp.lt.s32.totalorder %s29, 1
      %s544 = scalar_select %p543, %s29, 1
      %s545 = scalar_lea.vmem %s6, %s544
      %p546 = pneg %p213
      %p547 = pneg %p210
      %p548 = scmp.lt.s32.totalorder %s29, 1
      %s549 = scalar_select %p548, %s29, 1
      %s550 = smul.addr %s549, 4
      %s551 = smul.addr %s550, 4
      %s552 = scalar_lea.vmem %s7, %s551
      %p553 = pneg %p239
      %p554 = pneg %p236
      %p555 = scmp.lt.s32.totalorder %s29, 1
      %s556 = scalar_select %p555, %s29, 1
      %s557 = scalar_lea.vmem %s8, %s556
      %p558 = pneg %p265
      %p559 = pneg %p262
      %p560 = scmp.lt.s32.totalorder %s29, 1
      %s561 = scalar_select %p560, %s29, 1
      %s562 = smul.addr %s561, 8
      %s563 = smul.addr %s562, 4
      %s564 = scalar_lea.vmem %s9, %s563
      %p565 = pneg %p291
      %p566 = pneg %p288
      %p567 = scmp.lt.s32.totalorder %s29, 1
      %s568 = scalar_select %p567, %s29, 1
      %s569 = scalar_lea.vmem %s10, %s568
      %p570 = pneg %p317
      %p571 = pneg %p314
      %p572 = scmp.lt.s32.totalorder %s29, 1
      %s573 = scalar_select %p572, %s29, 1
      %s574 = scalar_lea.vmem %s11, %s573
      %p575 = pneg %p343
      %p576 = pneg %p340
      %p577 = scmp.lt.s32.totalorder %s29, 1
      %s578 = scalar_select %p577, %s29, 1
      %s579 = scalar_lea.vmem %s12, %s578
      %p580 = pneg %p369
      %p581 = pneg %p366
      %p582 = pneg %p395
      %p583 = pneg %p392
      %p584 = scmp.lt.s32.totalorder %s28, 1
      %s585 = scalar_select %p584, %s28, 1
      %s586 = smul.addr %s585, 4
      %s587 = scalar_lea.vmem %s13, %s586
      %p588 = scmp.lt.s32.totalorder %s28, 1
      %s589 = scalar_select %p588, %s28, 1
      %s590 = smul.addr %s589, 8
      %s591 = scalar_lea.vmem %s0, %s590
      %p592 = scmp.lt.s32.totalorder %s28, 1
      %s593 = scalar_select %p592, %s28, 1
      %s594 = scalar_lea.vmem %s1, %s593
      %p595 = scmp.lt.s32.totalorder %s29, 1
      %s596 = scalar_select %p595, %s29, 1
      %s597 = smul.addr %s596, 4
      %s598 = smul.addr %s597, 4
      %s599 = scalar_lea.vmem %s2, %s598
      %p600 = scmp.lt.s32.totalorder %s29, 1
      %s601 = scalar_select %p600, %s29, 1
      %s602 = smul.addr %s601, 4
      %s603 = smul.addr %s602, 4
      %s604 = scalar_lea.vmem %s3, %s603
      %p605 = scmp.lt.s32.totalorder %s29, 1
      %s606 = scalar_select %p605, %s29, 1
      %s607 = scalar_lea.vmem %s4, %s606
      %p608 = scmp.lt.s32.totalorder %s29, 1
      %s609 = scalar_select %p608, %s29, 1
      %s610 = scalar_lea.vmem %s5, %s609
      %p611 = scmp.lt.s32.totalorder %s29, 1
      %s612 = scalar_select %p611, %s29, 1
      %s613 = scalar_lea.vmem %s6, %s612
      %p614 = scmp.lt.s32.totalorder %s29, 1
      %s615 = scalar_select %p614, %s29, 1
      %s616 = smul.addr %s615, 4
      %s617 = smul.addr %s616, 4
      %s618 = scalar_lea.vmem %s7, %s617
      %p619 = scmp.lt.s32.totalorder %s29, 1
      %s620 = scalar_select %p619, %s29, 1
      %s621 = scalar_lea.vmem %s8, %s620
      %p622 = scmp.lt.s32.totalorder %s29, 1
      %s623 = scalar_select %p622, %s29, 1
      %s624 = smul.addr %s623, 8
      %s625 = smul.addr %s624, 4
      %s626 = scalar_lea.vmem %s9, %s625
      %p627 = scmp.lt.s32.totalorder %s29, 1
      %s628 = scalar_select %p627, %s29, 1
      %s629 = scalar_lea.vmem %s10, %s628
      %p630 = scmp.lt.s32.totalorder %s29, 1
      %s631 = scalar_select %p630, %s29, 1
      %s632 = scalar_lea.vmem %s11, %s631
      %p633 = scmp.lt.s32.totalorder %s29, 1
      %s634 = scalar_select %p633, %s29, 1
      %s635 = scalar_lea.vmem %s12, %s634
      %p636 = scmp.lt.s32.totalorder %s28, 1
      %s637 = scalar_select %p636, %s28, 1
      %s638 = smul.addr %s637, 4
      %s639 = scalar_lea.vmem %s13, %s638
      %p641 = scmp.eq.s32.totalorder %s29, 0
      // Predicated region
      $region73: #{_lambda_.3} parent=71 // pred_check
        %p642 = pneg %p641
      $region74: #{_lambda_.3} parent=71 // pred_check_branch
        %644 = sbr.rel (%p642) target = $region76
      $region75: #{_lambda_.3} parent=71 // pred_region
        %v645 = vld [vmem:[%s591] sm:$0xff]
        %vm646 = vcmask 261120
        %647 = vst.msk [vmem:[#allocation2] sm:$0xff] %vm646, %v645
      $region76: #{_lambda_.3} parent=71 // pred_fallthru
        _
      %v648 = vld [vmem:[#allocation2] sm:$0xff]
      %v649 = vld [vmem:[%s594] sm:$0x1]
      %vm650 = vcmp.eq.s32.totalorder %v649, 0
      %v651 = vld [vmem:[%s599] sm:$0xf]
      %v652 = vld [vmem:[%s599 + $0x4] sm:$0xf]
      %v653 = vld [vmem:[%s599 + $0x8] sm:$0xf]
      %v654 = vld [vmem:[%s599 + $0xc] sm:$0xf]
      %v655 = vld [vmem:[%s604] sm:$0xf]
      %v656 = vld [vmem:[%s604 + $0x4] sm:$0xf]
      %v657 = vld [vmem:[%s604 + $0x8] sm:$0xf]
      %v658 = vld [vmem:[%s604 + $0xc] sm:$0xf]
      %v659 = vld [vmem:[%s607] sm:$0x1]
      %v660 = vld [vmem:[%s610] sm:$0x1]
      %v661 = vld [vmem:[%s613] sm:$0x1]
      %v662 = vld [vmem:[%s618] sm:$0xf]
      %v663 = vld [vmem:[%s618 + $0x4] sm:$0xf]
      %v664 = vld [vmem:[%s618 + $0x8] sm:$0xf]
      %v665 = vld [vmem:[%s618 + $0xc] sm:$0xf]
      %v666 = vld [vmem:[%s621] sm:$0x1]
      %v667 = vld [vmem:[%s626] sm:$0xf]
      %v668 = vld [vmem:[%s626 + $0x4] sm:$0xf]
      %v669 = vld [vmem:[%s626 + $0x8] sm:$0xf]
      %v670 = vld [vmem:[%s626 + $0xc] sm:$0xf]
      %v671 = vld [vmem:[%s626 + $0x10] sm:$0xf]
      %v672 = vld [vmem:[%s626 + $0x14] sm:$0xf]
      %v673 = vld [vmem:[%s626 + $0x18] sm:$0xf]
      %v674 = vld [vmem:[%s626 + $0x1c] sm:$0xf]
      %v675 = vld [vmem:[%s629] sm:$0x1]
      %v676 = vld [vmem:[%s632] sm:$0x1]
      %v677 = vld [vmem:[%s635] sm:$0x1]
      %v678 = vpack.c.bf16 %v648, %v648
      %v683 = vunpack.c.l.b16 %v651
      %v684 = vunpack.c.l.b16 %v652
      %v685 = vunpack.c.l.b16 %v653
      %v686 = vunpack.c.l.b16 %v654
      %v687 = vpack.c.b16 %v684, %v683
      %v688 = vpack.c.b16 %v686, %v685
      %vm691 = vcmask 261120
      %v693 = vsel %vm691, %v678, 0
      %695 = vmatprep.subr.bf16.mxu0 0
      %696 = vmatpush1.bf16.msra.mxu0 0
      %697 = vmatprep.subr.bf16.mxu0 0
      %698 = vmatpush1.bf16.msra.mxu0 0
      %699 = vmatprep.subr.bf16.mxu0 0
      %700 = vmatpush1.bf16.msra.mxu0 0
      %701 = vmatprep.subr.bf16.mxu0 0
      %702 = vmatpush1.bf16.msra.mxu0 0
      %703 = vmatprep.subr.bf16.mxu0 0
      %704 = vmatpush1.bf16.msra.mxu0 0
      %705 = vmatprep.subr.bf16.mxu0 0
      %706 = vmatpush1.bf16.msra.mxu0 0
      %707 = vmatprep.subr.bf16.mxu0 0
      %708 = vmatpush1.bf16.msra.mxu0 %v688
      %709 = vmatprep.subr.bf16.mxu0 0
      %710 = vmatpush1.bf16.msra.mxu0 %v687
      %711 = vmatprep.subr.bf16.mxu0 0
      %712 = vmatpush2.bf16.msra.mxu0 0
      %713 = vmatprep.subr.bf16.mxu0 0
      %714 = vmatpush2.bf16.msra.mxu0 0
      %715 = vmatprep.subr.bf16.mxu0 0
      %716 = vmatpush2.bf16.msra.mxu0 0
      %717 = vmatprep.subr.bf16.mxu0 0
      %718 = vmatpush2.bf16.msra.mxu0 0
      %719 = vmatprep.subr.bf16.mxu0 0
      %720 = vmatpush2.bf16.msra.mxu0 0
      %721 = vmatprep.subr.bf16.mxu0 0
      %722 = vmatpush2.bf16.msra.mxu0 0
      %723 = vmatprep.subr.bf16.mxu0 0
      %724 = vmatpush2.bf16.msra.mxu0 0
      %725 = vmatprep.subr.bf16.mxu0 0
      %726 = vmatpush2.bf16.msra.mxu0 0
      %727 = vmatprep.mubr.bf16.mxu0 0
      %728 = vmatmul.mubr.bf16.gmra.mxu0 %v693
      %v729 = vpop.f32.mrf.mxu0
      %v730 = vadd.f32 0.0, %v729
      %v731 = vpop.f32.mrf.mxu0
      %v732 = vpop.f32.mrf.mxu0
      %v733 = vpop.f32.mrf.mxu0
      %734 = vdwg.mxu0
      %v735 = vpack.c.bf16 %v730, %v730
      %737 = vrot.lane.b32.xlu0 %v735, 96
      %v738 = vpop.permute.xlu0 %737
      %vm739 = vcmask 64512
      %v741 = vsel %vm739, %v735, 0
      %v744 = vsel %vm739, %v738, 0
      %746 = vmatprep.subr.bf16.mxu0 0
      %747 = vmatpush1.bf16.xpose.msra.mxu0 0
      %748 = vmatprep.subr.bf16.mxu0 0
      %749 = vmatpush1.bf16.xpose.msra.mxu0 0
      %750 = vmatprep.subr.bf16.mxu0 0
      %751 = vmatpush1.bf16.xpose.msra.mxu0 0
      %752 = vmatprep.subr.bf16.mxu0 0
      %753 = vmatpush1.bf16.xpose.msra.mxu0 0
      %754 = vmatprep.subr.bf16.mxu0 0
      %755 = vmatpush1.bf16.xpose.msra.mxu0 0
      %756 = vmatprep.subr.bf16.mxu0 0
      %757 = vmatpush1.bf16.xpose.msra.mxu0 0
      %758 = vmatprep.subr.bf16.mxu0 0
      %759 = vmatpush1.bf16.xpose.msra.mxu0 0
      %760 = vmatprep.subr.bf16.mxu0 0
      %761 = vmatpush1.bf16.xpose.msra.mxu0 %v744
      %762 = vmatprep.subr.bf16.mxu0 0
      %763 = vmatpush2.bf16.xpose.msra.mxu0 0
      %764 = vmatprep.subr.bf16.mxu0 0
      %765 = vmatpush2.bf16.xpose.msra.mxu0 0
      %766 = vmatprep.subr.bf16.mxu0 0
      %767 = vmatpush2.bf16.xpose.msra.mxu0 0
      %768 = vmatprep.subr.bf16.mxu0 0
      %769 = vmatpush2.bf16.xpose.msra.mxu0 0
      %770 = vmatprep.subr.bf16.mxu0 0
      %771 = vmatpush2.bf16.xpose.msra.mxu0 0
      %772 = vmatprep.subr.bf16.mxu0 0
      %773 = vmatpush2.bf16.xpose.msra.mxu0 0
      %774 = vmatprep.subr.bf16.mxu0 0
      %775 = vmatpush2.bf16.xpose.msra.mxu0 0
      %776 = vmatprep.subr.bf16.mxu0 0
      %777 = vmatpush2.bf16.xpose.msra.mxu0 0
      %778 = vmatprep.mubr.bf16.mxu0 0
      %779 = vmatmul.mubr.bf16.gmra.mxu0 %v741
      %v780 = vpop.f32.mrf.mxu0
      %v781 = vadd.f32 0.0, %v780
      %v782 = vpop.f32.mrf.mxu0
      %v783 = vpop.f32.mrf.mxu0
      %v784 = vpop.f32.mrf.mxu0
      %785 = vdwg.mxu0
      %v786 = vsel %vm650, 1, 0
      %v787 = vlaneseq
      %v788 = vshrl.u32 %v787, 7
      %v789 = vsub.s32 0, %v788
      %v790 = vrot.slane %v786, %v789
      %vm791 = vcmp.eq.s32.totalorder %v790, 1
      %v792 = vsel %vm791, -1e+20, %v781
      %v793 = vsel %vm739, %v792, -inf
      %794 = vmax.xlane.f32.xlu0 %v793
      %v795 = vpop.xlane.xlu0 %794
      %v796 = vsub.f32 %v792, %v795
      %v797 = vmul.f32 %v796, 1.442695
      %v798 = vpow.pop %v797
      %v799 = vsel %vm739, %v798, 0.0
      %800 = vadd.xlane.f32.xlu0 %v799
      %v801 = vpop.xlane.xlu0 %800
      %v802 = vrcp.pop %v801
      %v803 = vmul.f32 %v798, %v802
      %v804 = vpack.c.bf16 %v803, %v803
      %805 = vrot.lane.b32.xlu0 %v735, 64
      %v806 = vpop.permute.xlu0 %805
      %v808 = vsel %vm739, %v804, 0
      %vm810 = vcmask 1043456
      %v812 = vsel %vm810, %v806, 0
      %814 = vmatprep.subr.bf16.mxu0 0
      %815 = vmatpush1.bf16.msra.mxu0 0
      %816 = vmatprep.subr.bf16.mxu0 0
      %817 = vmatpush1.bf16.msra.mxu0 0
      %818 = vmatprep.subr.bf16.mxu0 0
      %819 = vmatpush1.bf16.msra.mxu0 0
      %820 = vmatprep.subr.bf16.mxu0 0
      %821 = vmatpush1.bf16.msra.mxu0 0
      %822 = vmatprep.subr.bf16.mxu0 0
      %823 = vmatpush1.bf16.msra.mxu0 0
      %824 = vmatprep.subr.bf16.mxu0 0
      %825 = vmatpush1.bf16.msra.mxu0 0
      %826 = vmatprep.subr.bf16.mxu0 0
      %827 = vmatpush1.bf16.msra.mxu0 0
      %828 = vmatprep.subr.bf16.mxu0 0
      %829 = vmatpush1.bf16.msra.mxu0 %v812
      %830 = vmatprep.subr.bf16.mxu0 0
      %831 = vmatpush2.bf16.msra.mxu0 0
      %832 = vmatprep.subr.bf16.mxu0 0
      %833 = vmatpush2.bf16.msra.mxu0 0
      %834 = vmatprep.subr.bf16.mxu0 0
      %835 = vmatpush2.bf16.msra.mxu0 0
      %836 = vmatprep.subr.bf16.mxu0 0
      %837 = vmatpush2.bf16.msra.mxu0 0
      %838 = vmatprep.subr.bf16.mxu0 0
      %839 = vmatpush2.bf16.msra.mxu0 0
      %840 = vmatprep.subr.bf16.mxu0 0
      %841 = vmatpush2.bf16.msra.mxu0 0
      %842 = vmatprep.subr.bf16.mxu0 0
      %843 = vmatpush2.bf16.msra.mxu0 0
      %844 = vmatprep.subr.bf16.mxu0 0
      %845 = vmatpush2.bf16.msra.mxu0 0
      %846 = vmatprep.mubr.bf16.mxu0 0
      %847 = vmatmul.mubr.bf16.gmra.mxu0 %v808
      %v848 = vpop.f32.mrf.mxu0
      %v849 = vadd.f32 0.0, %v848
      %v850 = vpop.f32.mrf.mxu0
      %v851 = vpop.f32.mrf.mxu0
      %v852 = vpop.f32.mrf.mxu0
      %853 = vdwg.mxu0
      %854 = vrot.lane.b32.xlu0 %v735, 120
      %v855 = vpop.permute.xlu0 %854
      %856 = vrot.lane.b32.xlu0 %v735, 88
      %v857 = vpop.permute.xlu0 %856
      %v859 = vsel %vm739, %v855, 0
      %v862 = vsel %vm739, %v857, 0
      %864 = vmatprep.subr.bf16.mxu0 0
      %865 = vmatpush1.bf16.xpose.msra.mxu0 0
      %866 = vmatprep.subr.bf16.mxu0 0
      %867 = vmatpush1.bf16.xpose.msra.mxu0 0
      %868 = vmatprep.subr.bf16.mxu0 0
      %869 = vmatpush1.bf16.xpose.msra.mxu0 0
      %870 = vmatprep.subr.bf16.mxu0 0
      %871 = vmatpush1.bf16.xpose.msra.mxu0 0
      %872 = vmatprep.subr.bf16.mxu0 0
      %873 = vmatpush1.bf16.xpose.msra.mxu0 0
      %874 = vmatprep.subr.bf16.mxu0 0
      %875 = vmatpush1.bf16.xpose.msra.mxu0 0
      %876 = vmatprep.subr.bf16.mxu0 0
      %877 = vmatpush1.bf16.xpose.msra.mxu0 0
      %878 = vmatprep.subr.bf16.mxu0 0
      %879 = vmatpush1.bf16.xpose.msra.mxu0 %v862
      %880 = vmatprep.subr.bf16.mxu0 0
      %881 = vmatpush2.bf16.xpose.msra.mxu0 0
      %882 = vmatprep.subr.bf16.mxu0 0
      %883 = vmatpush2.bf16.xpose.msra.mxu0 0
      %884 = vmatprep.subr.bf16.mxu0 0
      %885 = vmatpush2.bf16.xpose.msra.mxu0 0
      %886 = vmatprep.subr.bf16.mxu0 0
      %887 = vmatpush2.bf16.xpose.msra.mxu0 0
      %888 = vmatprep.subr.bf16.mxu0 0
      %889 = vmatpush2.bf16.xpose.msra.mxu0 0
      %890 = vmatprep.subr.bf16.mxu0 0
      %891 = vmatpush2.bf16.xpose.msra.mxu0 0
      %892 = vmatprep.subr.bf16.mxu0 0
      %893 = vmatpush2.bf16.xpose.msra.mxu0 0
      %894 = vmatprep.subr.bf16.mxu0 0
      %895 = vmatpush2.bf16.xpose.msra.mxu0 0
      %896 = vmatprep.mubr.bf16.mxu0 0
      %897 = vmatmul.mubr.bf16.gmra.mxu0 %v859
      %v898 = vpop.f32.mrf.mxu0
      %v899 = vadd.f32 0.0, %v898
      %v900 = vpop.f32.mrf.mxu0
      %v901 = vpop.f32.mrf.mxu0
      %v902 = vpop.f32.mrf.mxu0
      %903 = vdwg.mxu0
      %v904 = vsel %vm791, -1e+20, %v899
      %v905 = vsel %vm739, %v904, -inf
      %906 = vmax.xlane.f32.xlu0 %v905
      %v907 = vpop.xlane.xlu0 %906
      %v908 = vsub.f32 %v904, %v907
      %v909 = vmul.f32 %v908, 1.442695
      %v910 = vpow.pop %v909
      %v911 = vsel %vm739, %v910, 0.0
      %912 = vadd.xlane.f32.xlu0 %v911
      %v913 = vpop.xlane.xlu0 %912
      %v914 = vrcp.pop %v913
      %v915 = vmul.f32 %v910, %v914
      %v916 = vpack.c.bf16 %v915, %v915
      %917 = vrot.lane.b32.xlu0 %v735, 56
      %v918 = vpop.permute.xlu0 %917
      %v920 = vsel %vm739, %v916, 0
      %v923 = vsel %vm810, %v918, 0
      %925 = vmatprep.subr.bf16.mxu0 0
      %926 = vmatpush1.bf16.msra.mxu0 0
      %927 = vmatprep.subr.bf16.mxu0 0
      %928 = vmatpush1.bf16.msra.mxu0 0
      %929 = vmatprep.subr.bf16.mxu0 0
      %930 = vmatpush1.bf16.msra.mxu0 0
      %931 = vmatprep.subr.bf16.mxu0 0
      %932 = vmatpush1.bf16.msra.mxu0 0
      %933 = vmatprep.subr.bf16.mxu0 0
      %934 = vmatpush1.bf16.msra.mxu0 0
      %935 = vmatprep.subr.bf16.mxu0 0
      %936 = vmatpush1.bf16.msra.mxu0 0
      %937 = vmatprep.subr.bf16.mxu0 0
      %938 = vmatpush1.bf16.msra.mxu0 0
      %939 = vmatprep.subr.bf16.mxu0 0
      %940 = vmatpush1.bf16.msra.mxu0 %v923
      %941 = vmatprep.subr.bf16.mxu0 0
      %942 = vmatpush2.bf16.msra.mxu0 0
      %943 = vmatprep.subr.bf16.mxu0 0
      %944 = vmatpush2.bf16.msra.mxu0 0
      %945 = vmatprep.subr.bf16.mxu0 0
      %946 = vmatpush2.bf16.msra.mxu0 0
      %947 = vmatprep.subr.bf16.mxu0 0
      %948 = vmatpush2.bf16.msra.mxu0 0
      %949 = vmatprep.subr.bf16.mxu0 0
      %950 = vmatpush2.bf16.msra.mxu0 0
      %951 = vmatprep.subr.bf16.mxu0 0
      %952 = vmatpush2.bf16.msra.mxu0 0
      %953 = vmatprep.subr.bf16.mxu0 0
      %954 = vmatpush2.bf16.msra.mxu0 0
      %955 = vmatprep.subr.bf16.mxu0 0
      %956 = vmatpush2.bf16.msra.mxu0 0
      %957 = vmatprep.mubr.bf16.mxu0 0
      %958 = vmatmul.mubr.bf16.gmra.mxu0 %v920
      %v959 = vpop.f32.mrf.mxu0
      %v960 = vadd.f32 0.0, %v959
      %v961 = vpop.f32.mrf.mxu0
      %v962 = vpop.f32.mrf.mxu0
      %v963 = vpop.f32.mrf.mxu0
      %964 = vdwg.mxu0
      %965 = vrot.lane.b32.xlu0 %v735, 112
      %v966 = vpop.permute.xlu0 %965
      %967 = vrot.lane.b32.xlu0 %v735, 80
      %v968 = vpop.permute.xlu0 %967
      %v970 = vsel %vm739, %v966, 0
      %v973 = vsel %vm739, %v968, 0
      %975 = vmatprep.subr.bf16.mxu0 0
      %976 = vmatpush1.bf16.xpose.msra.mxu0 0
      %977 = vmatprep.subr.bf16.mxu0 0
      %978 = vmatpush1.bf16.xpose.msra.mxu0 0
      %979 = vmatprep.subr.bf16.mxu0 0
      %980 = vmatpush1.bf16.xpose.msra.mxu0 0
      %981 = vmatprep.subr.bf16.mxu0 0
      %982 = vmatpush1.bf16.xpose.msra.mxu0 0
      %983 = vmatprep.subr.bf16.mxu0 0
      %984 = vmatpush1.bf16.xpose.msra.mxu0 0
      %985 = vmatprep.subr.bf16.mxu0 0
      %986 = vmatpush1.bf16.xpose.msra.mxu0 0
      %987 = vmatprep.subr.bf16.mxu0 0
      %988 = vmatpush1.bf16.xpose.msra.mxu0 0
      %989 = vmatprep.subr.bf16.mxu0 0
      %990 = vmatpush1.bf16.xpose.msra.mxu0 %v973
      %991 = vmatprep.subr.bf16.mxu0 0
      %992 = vmatpush2.bf16.xpose.msra.mxu0 0
      %993 = vmatprep.subr.bf16.mxu0 0
      %994 = vmatpush2.bf16.xpose.msra.mxu0 0
      %995 = vmatprep.subr.bf16.mxu0 0
      %996 = vmatpush2.bf16.xpose.msra.mxu0 0
      %997 = vmatprep.subr.bf16.mxu0 0
      %998 = vmatpush2.bf16.xpose.msra.mxu0 0
      %999 = vmatprep.subr.bf16.mxu0 0
      %1000 = vmatpush2.bf16.xpose.msra.mxu0 0
      %1001 = vmatprep.subr.bf16.mxu0 0
      %1002 = vmatpush2.bf16.xpose.msra.mxu0 0
      %1003 = vmatprep.subr.bf16.mxu0 0
      %1004 = vmatpush2.bf16.xpose.msra.mxu0 0
      %1005 = vmatprep.subr.bf16.mxu0 0
      %1006 = vmatpush2.bf16.xpose.msra.mxu0 0
      %1007 = vmatprep.mubr.bf16.mxu0 0
      %1008 = vmatmul.mubr.bf16.gmra.mxu0 %v970
      %v1009 = vpop.f32.mrf.mxu0
      %v1010 = vadd.f32 0.0, %v1009
      %v1011 = vpop.f32.mrf.mxu0
      %v1012 = vpop.f32.mrf.mxu0
      %v1013 = vpop.f32.mrf.mxu0
      %1014 = vdwg.mxu0
      %v1015 = vsel %vm791, -1e+20, %v1010
      %v1016 = vsel %vm739, %v1015, -inf
      %1017 = vmax.xlane.f32.xlu0 %v1016
      %v1018 = vpop.xlane.xlu0 %1017
      %v1019 = vsub.f32 %v1015, %v1018
      %v1020 = vmul.f32 %v1019, 1.442695
      %v1021 = vpow.pop %v1020
      %v1022 = vsel %vm739, %v1021, 0.0
      %1023 = vadd.xlane.f32.xlu0 %v1022
      %v1024 = vpop.xlane.xlu0 %1023
      %v1025 = vrcp.pop %v1024
      %v1026 = vmul.f32 %v1021, %v1025
      %v1027 = vpack.c.bf16 %v1026, %v1026
      %1028 = vrot.lane.b32.xlu0 %v735, 48
      %v1029 = vpop.permute.xlu0 %1028
      %v1031 = vsel %vm739, %v1027, 0
      %v1034 = vsel %vm810, %v1029, 0
      %1036 = vmatprep.subr.bf16.mxu0 0
      %1037 = vmatpush1.bf16.msra.mxu0 0
      %1038 = vmatprep.subr.bf16.mxu0 0
      %1039 = vmatpush1.bf16.msra.mxu0 0
      %1040 = vmatprep.subr.bf16.mxu0 0
      %1041 = vmatpush1.bf16.msra.mxu0 0
      %1042 = vmatprep.subr.bf16.mxu0 0
      %1043 = vmatpush1.bf16.msra.mxu0 0
      %1044 = vmatprep.subr.bf16.mxu0 0
      %1045 = vmatpush1.bf16.msra.mxu0 0
      %1046 = vmatprep.subr.bf16.mxu0 0
      %1047 = vmatpush1.bf16.msra.mxu0 0
      %1048 = vmatprep.subr.bf16.mxu0 0
      %1049 = vmatpush1.bf16.msra.mxu0 0
      %1050 = vmatprep.subr.bf16.mxu0 0
      %1051 = vmatpush1.bf16.msra.mxu0 %v1034
      %1052 = vmatprep.subr.bf16.mxu0 0
      %1053 = vmatpush2.bf16.msra.mxu0 0
      %1054 = vmatprep.subr.bf16.mxu0 0
      %1055 = vmatpush2.bf16.msra.mxu0 0
      %1056 = vmatprep.subr.bf16.mxu0 0
      %1057 = vmatpush2.bf16.msra.mxu0 0
      %1058 = vmatprep.subr.bf16.mxu0 0
      %1059 = vmatpush2.bf16.msra.mxu0 0
      %1060 = vmatprep.subr.bf16.mxu0 0
      %1061 = vmatpush2.bf16.msra.mxu0 0
      %1062 = vmatprep.subr.bf16.mxu0 0
      %1063 = vmatpush2.bf16.msra.mxu0 0
      %1064 = vmatprep.subr.bf16.mxu0 0
      %1065 = vmatpush2.bf16.msra.mxu0 0
      %1066 = vmatprep.subr.bf16.mxu0 0
      %1067 = vmatpush2.bf16.msra.mxu0 0
      %1068 = vmatprep.mubr.bf16.mxu0 0
      %1069 = vmatmul.mubr.bf16.gmra.mxu0 %v1031
      %v1070 = vpop.f32.mrf.mxu0
      %v1071 = vadd.f32 0.0, %v1070
      %v1072 = vpop.f32.mrf.mxu0
      %v1073 = vpop.f32.mrf.mxu0
      %v1074 = vpop.f32.mrf.mxu0
      %1075 = vdwg.mxu0
      %1076 = vrot.lane.b32.xlu0 %v735, 104
      %v1077 = vpop.permute.xlu0 %1076
      %1078 = vrot.lane.b32.xlu0 %v735, 72
      %v1079 = vpop.permute.xlu0 %1078
      %v1081 = vsel %vm739, %v1077, 0
      %v1084 = vsel %vm739, %v1079, 0
      %1086 = vmatprep.subr.bf16.mxu0 0
      %1087 = vmatpush1.bf16.xpose.msra.mxu0 0
      %1088 = vmatprep.subr.bf16.mxu0 0
      %1089 = vmatpush1.bf16.xpose.msra.mxu0 0
      %1090 = vmatprep.subr.bf16.mxu0 0
      %1091 = vmatpush1.bf16.xpose.msra.mxu0 0
      %1092 = vmatprep.subr.bf16.mxu0 0
      %1093 = vmatpush1.bf16.xpose.msra.mxu0 0
      %1094 = vmatprep.subr.bf16.mxu0 0
      %1095 = vmatpush1.bf16.xpose.msra.mxu0 0
      %1096 = vmatprep.subr.bf16.mxu0 0
      %1097 = vmatpush1.bf16.xpose.msra.mxu0 0
      %1098 = vmatprep.subr.bf16.mxu0 0
      %1099 = vmatpush1.bf16.xpose.msra.mxu0 0
      %1100 = vmatprep.subr.bf16.mxu0 0
      %1101 = vmatpush1.bf16.xpose.msra.mxu0 %v1084
      %1102 = vmatprep.subr.bf16.mxu0 0
      %1103 = vmatpush2.bf16.xpose.msra.mxu0 0
      %1104 = vmatprep.subr.bf16.mxu0 0
      %1105 = vmatpush2.bf16.xpose.msra.mxu0 0
      %1106 = vmatprep.subr.bf16.mxu0 0
      %1107 = vmatpush2.bf16.xpose.msra.mxu0 0
      %1108 = vmatprep.subr.bf16.mxu0 0
      %1109 = vmatpush2.bf16.xpose.msra.mxu0 0
      %1110 = vmatprep.subr.bf16.mxu0 0
      %1111 = vmatpush2.bf16.xpose.msra.mxu0 0
      %1112 = vmatprep.subr.bf16.mxu0 0
      %1113 = vmatpush2.bf16.xpose.msra.mxu0 0
      %1114 = vmatprep.subr.bf16.mxu0 0
      %1115 = vmatpush2.bf16.xpose.msra.mxu0 0
      %1116 = vmatprep.subr.bf16.mxu0 0
      %1117 = vmatpush2.bf16.xpose.msra.mxu0 0
      %1118 = vmatprep.mubr.bf16.mxu0 0
      %1119 = vmatmul.mubr.bf16.gmra.mxu0 %v1081
      %v1120 = vpop.f32.mrf.mxu0
      %v1121 = vadd.f32 0.0, %v1120
      %v1122 = vpop.f32.mrf.mxu0
      %v1123 = vpop.f32.mrf.mxu0
      %v1124 = vpop.f32.mrf.mxu0
      %1125 = vdwg.mxu0
      %v1126 = vsel %vm791, -1e+20, %v1121
      %v1127 = vsel %vm739, %v1126, -inf
      %1128 = vmax.xlane.f32.xlu0 %v1127
      %v1129 = vpop.xlane.xlu0 %1128
      %v1130 = vsub.f32 %v1126, %v1129
      %v1131 = vmul.f32 %v1130, 1.442695
      %v1132 = vpow.pop %v1131
      %v1133 = vsel %vm739, %v1132, 0.0
      %1134 = vadd.xlane.f32.xlu0 %v1133
      %v1135 = vpop.xlane.xlu0 %1134
      %v1136 = vrcp.pop %v1135
      %v1137 = vmul.f32 %v1132, %v1136
      %v1138 = vpack.c.bf16 %v1137, %v1137
      %1139 = vrot.lane.b32.xlu0 %v735, 40
      %v1140 = vpop.permute.xlu0 %1139
      %v1142 = vsel %vm739, %v1138, 0
      %v1145 = vsel %vm810, %v1140, 0
      %1147 = vmatprep.subr.bf16.mxu0 0
      %1148 = vmatpush1.bf16.msra.mxu0 0
      %1149 = vmatprep.subr.bf16.mxu0 0
      %1150 = vmatpush1.bf16.msra.mxu0 0
      %1151 = vmatprep.subr.bf16.mxu0 0
      %1152 = vmatpush1.bf16.msra.mxu0 0
      %1153 = vmatprep.subr.bf16.mxu0 0
      %1154 = vmatpush1.bf16.msra.mxu0 0
      %1155 = vmatprep.subr.bf16.mxu0 0
      %1156 = vmatpush1.bf16.msra.mxu0 0
      %1157 = vmatprep.subr.bf16.mxu0 0
      %1158 = vmatpush1.bf16.msra.mxu0 0
      %1159 = vmatprep.subr.bf16.mxu0 0
      %1160 = vmatpush1.bf16.msra.mxu0 0
      %1161 = vmatprep.subr.bf16.mxu0 0
      %1162 = vmatpush1.bf16.msra.mxu0 %v1145
      %1163 = vmatprep.subr.bf16.mxu0 0
      %1164 = vmatpush2.bf16.msra.mxu0 0
      %1165 = vmatprep.subr.bf16.mxu0 0
      %1166 = vmatpush2.bf16.msra.mxu0 0
      %1167 = vmatprep.subr.bf16.mxu0 0
      %1168 = vmatpush2.bf16.msra.mxu0 0
      %1169 = vmatprep.subr.bf16.mxu0 0
      %1170 = vmatpush2.bf16.msra.mxu0 0
      %1171 = vmatprep.subr.bf16.mxu0 0
      %1172 = vmatpush2.bf16.msra.mxu0 0
      %1173 = vmatprep.subr.bf16.mxu0 0
      %1174 = vmatpush2.bf16.msra.mxu0 0
      %1175 = vmatprep.subr.bf16.mxu0 0
      %1176 = vmatpush2.bf16.msra.mxu0 0
      %1177 = vmatprep.subr.bf16.mxu0 0
      %1178 = vmatpush2.bf16.msra.mxu0 0
      %1179 = vmatprep.mubr.bf16.mxu0 0
      %1180 = vmatmul.mubr.bf16.gmra.mxu0 %v1142
      %v1181 = vpop.f32.mrf.mxu0
      %v1182 = vadd.f32 0.0, %v1181
      %v1183 = vpop.f32.mrf.mxu0
      %v1184 = vpop.f32.mrf.mxu0
      %v1185 = vpop.f32.mrf.mxu0
      %1186 = vdwg.mxu0
      %1188 = vrot.lane.b32.xlu0 %v960, 8
      %v1189 = vpop.permute.xlu0 %1188
      %1192 = vrot.lane.b32.xlu0 %v1071, 16
      %v1193 = vpop.permute.xlu0 %1192
      %1196 = vrot.lane.b32.xlu0 %v1182, 24
      %v1197 = vpop.permute.xlu0 %1196
      %v1199 = vsel %vm739, %v849, %v1189
      %vm1200 = vcmask 130048
      %v1201 = vsel %vm1200, %v1199, %v1193
      %vm1202 = vcmask 195584
      %v1203 = vsel %vm1202, %v1201, %v1197
      %v1204 = vpack.c.bf16 %v1203, %v1203
      %v1206 = vlaneseq
      %v1207 = vshrl.u32 %v1206, 7
      %v1208 = vsub.s32 0, %v1207
      %v1209 = vrot.slane %v659, %v1208
      %v1215 = vunpack.c.l.b16 %v655
      %v1216 = vunpack.c.l.b16 %v656
      %v1217 = vunpack.c.l.b16 %v657
      %v1218 = vunpack.c.l.b16 %v658
      %v1219 = vpack.c.b16 %v1216, %v1215
      %v1220 = vpack.c.b16 %v1218, %v1217
      %v1224 = vsel %vm691, %v1204, 0
      %1226 = vmatprep.subr.bf16.mxu0 0
      %1227 = vmatpush1.bf16.msra.mxu0 0
      %1228 = vmatprep.subr.bf16.mxu0 0
      %1229 = vmatpush1.bf16.msra.mxu0 0
      %1230 = vmatprep.subr.bf16.mxu0 0
      %1231 = vmatpush1.bf16.msra.mxu0 0
      %1232 = vmatprep.subr.bf16.mxu0 0
      %1233 = vmatpush1.bf16.msra.mxu0 0
      %1234 = vmatprep.subr.bf16.mxu0 0
      %1235 = vmatpush1.bf16.msra.mxu0 0
      %1236 = vmatprep.subr.bf16.mxu0 0
      %1237 = vmatpush1.bf16.msra.mxu0 0
      %1238 = vmatprep.subr.bf16.mxu0 0
      %1239 = vmatpush1.bf16.msra.mxu0 %v1220
      %1240 = vmatprep.subr.bf16.mxu0 0
      %1241 = vmatpush1.bf16.msra.mxu0 %v1219
      %1242 = vmatprep.subr.bf16.mxu0 0
      %1243 = vmatpush2.bf16.msra.mxu0 0
      %1244 = vmatprep.subr.bf16.mxu0 0
      %1245 = vmatpush2.bf16.msra.mxu0 0
      %1246 = vmatprep.subr.bf16.mxu0 0
      %1247 = vmatpush2.bf16.msra.mxu0 0
      %1248 = vmatprep.subr.bf16.mxu0 0
      %1249 = vmatpush2.bf16.msra.mxu0 0
      %1250 = vmatprep.subr.bf16.mxu0 0
      %1251 = vmatpush2.bf16.msra.mxu0 0
      %1252 = vmatprep.subr.bf16.mxu0 0
      %1253 = vmatpush2.bf16.msra.mxu0 0
      %1254 = vmatprep.subr.bf16.mxu0 0
      %1255 = vmatpush2.bf16.msra.mxu0 0
      %1256 = vmatprep.subr.bf16.mxu0 0
      %1257 = vmatpush2.bf16.msra.mxu0 0
      %1258 = vmatprep.mubr.bf16.mxu0 0
      %1259 = vmatmul.mubr.bf16.gmra.mxu0 %v1224
      %v1260 = vpop.f32.mrf.mxu0
      %v1261 = vadd.f32 %v1209, %v1260
      %v1262 = vpop.f32.mrf.mxu0
      %v1263 = vpop.f32.mrf.mxu0
      %v1264 = vpop.f32.mrf.mxu0
      %1265 = vdwg.mxu0
      %v1266 = vadd.f32 %v1261, %v648
      %v1267 = vsel %vm691, %v1266, 0.0
      %1268 = vadd.xlane.f32.xlu0 %v1267
      %v1269 = vpop.xlane.xlu0 %1268
      %v1270 = vrcp.pop 32.0
      %v1271 = vmul.f32 %v1269, %v1270
      %v1272 = vsub.f32 %v1266, %v1271
      %v1273 = vmul.f32 %v1272, %v1272
      %v1274 = vsel %vm691, %v1273, 0.0
      %1275 = vadd.xlane.f32.xlu0 %v1274
      %v1276 = vpop.xlane.xlu0 %1275
      %v1277 = vmul.f32 %v1276, %v1270
      %v1278 = vadd.f32 %v1277, 1e-05
      %v1279 = vrsqrt.pop %v1278
      %v1280 = vmul.f32 %v1272, %v1279
      %v1282 = vlaneseq
      %v1283 = vshrl.u32 %v1282, 7
      %v1284 = vsub.s32 0, %v1283
      %v1285 = vrot.slane %v660, %v1284
      %v1287 = vmul.f32 %v1280, %v1285
      %v1289 = vlaneseq
      %v1290 = vshrl.u32 %v1289, 7
      %v1291 = vsub.s32 0, %v1290
      %v1292 = vrot.slane %v661, %v1291
      %v1294 = vadd.f32 %v1287, %v1292
      %v1295 = vpack.c.bf16 %v1294, %v1294
      %v1297 = vlaneseq
      %v1298 = vshrl.u32 %v1297, 7
      %v1299 = vsub.s32 0, %v1298
      %v1300 = vrot.slane %v666, %v1299
      %v1306 = vunpack.c.l.b16 %v662
      %v1307 = vunpack.c.l.b16 %v663
      %v1308 = vunpack.c.l.b16 %v664
      %v1309 = vunpack.c.l.b16 %v665
      %v1310 = vpack.c.b16 %v1307, %v1306
      %v1311 = vpack.c.b16 %v1309, %v1308
      %v1315 = vsel %vm691, %v1295, 0
      %1317 = vmatprep.subr.bf16.mxu0 0
      %1318 = vmatpush1.bf16.msra.mxu0 0
      %1319 = vmatprep.subr.bf16.mxu0 0
      %1320 = vmatpush1.bf16.msra.mxu0 0
      %1321 = vmatprep.subr.bf16.mxu0 0
      %1322 = vmatpush1.bf16.msra.mxu0 0
      %1323 = vmatprep.subr.bf16.mxu0 0
      %1324 = vmatpush1.bf16.msra.mxu0 0
      %1325 = vmatprep.subr.bf16.mxu0 0
      %1326 = vmatpush1.bf16.msra.mxu0 0
      %1327 = vmatprep.subr.bf16.mxu0 0
      %1328 = vmatpush1.bf16.msra.mxu0 0
      %1329 = vmatprep.subr.bf16.mxu0 0
      %1330 = vmatpush1.bf16.msra.mxu0 %v1311
      %1331 = vmatprep.subr.bf16.mxu0 0
      %1332 = vmatpush1.bf16.msra.mxu0 %v1310
      %1333 = vmatprep.subr.bf16.mxu0 0
      %1334 = vmatpush2.bf16.msra.mxu0 0
      %1335 = vmatprep.subr.bf16.mxu0 0
      %1336 = vmatpush2.bf16.msra.mxu0 0
      %1337 = vmatprep.subr.bf16.mxu0 0
      %1338 = vmatpush2.bf16.msra.mxu0 0
      %1339 = vmatprep.subr.bf16.mxu0 0
      %1340 = vmatpush2.bf16.msra.mxu0 0
      %1341 = vmatprep.subr.bf16.mxu0 0
      %1342 = vmatpush2.bf16.msra.mxu0 0
      %1343 = vmatprep.subr.bf16.mxu0 0
      %1344 = vmatpush2.bf16.msra.mxu0 0
      %1345 = vmatprep.subr.bf16.mxu0 0
      %1346 = vmatpush2.bf16.msra.mxu0 0
      %1347 = vmatprep.subr.bf16.mxu0 0
      %1348 = vmatpush2.bf16.msra.mxu0 0
      %1349 = vmatprep.mubr.bf16.mxu0 0
      %1350 = vmatmul.mubr.bf16.gmra.mxu0 %v1315
      %v1351 = vpop.f32.mrf.mxu0
      %v1352 = vadd.f32 %v1300, %v1351
      %v1353 = vpop.f32.mrf.mxu0
      %v1354 = vpop.f32.mrf.mxu0
      %v1355 = vpop.f32.mrf.mxu0
      %1356 = vdwg.mxu0
      %v1357 = vmax.f32 %v1352, 0.0
      %v1358 = vpack.c.bf16 %v1357, %v1357
      %v1360 = vlaneseq
      %v1361 = vshrl.u32 %v1360, 7
      %v1362 = vsub.s32 0, %v1361
      %v1363 = vrot.slane %v675, %v1362
      %v1373 = vunpack.c.l.b16 %v667
      %v1374 = vunpack.c.l.b16 %v668
      %v1375 = vunpack.c.l.b16 %v669
      %v1376 = vunpack.c.l.b16 %v670
      %v1377 = vunpack.c.l.b16 %v671
      %v1378 = vunpack.c.l.b16 %v672
      %v1379 = vunpack.c.l.b16 %v673
      %v1380 = vunpack.c.l.b16 %v674
      %v1381 = vpack.c.b16 %v1374, %v1373
      %v1382 = vpack.c.b16 %v1376, %v1375
      %v1383 = vpack.c.b16 %v1378, %v1377
      %v1384 = vpack.c.b16 %v1380, %v1379
      %vm1389 = vcmask 523264
      %v1391 = vsel %vm1389, %v1358, 0
      %1393 = vmatprep.subr.bf16.mxu0 0
      %1394 = vmatpush1.bf16.msra.mxu0 0
      %1395 = vmatprep.subr.bf16.mxu0 0
      %1396 = vmatpush1.bf16.msra.mxu0 0
      %1397 = vmatprep.subr.bf16.mxu0 0
      %1398 = vmatpush1.bf16.msra.mxu0 0
      %1399 = vmatprep.subr.bf16.mxu0 0
      %1400 = vmatpush1.bf16.msra.mxu0 0
      %1401 = vmatprep.subr.bf16.mxu0 0
      %1402 = vmatpush1.bf16.msra.mxu0 %v1384
      %1403 = vmatprep.subr.bf16.mxu0 0
      %1404 = vmatpush1.bf16.msra.mxu0 %v1383
      %1405 = vmatprep.subr.bf16.mxu0 0
      %1406 = vmatpush1.bf16.msra.mxu0 %v1382
      %1407 = vmatprep.subr.bf16.mxu0 0
      %1408 = vmatpush1.bf16.msra.mxu0 %v1381
      %1409 = vmatprep.subr.bf16.mxu0 0
      %1410 = vmatpush2.bf16.msra.mxu0 0
      %1411 = vmatprep.subr.bf16.mxu0 0
      %1412 = vmatpush2.bf16.msra.mxu0 0
      %1413 = vmatprep.subr.bf16.mxu0 0
      %1414 = vmatpush2.bf16.msra.mxu0 0
      %1415 = vmatprep.subr.bf16.mxu0 0
      %1416 = vmatpush2.bf16.msra.mxu0 0
      %1417 = vmatprep.subr.bf16.mxu0 0
      %1418 = vmatpush2.bf16.msra.mxu0 0
      %1419 = vmatprep.subr.bf16.mxu0 0
      %1420 = vmatpush2.bf16.msra.mxu0 0
      %1421 = vmatprep.subr.bf16.mxu0 0
      %1422 = vmatpush2.bf16.msra.mxu0 0
      %1423 = vmatprep.subr.bf16.mxu0 0
      %1424 = vmatpush2.bf16.msra.mxu0 0
      %1425 = vmatprep.mubr.bf16.mxu0 0
      %1426 = vmatmul.mubr.bf16.gmra.mxu0 %v1391
      %v1427 = vpop.f32.mrf.mxu0
      %v1428 = vadd.f32 %v1363, %v1427
      %v1429 = vpop.f32.mrf.mxu0
      %v1430 = vpop.f32.mrf.mxu0
      %v1431 = vpop.f32.mrf.mxu0
      %1432 = vdwg.mxu0
      %v1433 = vadd.f32 %v1428, %v1294
      %v1434 = vsel %vm691, %v1433, 0.0
      %1435 = vadd.xlane.f32.xlu0 %v1434
      %v1436 = vpop.xlane.xlu0 %1435
      %v1437 = vmul.f32 %v1436, %v1270
      %v1438 = vsub.f32 %v1433, %v1437
      %v1439 = vmul.f32 %v1438, %v1438
      %v1440 = vsel %vm691, %v1439, 0.0
      %1441 = vadd.xlane.f32.xlu0 %v1440
      %v1442 = vpop.xlane.xlu0 %1441
      %v1443 = vmul.f32 %v1442, %v1270
      %v1444 = vadd.f32 %v1443, 1e-05
      %v1445 = vrsqrt.pop %v1444
      %v1446 = vmul.f32 %v1438, %v1445
      %v1448 = vlaneseq
      %v1449 = vshrl.u32 %v1448, 7
      %v1450 = vsub.s32 0, %v1449
      %v1451 = vrot.slane %v676, %v1450
      %v1453 = vmul.f32 %v1446, %v1451
      %v1455 = vlaneseq
      %v1456 = vshrl.u32 %v1455, 7
      %v1457 = vsub.s32 0, %v1456
      %v1458 = vrot.slane %v677, %v1457
      %v1460 = vadd.f32 %v1453, %v1458
      %1461 = vst.msk [vmem:[#allocation2] sm:$0xff] %vm691, %v1460
      %p1462 = scmp.eq.s32.totalorder %s29, 1
      // Predicated region
      $region77: #{_lambda_.3} parent=71 // pred_check
        %p1463 = pneg %p1462
      $region78: #{_lambda_.3} parent=71 // pred_check_branch
        %1465 = sbr.rel (%p1463) target = $region80
      $region79: #{_lambda_.3} parent=71 // pred_region
        %v1466 = vpack.c.bf16 %v1460, %v1460
        %vm1467 = vcmask 257024
        %1468 = vst.msk [vmem:[%s639] sm:$0xf] %vm1467, %v1466
      $region80: #{_lambda_.3} parent=71 // pred_fallthru
        _
      %p1469 = scmp.lt.s32.totalorder %s28, 1
      %s1470 = scalar_select %p1469, %s28, 1
      %s1471 = smul.addr %s1470, 4
      %s1472 = scalar_lea.vmem %s13, %s1471
      // Predicated region
      $region81: #{_lambda_.3} parent=71 // pred_check
        %p1473 = pneg %p392
      $region82: #{_lambda_.3} parent=71 // pred_check_branch
        %1475 = sbr.rel (%p1473) target = $region84
      $region83: #{_lambda_.3} parent=71 // pred_region
        _
      $region84: #{_lambda_.3} parent=71 // pred_fallthru
        _
    $region72: #{_lambda_.3} parent=5 // pred_fallthru
      _
    %p1476 = scmp.le.s32.totalorder 2, %s19
    // Predicated region
    $region85: #{_lambda_.3} parent=5 // pred_check
      %p1477 = pneg %p1476
    $region86: #{_lambda_.3} parent=5 // pred_check_branch
      %1479 = sbr.rel (%p1477) target = $region88
    $region87: #{_lambda_.3} parent=5 // pred_region
      %s1480 = ssub.s32 %s19, 2
      // Predicated region
      $region89: #{_lambda_.3} parent=87 // pred_check
        %p1481 = pneg %p398
      $region90: #{_lambda_.3} parent=87 // pred_check_branch
        %1483 = sbr.rel (%p1481) target = $region92
      $region91: #{_lambda_.3} parent=87 // pred_region
        %p1484 = scmp.lt.s32.totalorder %s30, 1
        %s1485 = scalar_select %p1484, %s30, 1
        %s1486 = smul.addr %s1485, 4
        %s1487 = scalar_lea.vmem %s13, %s1486
      $region92: #{_lambda_.3} parent=87 // pred_fallthru
        _
    $region88: #{_lambda_.3} parent=5 // pred_fallthru
      _
  $region6: #{_lambda_.3} parent=0 // loop_footer
    %s23 = sadd.s32 1, %s19
  $region7: #{_lambda_.3} parent=0 // loop_footer_branch
    %18 = sbr.rel target = $region3
  $region8: #{_lambda_.3} parent=0 // loop_exit
    _

// kernel: _lambda_.4
$region0: #{_lambda_.4}
  #allocation0 [shape = 'u32[]', space=smem, size = 0x4, offset = 0x4, fixed_abs, tag = 'smem constant byte address 0x4 - core index']
  #allocation1 [shape = 'u32[144,128]{1,0:T(1,128)}', space=vmem, size = 0x12000, scoped, tag = 'internal scratch']
  #allocation2 [shape = 'f32[8,32]{1,0:T(8,128)}', space=vmem, size = 0x1000, scoped, tag = 'scratch operand']
  %s0 = inlined_call_operand.vmem [shape: f32[2,8,32], index: 0, kind: input, shape index: {}]
  %s1 = inlined_call_operand.vmem [shape: bf16[2,8,32], index: 1, kind: input, shape index: {}]
  %s2 = inlined_call_operand.vmem [shape: s32[2,1,8], index: 2, kind: input, shape index: {}]
  %s3 = inlined_call_operand.vmem [shape: bf16[2,32,96], index: 3, kind: input, shape index: {}]
  %s4 = inlined_call_operand.vmem [shape: bf16[2,32,32], index: 4, kind: input, shape index: {}]
  %s5 = inlined_call_operand.vmem [shape: f32[2,1,32], index: 5, kind: input, shape index: {}]
  %s6 = inlined_call_operand.vmem [shape: f32[2,1,32], index: 6, kind: input, shape index: {}]
  %s7 = inlined_call_operand.vmem [shape: f32[2,1,32], index: 7, kind: input, shape index: {}]
  %s8 = inlined_call_operand.vmem [shape: bf16[2,32,96], index: 8, kind: input, shape index: {}]
  %s9 = inlined_call_operand.vmem [shape: bf16[2,32,32], index: 9, kind: input, shape index: {}]
  %s10 = inlined_call_operand.vmem [shape: f32[2,1,32], index: 10, kind: input, shape index: {}]
  %s11 = inlined_call_operand.vmem [shape: f32[2,1,32], index: 11, kind: input, shape index: {}]
  %s12 = inlined_call_operand.vmem [shape: f32[2,1,32], index: 12, kind: input, shape index: {}]
  %s13 = inlined_call_operand.vmem [shape: bf16[2,32,64], index: 13, kind: input, shape index: {}]
  %s14 = inlined_call_operand.vmem [shape: f32[2,1,64], index: 14, kind: input, shape index: {}]
  %s15 = inlined_call_operand.vmem [shape: bf16[2,64,32], index: 15, kind: input, shape index: {}]
  %s16 = inlined_call_operand.vmem [shape: f32[2,1,32], index: 16, kind: input, shape index: {}]
  %s17 = inlined_call_operand.vmem [shape: f32[2,1,32], index: 17, kind: input, shape index: {}]
  %s18 = inlined_call_operand.vmem [shape: f32[2,1,32], index: 18, kind: input, shape index: {}]
  %s19 = inlined_call_operand.vmem [shape: bf16[2,8,32], index: 19, kind: output, shape index: {}]
  %s20 = sld [smem:[#allocation0]]
  $region117: #{_lambda_.4} parent=0
    _
  %s22 = ssub.s32 1, %s20
  %s23 = scalar_select 0, %s22, %s20
  loop: start=0, step=1, limit=6
  $region2: #{_lambda_.4} parent=0 // loop_pre_header
    _
  $region3: #{_lambda_.4} parent=0 // loop_header
    %s25 = sphi 0, %s29
    %p26 = scmp.ge.s32.totalorder %s25, 6
    %s32 = sphi 0, %s44
    %s33 = sphi 0, %s40
    %s34 = sphi 0, %s32
    %s35 = sphi 0, %s33
    %s36 = sphi 0, %s34
    %s37 = sphi 0, %s35
    %s47 = sphi 0, %s49
    %s50 = sphi 0, %s47
    %s51 = sphi 0, %s50
    %s67 = sphi 0, %s51
    %s73 = sphi 0, %s75
    %s76 = sphi 0, %s73
    %s77 = sphi 0, %s76
    %s93 = sphi 0, %s77
    %s99 = sphi 0, %s101
    %s102 = sphi 0, %s99
    %s103 = sphi 0, %s102
    %s119 = sphi 0, %s103
    %s125 = sphi 0, %s127
    %s128 = sphi 0, %s125
    %s129 = sphi 0, %s128
    %s145 = sphi 0, %s129
    %s151 = sphi 0, %s153
    %s154 = sphi 0, %s151
    %s155 = sphi 0, %s154
    %s171 = sphi 0, %s155
    %s177 = sphi 0, %s179
    %s180 = sphi 0, %s177
    %s181 = sphi 0, %s180
    %s197 = sphi 0, %s181
    %s203 = sphi 0, %s205
    %s206 = sphi 0, %s203
    %s207 = sphi 0, %s206
    %s223 = sphi 0, %s207
    %s229 = sphi 0, %s231
    %s232 = sphi 0, %s229
    %s233 = sphi 0, %s232
    %s249 = sphi 0, %s233
    %s255 = sphi 0, %s257
    %s258 = sphi 0, %s255
    %s259 = sphi 0, %s258
    %s275 = sphi 0, %s259
    %s281 = sphi 0, %s283
    %s284 = sphi 0, %s281
    %s285 = sphi 0, %s284
    %s301 = sphi 0, %s285
    %s307 = sphi 0, %s309
    %s310 = sphi 0, %s307
    %s311 = sphi 0, %s310
    %s327 = sphi 0, %s311
    %s333 = sphi 0, %s335
    %s336 = sphi 0, %s333
    %s337 = sphi 0, %s336
    %s353 = sphi 0, %s337
    %s359 = sphi 0, %s361
    %s362 = sphi 0, %s359
    %s363 = sphi 0, %s362
    %s379 = sphi 0, %s363
    %s385 = sphi 0, %s387
    %s388 = sphi 0, %s385
    %s389 = sphi 0, %s388
    %s405 = sphi 0, %s389
    %s411 = sphi 0, %s413
    %s414 = sphi 0, %s411
    %s415 = sphi 0, %s414
    %s431 = sphi 0, %s415
    %s437 = sphi 0, %s439
    %s440 = sphi 0, %s437
    %s441 = sphi 0, %s440
    %s457 = sphi 0, %s441
    %s463 = sphi 0, %s465
    %s466 = sphi 0, %s463
    %s467 = sphi 0, %s466
    %s483 = sphi 0, %s467
    %s489 = sphi 0, %s491
    %s492 = sphi 0, %s489
    %s493 = sphi 0, %s492
    %s509 = sphi 0, %s493
    %s515 = sphi 0, %s517
    %s518 = sphi 0, %s515
    %s519 = sphi 0, %s518
    %s535 = sphi 0, %s519
    %s541 = sphi 0, %s543
    %s544 = sphi 0, %s541
    %s545 = sphi 0, %s544
    %s561 = sphi 0, %s545
  $region4: #{_lambda_.4} parent=0 // loop_header_branch
    %28 = sbr.rel (%p26) target = $region8
  $region5: #{_lambda_.4} parent=0 // loop_body
    %s30 = ssub.s32 %s25, 1
    %s31 = ssub.s32 %s25, 2
    %s38 = sadd.s32 1, %s33
    %p39 = scmp.ge.s32.totalorder %s38, 2
    %s40 = scalar_select %p39, 0, %s38
    %s41 = sadd.s32 1, %s32
    %s42 = scalar_select %p39, %s41, %s32
    %p43 = scmp.ge.s32.totalorder %s42, 2
    %s44 = scalar_select %p43, 0, %s42
    %s45 = ssub.s32 %s32, %s44
    %p46 = scmp.eq.s32.totalorder %s45, 0
    %s48 = sadd.s32 %s47, 1
    %s49 = scalar_select %p46, %s47, %s48
    %p52 = pneg %p46
    %p53 = scmp.eq.s32.totalorder %s25, 3
    %p54 = por %p52, %p53
    %p55 = scmp.ne.s32.totalorder %s47, %s50
    %p56 = scmp.eq.s32.totalorder %s25, 0
    %p57 = por %p55, %p56
    %p58 = scmp.ne.s32.totalorder %s47, %s50
    %p59 = scmp.eq.s32.totalorder %s30, 3
    %p60 = por %p58, %p59
    %p61 = scmp.ne.s32.totalorder %s50, %s51
    %p62 = scmp.eq.s32.totalorder %s30, 0
    %p63 = por %p61, %p62
    %p64 = scmp.ne.s32.totalorder %s50, %s51
    %p65 = scmp.eq.s32.totalorder %s31, 3
    %p66 = por %p64, %p65
    %p68 = scmp.ne.s32.totalorder %s51, %s67
    %p69 = scmp.eq.s32.totalorder %s31, 0
    %p70 = por %p68, %p69
    %s71 = ssub.s32 %s32, %s44
    %p72 = scmp.eq.s32.totalorder %s71, 0
    %s74 = sadd.s32 %s73, 1
    %s75 = scalar_select %p72, %s73, %s74
    %p78 = pneg %p72
    %p79 = scmp.eq.s32.totalorder %s25, 3
    %p80 = por %p78, %p79
    %p81 = scmp.ne.s32.totalorder %s73, %s76
    %p82 = scmp.eq.s32.totalorder %s25, 0
    %p83 = por %p81, %p82
    %p84 = scmp.ne.s32.totalorder %s73, %s76
    %p85 = scmp.eq.s32.totalorder %s30, 3
    %p86 = por %p84, %p85
    %p87 = scmp.ne.s32.totalorder %s76, %s77
    %p88 = scmp.eq.s32.totalorder %s30, 0
    %p89 = por %p87, %p88
    %p90 = scmp.ne.s32.totalorder %s76, %s77
    %p91 = scmp.eq.s32.totalorder %s31, 3
    %p92 = por %p90, %p91
    %p94 = scmp.ne.s32.totalorder %s77, %s93
    %p95 = scmp.eq.s32.totalorder %s31, 0
    %p96 = por %p94, %p95
    %s97 = ssub.s32 %s32, %s44
    %p98 = scmp.eq.s32.totalorder %s97, 0
    %s100 = sadd.s32 %s99, 1
    %s101 = scalar_select %p98, %s99, %s100
    %p104 = pneg %p98
    %p105 = scmp.eq.s32.totalorder %s25, 3
    %p106 = por %p104, %p105
    %p107 = scmp.ne.s32.totalorder %s99, %s102
    %p108 = scmp.eq.s32.totalorder %s25, 0
    %p109 = por %p107, %p108
    %p110 = scmp.ne.s32.totalorder %s99, %s102
    %p111 = scmp.eq.s32.totalorder %s30, 3
    %p112 = por %p110, %p111
    %p113 = scmp.ne.s32.totalorder %s102, %s103
    %p114 = scmp.eq.s32.totalorder %s30, 0
    %p115 = por %p113, %p114
    %p116 = scmp.ne.s32.totalorder %s102, %s103
    %p117 = scmp.eq.s32.totalorder %s31, 3
    %p118 = por %p116, %p117
    %p120 = scmp.ne.s32.totalorder %s103, %s119
    %p121 = scmp.eq.s32.totalorder %s31, 0
    %p122 = por %p120, %p121
    %s123 = ssub.s32 %s33, %s40
    %p124 = scmp.eq.s32.totalorder %s123, 0
    %s126 = sadd.s32 %s125, 1
    %s127 = scalar_select %p124, %s125, %s126
    %p130 = pneg %p124
    %p131 = scmp.eq.s32.totalorder %s25, 3
    %p132 = por %p130, %p131
    %p133 = scmp.ne.s32.totalorder %s125, %s128
    %p134 = scmp.eq.s32.totalorder %s25, 0
    %p135 = por %p133, %p134
    %p136 = scmp.ne.s32.totalorder %s125, %s128
    %p137 = scmp.eq.s32.totalorder %s30, 3
    %p138 = por %p136, %p137
    %p139 = scmp.ne.s32.totalorder %s128, %s129
    %p140 = scmp.eq.s32.totalorder %s30, 0
    %p141 = por %p139, %p140
    %p142 = scmp.ne.s32.totalorder %s128, %s129
    %p143 = scmp.eq.s32.totalorder %s31, 3
    %p144 = por %p142, %p143
    %p146 = scmp.ne.s32.totalorder %s129, %s145
    %p147 = scmp.eq.s32.totalorder %s31, 0
    %p148 = por %p146, %p147
    %s149 = ssub.s32 %s33, %s40
    %p150 = scmp.eq.s32.totalorder %s149, 0
    %s152 = sadd.s32 %s151, 1
    %s153 = scalar_select %p150, %s151, %s152
    %p156 = pneg %p150
    %p157 = scmp.eq.s32.totalorder %s25, 3
    %p158 = por %p156, %p157
    %p159 = scmp.ne.s32.totalorder %s151, %s154
    %p160 = scmp.eq.s32.totalorder %s25, 0
    %p161 = por %p159, %p160
    %p162 = scmp.ne.s32.totalorder %s151, %s154
    %p163 = scmp.eq.s32.totalorder %s30, 3
    %p164 = por %p162, %p163
    %p165 = scmp.ne.s32.totalorder %s154, %s155
    %p166 = scmp.eq.s32.totalorder %s30, 0
    %p167 = por %p165, %p166
    %p168 = scmp.ne.s32.totalorder %s154, %s155
    %p169 = scmp.eq.s32.totalorder %s31, 3
    %p170 = por %p168, %p169
    %p172 = scmp.ne.s32.totalorder %s155, %s171
    %p173 = scmp.eq.s32.totalorder %s31, 0
    %p174 = por %p172, %p173
    %s175 = ssub.s32 %s33, %s40
    %p176 = scmp.eq.s32.totalorder %s175, 0
    %s178 = sadd.s32 %s177, 1
    %s179 = scalar_select %p176, %s177, %s178
    %p182 = pneg %p176
    %p183 = scmp.eq.s32.totalorder %s25, 3
    %p184 = por %p182, %p183
    %p185 = scmp.ne.s32.totalorder %s177, %s180
    %p186 = scmp.eq.s32.totalorder %s25, 0
    %p187 = por %p185, %p186
    %p188 = scmp.ne.s32.totalorder %s177, %s180
    %p189 = scmp.eq.s32.totalorder %s30, 3
    %p190 = por %p188, %p189
    %p191 = scmp.ne.s32.totalorder %s180, %s181
    %p192 = scmp.eq.s32.totalorder %s30, 0
    %p193 = por %p191, %p192
    %p194 = scmp.ne.s32.totalorder %s180, %s181
    %p195 = scmp.eq.s32.totalorder %s31, 3
    %p196 = por %p194, %p195
    %p198 = scmp.ne.s32.totalorder %s181, %s197
    %p199 = scmp.eq.s32.totalorder %s31, 0
    %p200 = por %p198, %p199
    %s201 = ssub.s32 %s33, %s40
    %p202 = scmp.eq.s32.totalorder %s201, 0
    %s204 = sadd.s32 %s203, 1
    %s205 = scalar_select %p202, %s203, %s204
    %p208 = pneg %p202
    %p209 = scmp.eq.s32.totalorder %s25, 3
    %p210 = por %p208, %p209
    %p211 = scmp.ne.s32.totalorder %s203, %s206
    %p212 = scmp.eq.s32.totalorder %s25, 0
    %p213 = por %p211, %p212
    %p214 = scmp.ne.s32.totalorder %s203, %s206
    %p215 = scmp.eq.s32.totalorder %s30, 3
    %p216 = por %p214, %p215
    %p217 = scmp.ne.s32.totalorder %s206, %s207
    %p218 = scmp.eq.s32.totalorder %s30, 0
    %p219 = por %p217, %p218
    %p220 = scmp.ne.s32.totalorder %s206, %s207
    %p221 = scmp.eq.s32.totalorder %s31, 3
    %p222 = por %p220, %p221
    %p224 = scmp.ne.s32.totalorder %s207, %s223
    %p225 = scmp.eq.s32.totalorder %s31, 0
    %p226 = por %p224, %p225
    %s227 = ssub.s32 %s33, %s40
    %p228 = scmp.eq.s32.totalorder %s227, 0
    %s230 = sadd.s32 %s229, 1
    %s231 = scalar_select %p228, %s229, %s230
    %p234 = pneg %p228
    %p235 = scmp.eq.s32.totalorder %s25, 3
    %p236 = por %p234, %p235
    %p237 = scmp.ne.s32.totalorder %s229, %s232
    %p238 = scmp.eq.s32.totalorder %s25, 0
    %p239 = por %p237, %p238
    %p240 = scmp.ne.s32.totalorder %s229, %s232
    %p241 = scmp.eq.s32.totalorder %s30, 3
    %p242 = por %p240, %p241
    %p243 = scmp.ne.s32.totalorder %s232, %s233
    %p244 = scmp.eq.s32.totalorder %s30, 0
    %p245 = por %p243, %p244
    %p246 = scmp.ne.s32.totalorder %s232, %s233
    %p247 = scmp.eq.s32.totalorder %s31, 3
    %p248 = por %p246, %p247
    %p250 = scmp.ne.s32.totalorder %s233, %s249
    %p251 = scmp.eq.s32.totalorder %s31, 0
    %p252 = por %p250, %p251
    %s253 = ssub.s32 %s33, %s40
    %p254 = scmp.eq.s32.totalorder %s253, 0
    %s256 = sadd.s32 %s255, 1
    %s257 = scalar_select %p254, %s255, %s256
    %p260 = pneg %p254
    %p261 = scmp.eq.s32.totalorder %s25, 3
    %p262 = por %p260, %p261
    %p263 = scmp.ne.s32.totalorder %s255, %s258
    %p264 = scmp.eq.s32.totalorder %s25, 0
    %p265 = por %p263, %p264
    %p266 = scmp.ne.s32.totalorder %s255, %s258
    %p267 = scmp.eq.s32.totalorder %s30, 3
    %p268 = por %p266, %p267
    %p269 = scmp.ne.s32.totalorder %s258, %s259
    %p270 = scmp.eq.s32.totalorder %s30, 0
    %p271 = por %p269, %p270
    %p272 = scmp.ne.s32.totalorder %s258, %s259
    %p273 = scmp.eq.s32.totalorder %s31, 3
    %p274 = por %p272, %p273
    %p276 = scmp.ne.s32.totalorder %s259, %s275
    %p277 = scmp.eq.s32.totalorder %s31, 0
    %p278 = por %p276, %p277
    %s279 = ssub.s32 %s33, %s40
    %p280 = scmp.eq.s32.totalorder %s279, 0
    %s282 = sadd.s32 %s281, 1
    %s283 = scalar_select %p280, %s281, %s282
    %p286 = pneg %p280
    %p287 = scmp.eq.s32.totalorder %s25, 3
    %p288 = por %p286, %p287
    %p289 = scmp.ne.s32.totalorder %s281, %s284
    %p290 = scmp.eq.s32.totalorder %s25, 0
    %p291 = por %p289, %p290
    %p292 = scmp.ne.s32.totalorder %s281, %s284
    %p293 = scmp.eq.s32.totalorder %s30, 3
    %p294 = por %p292, %p293
    %p295 = scmp.ne.s32.totalorder %s284, %s285
    %p296 = scmp.eq.s32.totalorder %s30, 0
    %p297 = por %p295, %p296
    %p298 = scmp.ne.s32.totalorder %s284, %s285
    %p299 = scmp.eq.s32.totalorder %s31, 3
    %p300 = por %p298, %p299
    %p302 = scmp.ne.s32.totalorder %s285, %s301
    %p303 = scmp.eq.s32.totalorder %s31, 0
    %p304 = por %p302, %p303
    %s305 = ssub.s32 %s33, %s40
    %p306 = scmp.eq.s32.totalorder %s305, 0
    %s308 = sadd.s32 %s307, 1
    %s309 = scalar_select %p306, %s307, %s308
    %p312 = pneg %p306
    %p313 = scmp.eq.s32.totalorder %s25, 3
    %p314 = por %p312, %p313
    %p315 = scmp.ne.s32.totalorder %s307, %s310
    %p316 = scmp.eq.s32.totalorder %s25, 0
    %p317 = por %p315, %p316
    %p318 = scmp.ne.s32.totalorder %s307, %s310
    %p319 = scmp.eq.s32.totalorder %s30, 3
    %p320 = por %p318, %p319
    %p321 = scmp.ne.s32.totalorder %s310, %s311
    %p322 = scmp.eq.s32.totalorder %s30, 0
    %p323 = por %p321, %p322
    %p324 = scmp.ne.s32.totalorder %s310, %s311
    %p325 = scmp.eq.s32.totalorder %s31, 3
    %p326 = por %p324, %p325
    %p328 = scmp.ne.s32.totalorder %s311, %s327
    %p329 = scmp.eq.s32.totalorder %s31, 0
    %p330 = por %p328, %p329
    %s331 = ssub.s32 %s33, %s40
    %p332 = scmp.eq.s32.totalorder %s331, 0
    %s334 = sadd.s32 %s333, 1
    %s335 = scalar_select %p332, %s333, %s334
    %p338 = pneg %p332
    %p339 = scmp.eq.s32.totalorder %s25, 3
    %p340 = por %p338, %p339
    %p341 = scmp.ne.s32.totalorder %s333, %s336
    %p342 = scmp.eq.s32.totalorder %s25, 0
    %p343 = por %p341, %p342
    %p344 = scmp.ne.s32.totalorder %s333, %s336
    %p345 = scmp.eq.s32.totalorder %s30, 3
    %p346 = por %p344, %p345
    %p347 = scmp.ne.s32.totalorder %s336, %s337
    %p348 = scmp.eq.s32.totalorder %s30, 0
    %p349 = por %p347, %p348
    %p350 = scmp.ne.s32.totalorder %s336, %s337
    %p351 = scmp.eq.s32.totalorder %s31, 3
    %p352 = por %p350, %p351
    %p354 = scmp.ne.s32.totalorder %s337, %s353
    %p355 = scmp.eq.s32.totalorder %s31, 0
    %p356 = por %p354, %p355
    %s357 = ssub.s32 %s33, %s40
    %p358 = scmp.eq.s32.totalorder %s357, 0
    %s360 = sadd.s32 %s359, 1
    %s361 = scalar_select %p358, %s359, %s360
    %p364 = pneg %p358
    %p365 = scmp.eq.s32.totalorder %s25, 3
    %p366 = por %p364, %p365
    %p367 = scmp.ne.s32.totalorder %s359, %s362
    %p368 = scmp.eq.s32.totalorder %s25, 0
    %p369 = por %p367, %p368
    %p370 = scmp.ne.s32.totalorder %s359, %s362
    %p371 = scmp.eq.s32.totalorder %s30, 3
    %p372 = por %p370, %p371
    %p373 = scmp.ne.s32.totalorder %s362, %s363
    %p374 = scmp.eq.s32.totalorder %s30, 0
    %p375 = por %p373, %p374
    %p376 = scmp.ne.s32.totalorder %s362, %s363
    %p377 = scmp.eq.s32.totalorder %s31, 3
    %p378 = por %p376, %p377
    %p380 = scmp.ne.s32.totalorder %s363, %s379
    %p381 = scmp.eq.s32.totalorder %s31, 0
    %p382 = por %p380, %p381
    %s383 = ssub.s32 %s33, %s40
    %p384 = scmp.eq.s32.totalorder %s383, 0
    %s386 = sadd.s32 %s385, 1
    %s387 = scalar_select %p384, %s385, %s386
    %p390 = pneg %p384
    %p391 = scmp.eq.s32.totalorder %s25, 3
    %p392 = por %p390, %p391
    %p393 = scmp.ne.s32.totalorder %s385, %s388
    %p394 = scmp.eq.s32.totalorder %s25, 0
    %p395 = por %p393, %p394
    %p396 = scmp.ne.s32.totalorder %s385, %s388
    %p397 = scmp.eq.s32.totalorder %s30, 3
    %p398 = por %p396, %p397
    %p399 = scmp.ne.s32.totalorder %s388, %s389
    %p400 = scmp.eq.s32.totalorder %s30, 0
    %p401 = por %p399, %p400
    %p402 = scmp.ne.s32.totalorder %s388, %s389
    %p403 = scmp.eq.s32.totalorder %s31, 3
    %p404 = por %p402, %p403
    %p406 = scmp.ne.s32.totalorder %s389, %s405
    %p407 = scmp.eq.s32.totalorder %s31, 0
    %p408 = por %p406, %p407
    %s409 = ssub.s32 %s33, %s40
    %p410 = scmp.eq.s32.totalorder %s409, 0
    %s412 = sadd.s32 %s411, 1
    %s413 = scalar_select %p410, %s411, %s412
    %p416 = pneg %p410
    %p417 = scmp.eq.s32.totalorder %s25, 3
    %p418 = por %p416, %p417
    %p419 = scmp.ne.s32.totalorder %s411, %s414
    %p420 = scmp.eq.s32.totalorder %s25, 0
    %p421 = por %p419, %p420
    %p422 = scmp.ne.s32.totalorder %s411, %s414
    %p423 = scmp.eq.s32.totalorder %s30, 3
    %p424 = por %p422, %p423
    %p425 = scmp.ne.s32.totalorder %s414, %s415
    %p426 = scmp.eq.s32.totalorder %s30, 0
    %p427 = por %p425, %p426
    %p428 = scmp.ne.s32.totalorder %s414, %s415
    %p429 = scmp.eq.s32.totalorder %s31, 3
    %p430 = por %p428, %p429
    %p432 = scmp.ne.s32.totalorder %s415, %s431
    %p433 = scmp.eq.s32.totalorder %s31, 0
    %p434 = por %p432, %p433
    %s435 = ssub.s32 %s33, %s40
    %p436 = scmp.eq.s32.totalorder %s435, 0
    %s438 = sadd.s32 %s437, 1
    %s439 = scalar_select %p436, %s437, %s438
    %p442 = pneg %p436
    %p443 = scmp.eq.s32.totalorder %s25, 3
    %p444 = por %p442, %p443
    %p445 = scmp.ne.s32.totalorder %s437, %s440
    %p446 = scmp.eq.s32.totalorder %s25, 0
    %p447 = por %p445, %p446
    %p448 = scmp.ne.s32.totalorder %s437, %s440
    %p449 = scmp.eq.s32.totalorder %s30, 3
    %p450 = por %p448, %p449
    %p451 = scmp.ne.s32.totalorder %s440, %s441
    %p452 = scmp.eq.s32.totalorder %s30, 0
    %p453 = por %p451, %p452
    %p454 = scmp.ne.s32.totalorder %s440, %s441
    %p455 = scmp.eq.s32.totalorder %s31, 3
    %p456 = por %p454, %p455
    %p458 = scmp.ne.s32.totalorder %s441, %s457
    %p459 = scmp.eq.s32.totalorder %s31, 0
    %p460 = por %p458, %p459
    %s461 = ssub.s32 %s33, %s40
    %p462 = scmp.eq.s32.totalorder %s461, 0
    %s464 = sadd.s32 %s463, 1
    %s465 = scalar_select %p462, %s463, %s464
    %p468 = pneg %p462
    %p469 = scmp.eq.s32.totalorder %s25, 3
    %p470 = por %p468, %p469
    %p471 = scmp.ne.s32.totalorder %s463, %s466
    %p472 = scmp.eq.s32.totalorder %s25, 0
    %p473 = por %p471, %p472
    %p474 = scmp.ne.s32.totalorder %s463, %s466
    %p475 = scmp.eq.s32.totalorder %s30, 3
    %p476 = por %p474, %p475
    %p477 = scmp.ne.s32.totalorder %s466, %s467
    %p478 = scmp.eq.s32.totalorder %s30, 0
    %p479 = por %p477, %p478
    %p480 = scmp.ne.s32.totalorder %s466, %s467
    %p481 = scmp.eq.s32.totalorder %s31, 3
    %p482 = por %p480, %p481
    %p484 = scmp.ne.s32.totalorder %s467, %s483
    %p485 = scmp.eq.s32.totalorder %s31, 0
    %p486 = por %p484, %p485
    %s487 = ssub.s32 %s33, %s40
    %p488 = scmp.eq.s32.totalorder %s487, 0
    %s490 = sadd.s32 %s489, 1
    %s491 = scalar_select %p488, %s489, %s490
    %p494 = pneg %p488
    %p495 = scmp.eq.s32.totalorder %s25, 3
    %p496 = por %p494, %p495
    %p497 = scmp.ne.s32.totalorder %s489, %s492
    %p498 = scmp.eq.s32.totalorder %s25, 0
    %p499 = por %p497, %p498
    %p500 = scmp.ne.s32.totalorder %s489, %s492
    %p501 = scmp.eq.s32.totalorder %s30, 3
    %p502 = por %p500, %p501
    %p503 = scmp.ne.s32.totalorder %s492, %s493
    %p504 = scmp.eq.s32.totalorder %s30, 0
    %p505 = por %p503, %p504
    %p506 = scmp.ne.s32.totalorder %s492, %s493
    %p507 = scmp.eq.s32.totalorder %s31, 3
    %p508 = por %p506, %p507
    %p510 = scmp.ne.s32.totalorder %s493, %s509
    %p511 = scmp.eq.s32.totalorder %s31, 0
    %p512 = por %p510, %p511
    %s513 = ssub.s32 %s33, %s40
    %p514 = scmp.eq.s32.totalorder %s513, 0
    %s516 = sadd.s32 %s515, 1
    %s517 = scalar_select %p514, %s515, %s516
    %p520 = pneg %p514
    %p521 = scmp.eq.s32.totalorder %s25, 3
    %p522 = por %p520, %p521
    %p523 = scmp.ne.s32.totalorder %s515, %s518
    %p524 = scmp.eq.s32.totalorder %s25, 0
    %p525 = por %p523, %p524
    %p526 = scmp.ne.s32.totalorder %s515, %s518
    %p527 = scmp.eq.s32.totalorder %s30, 3
    %p528 = por %p526, %p527
    %p529 = scmp.ne.s32.totalorder %s518, %s519
    %p530 = scmp.eq.s32.totalorder %s30, 0
    %p531 = por %p529, %p530
    %p532 = scmp.ne.s32.totalorder %s518, %s519
    %p533 = scmp.eq.s32.totalorder %s31, 3
    %p534 = por %p532, %p533
    %p536 = scmp.ne.s32.totalorder %s519, %s535
    %p537 = scmp.eq.s32.totalorder %s31, 0
    %p538 = por %p536, %p537
    %s539 = ssub.s32 %s32, %s44
    %p540 = scmp.eq.s32.totalorder %s539, 0
    %s542 = sadd.s32 %s541, 1
    %s543 = scalar_select %p540, %s541, %s542
    %p546 = pneg %p540
    %p547 = scmp.eq.s32.totalorder %s25, 3
    %p548 = por %p546, %p547
    %p549 = scmp.ne.s32.totalorder %s541, %s544
    %p550 = scmp.eq.s32.totalorder %s25, 0
    %p551 = por %p549, %p550
    %p552 = scmp.ne.s32.totalorder %s541, %s544
    %p553 = scmp.eq.s32.totalorder %s30, 3
    %p554 = por %p552, %p553
    %p555 = scmp.ne.s32.totalorder %s544, %s545
    %p556 = scmp.eq.s32.totalorder %s30, 0
    %p557 = por %p555, %p556
    %p558 = scmp.ne.s32.totalorder %s544, %s545
    %p559 = scmp.eq.s32.totalorder %s31, 3
    %p560 = por %p558, %p559
    %p562 = scmp.ne.s32.totalorder %s545, %s561
    %p563 = scmp.eq.s32.totalorder %s31, 0
    %p564 = por %p562, %p563
    %p565 = scmp.le.s32.totalorder 1, %s25
    %p566 = scmp.lt.s32.totalorder %s25, 5
    %p567 = pnand %p565, %p566
    %p568 = pneg %p567
    // Predicated region
    $region9: #{_lambda_.4} parent=5 // pred_check
      _
    $region10: #{_lambda_.4} parent=5 // pred_check_branch
      %570 = sbr.rel (%p567) target = $region12
    $region11: #{_lambda_.4} parent=5 // pred_region
      %s571 = ssub.s32 %s25, 1
    $region12: #{_lambda_.4} parent=5 // pred_fallthru
      _
    %p572 = scmp.lt.s32.totalorder %s25, 4
    // Predicated region
    $region13: #{_lambda_.4} parent=5 // pred_check
      %p573 = pneg %p572
    $region14: #{_lambda_.4} parent=5 // pred_check_branch
      %575 = sbr.rel (%p573) target = $region16
    $region15: #{_lambda_.4} parent=5 // pred_region
      // Predicated region
      $region17: #{_lambda_.4} parent=15 // pred_check
        %p576 = pneg %p57
      $region18: #{_lambda_.4} parent=15 // pred_check_branch
        %578 = sbr.rel (%p576) target = $region20
      $region19: #{_lambda_.4} parent=15 // pred_region
        %p579 = scmp.lt.s32.totalorder %s32, 1
        %s580 = scalar_select %p579, %s32, 1
        %s581 = smul.addr %s580, 8
        %s582 = scalar_lea.vmem %s0, %s581
      $region20: #{_lambda_.4} parent=15 // pred_fallthru
        _
      // Predicated region
      $region21: #{_lambda_.4} parent=15 // pred_check
        %p583 = pneg %p83
      $region22: #{_lambda_.4} parent=15 // pred_check_branch
        %585 = sbr.rel (%p583) target = $region24
      $region23: #{_lambda_.4} parent=15 // pred_region
        %p586 = scmp.lt.s32.totalorder %s32, 1
        %s587 = scalar_select %p586, %s32, 1
        %s588 = smul.addr %s587, 4
        %s589 = scalar_lea.vmem %s1, %s588
      $region24: #{_lambda_.4} parent=15 // pred_fallthru
        _
      // Predicated region
      $region25: #{_lambda_.4} parent=15 // pred_check
        %p590 = pneg %p109
      $region26: #{_lambda_.4} parent=15 // pred_check_branch
        %592 = sbr.rel (%p590) target = $region28
      $region27: #{_lambda_.4} parent=15 // pred_region
        %p593 = scmp.lt.s32.totalorder %s32, 1
        %s594 = scalar_select %p593, %s32, 1
        %s595 = scalar_lea.vmem %s2, %s594
      $region28: #{_lambda_.4} parent=15 // pred_fallthru
        _
      // Predicated region
      $region29: #{_lambda_.4} parent=15 // pred_check
        %p596 = pneg %p135
      $region30: #{_lambda_.4} parent=15 // pred_check_branch
        %598 = sbr.rel (%p596) target = $region32
      $region31: #{_lambda_.4} parent=15 // pred_region
        %p599 = scmp.lt.s32.totalorder %s33, 1
        %s600 = scalar_select %p599, %s33, 1
        %s601 = smul.addr %s600, 4
        %s602 = smul.addr %s601, 4
        %s603 = scalar_lea.vmem %s3, %s602
      $region32: #{_lambda_.4} parent=15 // pred_fallthru
        _
      // Predicated region
      $region33: #{_lambda_.4} parent=15 // pred_check
        %p604 = pneg %p161
      $region34: #{_lambda_.4} parent=15 // pred_check_branch
        %606 = sbr.rel (%p604) target = $region36
      $region35: #{_lambda_.4} parent=15 // pred_region
        %p607 = scmp.lt.s32.totalorder %s33, 1
        %s608 = scalar_select %p607, %s33, 1
        %s609 = smul.addr %s608, 4
        %s610 = smul.addr %s609, 4
        %s611 = scalar_lea.vmem %s4, %s610
      $region36: #{_lambda_.4} parent=15 // pred_fallthru
        _
      // Predicated region
      $region37: #{_lambda_.4} parent=15 // pred_check
        %p612 = pneg %p187
      $region38: #{_lambda_.4} parent=15 // pred_check_branch
        %614 = sbr.rel (%p612) target = $region40
      $region39: #{_lambda_.4} parent=15 // pred_region
        %p615 = scmp.lt.s32.totalorder %s33, 1
        %s616 = scalar_select %p615, %s33, 1
        %s617 = scalar_lea.vmem %s5, %s616
      $region40: #{_lambda_.4} parent=15 // pred_fallthru
        _
      // Predicated region
      $region41: #{_lambda_.4} parent=15 // pred_check
        %p618 = pneg %p213
      $region42: #{_lambda_.4} parent=15 // pred_check_branch
        %620 = sbr.rel (%p618) target = $region44
      $region43: #{_lambda_.4} parent=15 // pred_region
        %p621 = scmp.lt.s32.totalorder %s33, 1
        %s622 = scalar_select %p621, %s33, 1
        %s623 = scalar_lea.vmem %s6, %s622
      $region44: #{_lambda_.4} parent=15 // pred_fallthru
        _
      // Predicated region
      $region45: #{_lambda_.4} parent=15 // pred_check
        %p624 = pneg %p239
      $region46: #{_lambda_.4} parent=15 // pred_check_branch
        %626 = sbr.rel (%p624) target = $region48
      $region47: #{_lambda_.4} parent=15 // pred_region
        %p627 = scmp.lt.s32.totalorder %s33, 1
        %s628 = scalar_select %p627, %s33, 1
        %s629 = scalar_lea.vmem %s7, %s628
      $region48: #{_lambda_.4} parent=15 // pred_fallthru
        _
      // Predicated region
      $region49: #{_lambda_.4} parent=15 // pred_check
        %p630 = pneg %p265
      $region50: #{_lambda_.4} parent=15 // pred_check_branch
        %632 = sbr.rel (%p630) target = $region52
      $region51: #{_lambda_.4} parent=15 // pred_region
        %p633 = scmp.lt.s32.totalorder %s33, 1
        %s634 = scalar_select %p633, %s33, 1
        %s635 = smul.addr %s634, 4
        %s636 = smul.addr %s635, 4
        %s637 = scalar_lea.vmem %s8, %s636
      $region52: #{_lambda_.4} parent=15 // pred_fallthru
        _
      // Predicated region
      $region53: #{_lambda_.4} parent=15 // pred_check
        %p638 = pneg %p291
      $region54: #{_lambda_.4} parent=15 // pred_check_branch
        %640 = sbr.rel (%p638) target = $region56
      $region55: #{_lambda_.4} parent=15 // pred_region
        %p641 = scmp.lt.s32.totalorder %s33, 1
        %s642 = scalar_select %p641, %s33, 1
        %s643 = smul.addr %s642, 4
        %s644 = smul.addr %s643, 4
        %s645 = scalar_lea.vmem %s9, %s644
      $region56: #{_lambda_.4} parent=15 // pred_fallthru
        _
      // Predicated region
      $region57: #{_lambda_.4} parent=15 // pred_check
        %p646 = pneg %p317
      $region58: #{_lambda_.4} parent=15 // pred_check_branch
        %648 = sbr.rel (%p646) target = $region60
      $region59: #{_lambda_.4} parent=15 // pred_region
        %p649 = scmp.lt.s32.totalorder %s33, 1
        %s650 = scalar_select %p649, %s33, 1
        %s651 = scalar_lea.vmem %s10, %s650
      $region60: #{_lambda_.4} parent=15 // pred_fallthru
        _
      // Predicated region
      $region61: #{_lambda_.4} parent=15 // pred_check
        %p652 = pneg %p343
      $region62: #{_lambda_.4} parent=15 // pred_check_branch
        %654 = sbr.rel (%p652) target = $region64
      $region63: #{_lambda_.4} parent=15 // pred_region
        %p655 = scmp.lt.s32.totalorder %s33, 1
        %s656 = scalar_select %p655, %s33, 1
        %s657 = scalar_lea.vmem %s11, %s656
      $region64: #{_lambda_.4} parent=15 // pred_fallthru
        _
      // Predicated region
      $region65: #{_lambda_.4} parent=15 // pred_check
        %p658 = pneg %p369
      $region66: #{_lambda_.4} parent=15 // pred_check_branch
        %660 = sbr.rel (%p658) target = $region68
      $region67: #{_lambda_.4} parent=15 // pred_region
        %p661 = scmp.lt.s32.totalorder %s33, 1
        %s662 = scalar_select %p661, %s33, 1
        %s663 = scalar_lea.vmem %s12, %s662
      $region68: #{_lambda_.4} parent=15 // pred_fallthru
        _
      // Predicated region
      $region69: #{_lambda_.4} parent=15 // pred_check
        %p664 = pneg %p395
      $region70: #{_lambda_.4} parent=15 // pred_check_branch
        %666 = sbr.rel (%p664) target = $region72
      $region71: #{_lambda_.4} parent=15 // pred_region
        %p667 = scmp.lt.s32.totalorder %s33, 1
        %s668 = scalar_select %p667, %s33, 1
        %s669 = smul.addr %s668, 4
        %s670 = smul.addr %s669, 4
        %s671 = scalar_lea.vmem %s13, %s670
      $region72: #{_lambda_.4} parent=15 // pred_fallthru
        _
      // Predicated region
      $region73: #{_lambda_.4} parent=15 // pred_check
        %p672 = pneg %p421
      $region74: #{_lambda_.4} parent=15 // pred_check_branch
        %674 = sbr.rel (%p672) target = $region76
      $region75: #{_lambda_.4} parent=15 // pred_region
        %p675 = scmp.lt.s32.totalorder %s33, 1
        %s676 = scalar_select %p675, %s33, 1
        %s677 = scalar_lea.vmem %s14, %s676
      $region76: #{_lambda_.4} parent=15 // pred_fallthru
        _
      // Predicated region
      $region77: #{_lambda_.4} parent=15 // pred_check
        %p678 = pneg %p447
      $region78: #{_lambda_.4} parent=15 // pred_check_branch
        %680 = sbr.rel (%p678) target = $region80
      $region79: #{_lambda_.4} parent=15 // pred_region
        %p681 = scmp.lt.s32.totalorder %s33, 1
        %s682 = scalar_select %p681, %s33, 1
        %s683 = smul.addr %s682, 8
        %s684 = smul.addr %s683, 4
        %s685 = scalar_lea.vmem %s15, %s684
      $region80: #{_lambda_.4} parent=15 // pred_fallthru
        _
      // Predicated region
      $region81: #{_lambda_.4} parent=15 // pred_check
        %p686 = pneg %p473
      $region82: #{_lambda_.4} parent=15 // pred_check_branch
        %688 = sbr.rel (%p686) target = $region84
      $region83: #{_lambda_.4} parent=15 // pred_region
        %p689 = scmp.lt.s32.totalorder %s33, 1
        %s690 = scalar_select %p689, %s33, 1
        %s691 = scalar_lea.vmem %s16, %s690
      $region84: #{_lambda_.4} parent=15 // pred_fallthru
        _
      // Predicated region
      $region85: #{_lambda_.4} parent=15 // pred_check
        %p692 = pneg %p499
      $region86: #{_lambda_.4} parent=15 // pred_check_branch
        %694 = sbr.rel (%p692) target = $region88
      $region87: #{_lambda_.4} parent=15 // pred_region
        %p695 = scmp.lt.s32.totalorder %s33, 1
        %s696 = scalar_select %p695, %s33, 1
        %s697 = scalar_lea.vmem %s17, %s696
      $region88: #{_lambda_.4} parent=15 // pred_fallthru
        _
      // Predicated region
      $region89: #{_lambda_.4} parent=15 // pred_check
        %p698 = pneg %p525
      $region90: #{_lambda_.4} parent=15 // pred_check_branch
        %700 = sbr.rel (%p698) target = $region92
      $region91: #{_lambda_.4} parent=15 // pred_region
        %p701 = scmp.lt.s32.totalorder %s33, 1
        %s702 = scalar_select %p701, %s33, 1
        %s703 = scalar_lea.vmem %s18, %s702
      $region92: #{_lambda_.4} parent=15 // pred_fallthru
        _
    $region16: #{_lambda_.4} parent=5 // pred_fallthru
      _
    %p704 = scmp.le.s32.totalorder 1, %s25
    %p705 = scmp.lt.s32.totalorder %s25, 5
    %p706 = pnand %p704, %p705
    %p707 = pneg %p706
    // Predicated region
    $region93: #{_lambda_.4} parent=5 // pred_check
      _
    $region94: #{_lambda_.4} parent=5 // pred_check_branch
      %709 = sbr.rel (%p706) target = $region96
    $region95: #{_lambda_.4} parent=5 // pred_region
      %s710 = ssub.s32 %s25, 1
      %p711 = scmp.lt.s32.totalorder %s34, 1
      %s712 = scalar_select %p711, %s34, 1
      %s713 = smul.addr %s712, 8
      %s714 = scalar_lea.vmem %s0, %s713
      %p715 = pneg %p63
      %p716 = pneg %p60
      %p717 = scmp.lt.s32.totalorder %s34, 1
      %s718 = scalar_select %p717, %s34, 1
      %s719 = smul.addr %s718, 4
      %s720 = scalar_lea.vmem %s1, %s719
      %p721 = pneg %p89
      %p722 = pneg %p86
      %p723 = scmp.lt.s32.totalorder %s34, 1
      %s724 = scalar_select %p723, %s34, 1
      %s725 = scalar_lea.vmem %s2, %s724
      %p726 = pneg %p115
      %p727 = pneg %p112
      %p728 = scmp.lt.s32.totalorder %s35, 1
      %s729 = scalar_select %p728, %s35, 1
      %s730 = smul.addr %s729, 4
      %s731 = smul.addr %s730, 4
      %s732 = scalar_lea.vmem %s3, %s731
      %p733 = pneg %p141
      %p734 = pneg %p138
      %p735 = scmp.lt.s32.totalorder %s35, 1
      %s736 = scalar_select %p735, %s35, 1
      %s737 = smul.addr %s736, 4
      %s738 = smul.addr %s737, 4
      %s739 = scalar_lea.vmem %s4, %s738
      %p740 = pneg %p167
      %p741 = pneg %p164
      %p742 = scmp.lt.s32.totalorder %s35, 1
      %s743 = scalar_select %p742, %s35, 1
      %s744 = scalar_lea.vmem %s5, %s743
      %p745 = pneg %p193
      %p746 = pneg %p190
      %p747 = scmp.lt.s32.totalorder %s35, 1
      %s748 = scalar_select %p747, %s35, 1
      %s749 = scalar_lea.vmem %s6, %s748
      %p750 = pneg %p219
      %p751 = pneg %p216
      %p752 = scmp.lt.s32.totalorder %s35, 1
      %s753 = scalar_select %p752, %s35, 1
      %s754 = scalar_lea.vmem %s7, %s753
      %p755 = pneg %p245
      %p756 = pneg %p242
      %p757 = scmp.lt.s32.totalorder %s35, 1
      %s758 = scalar_select %p757, %s35, 1
      %s759 = smul.addr %s758, 4
      %s760 = smul.addr %s759, 4
      %s761 = scalar_lea.vmem %s8, %s760
      %p762 = pneg %p271
      %p763 = pneg %p268
      %p764 = scmp.lt.s32.totalorder %s35, 1
      %s765 = scalar_select %p764, %s35, 1
      %s766 = smul.addr %s765, 4
      %s767 = smul.addr %s766, 4
      %s768 = scalar_lea.vmem %s9, %s767
      %p769 = pneg %p297
      %p770 = pneg %p294
      %p771 = scmp.lt.s32.totalorder %s35, 1
      %s772 = scalar_select %p771, %s35, 1
      %s773 = scalar_lea.vmem %s10, %s772
      %p774 = pneg %p323
      %p775 = pneg %p320
      %p776 = scmp.lt.s32.totalorder %s35, 1
      %s777 = scalar_select %p776, %s35, 1
      %s778 = scalar_lea.vmem %s11, %s777
      %p779 = pneg %p349
      %p780 = pneg %p346
      %p781 = scmp.lt.s32.totalorder %s35, 1
      %s782 = scalar_select %p781, %s35, 1
      %s783 = scalar_lea.vmem %s12, %s782
      %p784 = pneg %p375
      %p785 = pneg %p372
      %p786 = scmp.lt.s32.totalorder %s35, 1
      %s787 = scalar_select %p786, %s35, 1
      %s788 = smul.addr %s787, 4
      %s789 = smul.addr %s788, 4
      %s790 = scalar_lea.vmem %s13, %s789
      %p791 = pneg %p401
      %p792 = pneg %p398
      %p793 = scmp.lt.s32.totalorder %s35, 1
      %s794 = scalar_select %p793, %s35, 1
      %s795 = scalar_lea.vmem %s14, %s794
      %p796 = pneg %p427
      %p797 = pneg %p424
      %p798 = scmp.lt.s32.totalorder %s35, 1
      %s799 = scalar_select %p798, %s35, 1
      %s800 = smul.addr %s799, 8
      %s801 = smul.addr %s800, 4
      %s802 = scalar_lea.vmem %s15, %s801
      %p803 = pneg %p453
      %p804 = pneg %p450
      %p805 = scmp.lt.s32.totalorder %s35, 1
      %s806 = scalar_select %p805, %s35, 1
      %s807 = scalar_lea.vmem %s16, %s806
      %p808 = pneg %p479
      %p809 = pneg %p476
      %p810 = scmp.lt.s32.totalorder %s35, 1
      %s811 = scalar_select %p810, %s35, 1
      %s812 = scalar_lea.vmem %s17, %s811
      %p813 = pneg %p505
      %p814 = pneg %p502
      %p815 = scmp.lt.s32.totalorder %s35, 1
      %s816 = scalar_select %p815, %s35, 1
      %s817 = scalar_lea.vmem %s18, %s816
      %p818 = pneg %p531
      %p819 = pneg %p528
      %p820 = pneg %p557
      %p821 = pneg %p554
      %p822 = scmp.lt.s32.totalorder %s34, 1
      %s823 = scalar_select %p822, %s34, 1
      %s824 = smul.addr %s823, 4
      %s825 = scalar_lea.vmem %s19, %s824
      %p826 = scmp.lt.s32.totalorder %s34, 1
      %s827 = scalar_select %p826, %s34, 1
      %s828 = smul.addr %s827, 8
      %s829 = scalar_lea.vmem %s0, %s828
      %p830 = scmp.lt.s32.totalorder %s34, 1
      %s831 = scalar_select %p830, %s34, 1
      %s832 = smul.addr %s831, 4
      %s833 = scalar_lea.vmem %s1, %s832
      %p834 = scmp.lt.s32.totalorder %s34, 1
      %s835 = scalar_select %p834, %s34, 1
      %s836 = scalar_lea.vmem %s2, %s835
      %p837 = scmp.lt.s32.totalorder %s35, 1
      %s838 = scalar_select %p837, %s35, 1
      %s839 = smul.addr %s838, 4
      %s840 = smul.addr %s839, 4
      %s841 = scalar_lea.vmem %s3, %s840
      %p842 = scmp.lt.s32.totalorder %s35, 1
      %s843 = scalar_select %p842, %s35, 1
      %s844 = smul.addr %s843, 4
      %s845 = smul.addr %s844, 4
      %s846 = scalar_lea.vmem %s4, %s845
      %p847 = scmp.lt.s32.totalorder %s35, 1
      %s848 = scalar_select %p847, %s35, 1
      %s849 = scalar_lea.vmem %s5, %s848
      %p850 = scmp.lt.s32.totalorder %s35, 1
      %s851 = scalar_select %p850, %s35, 1
      %s852 = scalar_lea.vmem %s6, %s851
      %p853 = scmp.lt.s32.totalorder %s35, 1
      %s854 = scalar_select %p853, %s35, 1
      %s855 = scalar_lea.vmem %s7, %s854
      %p856 = scmp.lt.s32.totalorder %s35, 1
      %s857 = scalar_select %p856, %s35, 1
      %s858 = smul.addr %s857, 4
      %s859 = smul.addr %s858, 4
      %s860 = scalar_lea.vmem %s8, %s859
      %p861 = scmp.lt.s32.totalorder %s35, 1
      %s862 = scalar_select %p861, %s35, 1
      %s863 = smul.addr %s862, 4
      %s864 = smul.addr %s863, 4
      %s865 = scalar_lea.vmem %s9, %s864
      %p866 = scmp.lt.s32.totalorder %s35, 1
      %s867 = scalar_select %p866, %s35, 1
      %s868 = scalar_lea.vmem %s10, %s867
      %p869 = scmp.lt.s32.totalorder %s35, 1
      %s870 = scalar_select %p869, %s35, 1
      %s871 = scalar_lea.vmem %s11, %s870
      %p872 = scmp.lt.s32.totalorder %s35, 1
      %s873 = scalar_select %p872, %s35, 1
      %s874 = scalar_lea.vmem %s12, %s873
      %p875 = scmp.lt.s32.totalorder %s35, 1
      %s876 = scalar_select %p875, %s35, 1
      %s877 = smul.addr %s876, 4
      %s878 = smul.addr %s877, 4
      %s879 = scalar_lea.vmem %s13, %s878
      %p880 = scmp.lt.s32.totalorder %s35, 1
      %s881 = scalar_select %p880, %s35, 1
      %s882 = scalar_lea.vmem %s14, %s881
      %p883 = scmp.lt.s32.totalorder %s35, 1
      %s884 = scalar_select %p883, %s35, 1
      %s885 = smul.addr %s884, 8
      %s886 = smul.addr %s885, 4
      %s887 = scalar_lea.vmem %s15, %s886
      %p888 = scmp.lt.s32.totalorder %s35, 1
      %s889 = scalar_select %p888, %s35, 1
      %s890 = scalar_lea.vmem %s16, %s889
      %p891 = scmp.lt.s32.totalorder %s35, 1
      %s892 = scalar_select %p891, %s35, 1
      %s893 = scalar_lea.vmem %s17, %s892
      %p894 = scmp.lt.s32.totalorder %s35, 1
      %s895 = scalar_select %p894, %s35, 1
      %s896 = scalar_lea.vmem %s18, %s895
      %p897 = scmp.lt.s32.totalorder %s34, 1
      %s898 = scalar_select %p897, %s34, 1
      %s899 = smul.addr %s898, 4
      %s900 = scalar_lea.vmem %s19, %s899
      %p902 = scmp.eq.s32.totalorder %s35, 0
      // Predicated region
      $region97: #{_lambda_.4} parent=95 // pred_check
        %p903 = pneg %p902
      $region98: #{_lambda_.4} parent=95 // pred_check_branch
        %905 = sbr.rel (%p903) target = $region100
      $region99: #{_lambda_.4} parent=95 // pred_region
        %v906 = vld [vmem:[%s829] sm:$0xff]
        %vm907 = vcmask 261120
        %908 = vst.msk [vmem:[#allocation2] sm:$0xff] %vm907, %v906
      $region100: #{_lambda_.4} parent=95 // pred_fallthru
        _
      %v909 = vld [vmem:[#allocation2] sm:$0xff]
      %v910 = vld [vmem:[%s833] sm:$0xf]
      %v911 = vld [vmem:[%s836] sm:$0x1]
      %vm912 = vcmp.eq.s32.totalorder %v911, 0
      %v913 = vld [vmem:[%s841] sm:$0xf]
      %v914 = vld [vmem:[%s841 + $0x4] sm:$0xf]
      %v915 = vld [vmem:[%s841 + $0x8] sm:$0xf]
      %v916 = vld [vmem:[%s841 + $0xc] sm:$0xf]
      %v917 = vld [vmem:[%s846] sm:$0xf]
      %v918 = vld [vmem:[%s846 + $0x4] sm:$0xf]
      %v919 = vld [vmem:[%s846 + $0x8] sm:$0xf]
      %v920 = vld [vmem:[%s846 + $0xc] sm:$0xf]
      %v921 = vld [vmem:[%s849] sm:$0x1]
      %v922 = vpack.c.bf16 %v909, %v909
      %v927 = vunpack.c.l.b16 %v913
      %v928 = vunpack.c.l.b16 %v914
      %v929 = vunpack.c.l.b16 %v915
      %v930 = vunpack.c.l.b16 %v916
      %v931 = vpack.c.b16 %v928, %v927
      %v932 = vpack.c.b16 %v930, %v929
      %vm935 = vcmask 261120
      %v937 = vsel %vm935, %v922, 0
      %939 = vmatprep.subr.bf16.mxu0 0
      %940 = vmatpush1.bf16.msra.mxu0 0
      %941 = vmatprep.subr.bf16.mxu0 0
      %942 = vmatpush1.bf16.msra.mxu0 0
      %943 = vmatprep.subr.bf16.mxu0 0
      %944 = vmatpush1.bf16.msra.mxu0 0
      %945 = vmatprep.subr.bf16.mxu0 0
      %946 = vmatpush1.bf16.msra.mxu0 0
      %947 = vmatprep.subr.bf16.mxu0 0
      %948 = vmatpush1.bf16.msra.mxu0 0
      %949 = vmatprep.subr.bf16.mxu0 0
      %950 = vmatpush1.bf16.msra.mxu0 0
      %951 = vmatprep.subr.bf16.mxu0 0
      %952 = vmatpush1.bf16.msra.mxu0 %v932
      %953 = vmatprep.subr.bf16.mxu0 0
      %954 = vmatpush1.bf16.msra.mxu0 %v931
      %955 = vmatprep.subr.bf16.mxu0 0
      %956 = vmatpush2.bf16.msra.mxu0 0
      %957 = vmatprep.subr.bf16.mxu0 0
      %958 = vmatpush2.bf16.msra.mxu0 0
      %959 = vmatprep.subr.bf16.mxu0 0
      %960 = vmatpush2.bf16.msra.mxu0 0
      %961 = vmatprep.subr.bf16.mxu0 0
      %962 = vmatpush2.bf16.msra.mxu0 0
      %963 = vmatprep.subr.bf16.mxu0 0
      %964 = vmatpush2.bf16.msra.mxu0 0
      %965 = vmatprep.subr.bf16.mxu0 0
      %966 = vmatpush2.bf16.msra.mxu0 0
      %967 = vmatprep.subr.bf16.mxu0 0
      %968 = vmatpush2.bf16.msra.mxu0 0
      %969 = vmatprep.subr.bf16.mxu0 0
      %970 = vmatpush2.bf16.msra.mxu0 0
      %971 = vmatprep.mubr.bf16.mxu0 0
      %972 = vmatmul.mubr.bf16.gmra.mxu0 %v937
      %v973 = vpop.f32.mrf.mxu0
      %v974 = vadd.f32 0.0, %v973
      %v975 = vpop.f32.mrf.mxu0
      %v976 = vpop.f32.mrf.mxu0
      %v977 = vpop.f32.mrf.mxu0
      %978 = vdwg.mxu0
      %v979 = vlaneseq
      %v980 = vshrl.u32 %v979, 7
      %v981 = vlaneseq
      %v982 = vand.u32 %v981, 127
      %vm983 = vcmp.ge.s32.totalorder %v980, %v982
      %v984 = vpack.c.bf16 %v974, %v974
      %986 = vrot.lane.b32.xlu0 %v984, 96
      %v987 = vpop.permute.xlu0 %986
      %vm988 = vcmask 64512
      %v990 = vsel %vm988, %v984, 0
      %v993 = vsel %vm988, %v987, 0
      %995 = vmatprep.subr.bf16.mxu0 0
      %996 = vmatpush1.bf16.xpose.msra.mxu0 0
      %997 = vmatprep.subr.bf16.mxu0 0
      %998 = vmatpush1.bf16.xpose.msra.mxu0 0
      %999 = vmatprep.subr.bf16.mxu0 0
      %1000 = vmatpush1.bf16.xpose.msra.mxu0 0
      %1001 = vmatprep.subr.bf16.mxu0 0
      %1002 = vmatpush1.bf16.xpose.msra.mxu0 0
      %1003 = vmatprep.subr.bf16.mxu0 0
      %1004 = vmatpush1.bf16.xpose.msra.mxu0 0
      %1005 = vmatprep.subr.bf16.mxu0 0
      %1006 = vmatpush1.bf16.xpose.msra.mxu0 0
      %1007 = vmatprep.subr.bf16.mxu0 0
      %1008 = vmatpush1.bf16.xpose.msra.mxu0 0
      %1009 = vmatprep.subr.bf16.mxu0 0
      %1010 = vmatpush1.bf16.xpose.msra.mxu0 %v993
      %1011 = vmatprep.subr.bf16.mxu0 0
      %1012 = vmatpush2.bf16.xpose.msra.mxu0 0
      %1013 = vmatprep.subr.bf16.mxu0 0
      %1014 = vmatpush2.bf16.xpose.msra.mxu0 0
      %1015 = vmatprep.subr.bf16.mxu0 0
      %1016 = vmatpush2.bf16.xpose.msra.mxu0 0
      %1017 = vmatprep.subr.bf16.mxu0 0
      %1018 = vmatpush2.bf16.xpose.msra.mxu0 0
      %1019 = vmatprep.subr.bf16.mxu0 0
      %1020 = vmatpush2.bf16.xpose.msra.mxu0 0
      %1021 = vmatprep.subr.bf16.mxu0 0
      %1022 = vmatpush2.bf16.xpose.msra.mxu0 0
      %1023 = vmatprep.subr.bf16.mxu0 0
      %1024 = vmatpush2.bf16.xpose.msra.mxu0 0
      %1025 = vmatprep.subr.bf16.mxu0 0
      %1026 = vmatpush2.bf16.xpose.msra.mxu0 0
      %1027 = vmatprep.mubr.bf16.mxu0 0
      %1028 = vmatmul.mubr.bf16.gmra.mxu0 %v990
      %v1029 = vpop.f32.mrf.mxu0
      %v1030 = vadd.f32 0.0, %v1029
      %v1031 = vpop.f32.mrf.mxu0
      %v1032 = vpop.f32.mrf.mxu0
      %v1033 = vpop.f32.mrf.mxu0
      %1034 = vdwg.mxu0
      %v1035 = vsel %vm983, %v1030, -1e+20
      %v1036 = vsel %vm988, %v1035, -inf
      %1037 = vmax.xlane.f32.xlu0 %v1036
      %v1038 = vpop.xlane.xlu0 %1037
      %v1039 = vsub.f32 %v1035, %v1038
      %v1040 = vmul.f32 %v1039, 1.442695
      %v1041 = vpow.pop %v1040
      %v1042 = vsel %vm988, %v1041, 0.0
      %1043 = vadd.xlane.f32.xlu0 %v1042
      %v1044 = vpop.xlane.xlu0 %1043
      %v1045 = vrcp.pop %v1044
      %v1046 = vmul.f32 %v1041, %v1045
      %v1047 = vpack.c.bf16 %v1046, %v1046
      %1048 = vrot.lane.b32.xlu0 %v984, 64
      %v1049 = vpop.permute.xlu0 %1048
      %v1051 = vsel %vm988, %v1047, 0
      %vm1053 = vcmask 1043456
      %v1055 = vsel %vm1053, %v1049, 0
      %1057 = vmatprep.subr.bf16.mxu0 0
      %1058 = vmatpush1.bf16.msra.mxu0 0
      %1059 = vmatprep.subr.bf16.mxu0 0
      %1060 = vmatpush1.bf16.msra.mxu0 0
      %1061 = vmatprep.subr.bf16.mxu0 0
      %1062 = vmatpush1.bf16.msra.mxu0 0
      %1063 = vmatprep.subr.bf16.mxu0 0
      %1064 = vmatpush1.bf16.msra.mxu0 0
      %1065 = vmatprep.subr.bf16.mxu0 0
      %1066 = vmatpush1.bf16.msra.mxu0 0
      %1067 = vmatprep.subr.bf16.mxu0 0
      %1068 = vmatpush1.bf16.msra.mxu0 0
      %1069 = vmatprep.subr.bf16.mxu0 0
      %1070 = vmatpush1.bf16.msra.mxu0 0
      %1071 = vmatprep.subr.bf16.mxu0 0
      %1072 = vmatpush1.bf16.msra.mxu0 %v1055
      %1073 = vmatprep.subr.bf16.mxu0 0
      %1074 = vmatpush2.bf16.msra.mxu0 0
      %1075 = vmatprep.subr.bf16.mxu0 0
      %1076 = vmatpush2.bf16.msra.mxu0 0
      %1077 = vmatprep.subr.bf16.mxu0 0
      %1078 = vmatpush2.bf16.msra.mxu0 0
      %1079 = vmatprep.subr.bf16.mxu0 0
      %1080 = vmatpush2.bf16.msra.mxu0 0
      %1081 = vmatprep.subr.bf16.mxu0 0
      %1082 = vmatpush2.bf16.msra.mxu0 0
      %1083 = vmatprep.subr.bf16.mxu0 0
      %1084 = vmatpush2.bf16.msra.mxu0 0
      %1085 = vmatprep.subr.bf16.mxu0 0
      %1086 = vmatpush2.bf16.msra.mxu0 0
      %1087 = vmatprep.subr.bf16.mxu0 0
      %1088 = vmatpush2.bf16.msra.mxu0 0
      %1089 = vmatprep.mubr.bf16.mxu0 0
      %1090 = vmatmul.mubr.bf16.gmra.mxu0 %v1051
      %v1091 = vpop.f32.mrf.mxu0
      %v1092 = vadd.f32 0.0, %v1091
      %v1093 = vpop.f32.mrf.mxu0
      %v1094 = vpop.f32.mrf.mxu0
      %v1095 = vpop.f32.mrf.mxu0
      %1096 = vdwg.mxu0
      %1097 = vrot.lane.b32.xlu0 %v984, 120
      %v1098 = vpop.permute.xlu0 %1097
      %1099 = vrot.lane.b32.xlu0 %v984, 88
      %v1100 = vpop.permute.xlu0 %1099
      %v1102 = vsel %vm988, %v1098, 0
      %v1105 = vsel %vm988, %v1100, 0
      %1107 = vmatprep.subr.bf16.mxu0 0
      %1108 = vmatpush1.bf16.xpose.msra.mxu0 0
      %1109 = vmatprep.subr.bf16.mxu0 0
      %1110 = vmatpush1.bf16.xpose.msra.mxu0 0
      %1111 = vmatprep.subr.bf16.mxu0 0
      %1112 = vmatpush1.bf16.xpose.msra.mxu0 0
      %1113 = vmatprep.subr.bf16.mxu0 0
      %1114 = vmatpush1.bf16.xpose.msra.mxu0 0
      %1115 = vmatprep.subr.bf16.mxu0 0
      %1116 = vmatpush1.bf16.xpose.msra.mxu0 0
      %1117 = vmatprep.subr.bf16.mxu0 0
      %1118 = vmatpush1.bf16.xpose.msra.mxu0 0
      %1119 = vmatprep.subr.bf16.mxu0 0
      %1120 = vmatpush1.bf16.xpose.msra.mxu0 0
      %1121 = vmatprep.subr.bf16.mxu0 0
      %1122 = vmatpush1.bf16.xpose.msra.mxu0 %v1105
      %1123 = vmatprep.subr.bf16.mxu0 0
      %1124 = vmatpush2.bf16.xpose.msra.mxu0 0
      %1125 = vmatprep.subr.bf16.mxu0 0
      %1126 = vmatpush2.bf16.xpose.msra.mxu0 0
      %1127 = vmatprep.subr.bf16.mxu0 0
      %1128 = vmatpush2.bf16.xpose.msra.mxu0 0
      %1129 = vmatprep.subr.bf16.mxu0 0
      %1130 = vmatpush2.bf16.xpose.msra.mxu0 0
      %1131 = vmatprep.subr.bf16.mxu0 0
      %1132 = vmatpush2.bf16.xpose.msra.mxu0 0
      %1133 = vmatprep.subr.bf16.mxu0 0
      %1134 = vmatpush2.bf16.xpose.msra.mxu0 0
      %1135 = vmatprep.subr.bf16.mxu0 0
      %1136 = vmatpush2.bf16.xpose.msra.mxu0 0
      %1137 = vmatprep.subr.bf16.mxu0 0
      %1138 = vmatpush2.bf16.xpose.msra.mxu0 0
      %1139 = vmatprep.mubr.bf16.mxu0 0
      %1140 = vmatmul.mubr.bf16.gmra.mxu0 %v1102
      %v1141 = vpop.f32.mrf.mxu0
      %v1142 = vadd.f32 0.0, %v1141
      %v1143 = vpop.f32.mrf.mxu0
      %v1144 = vpop.f32.mrf.mxu0
      %v1145 = vpop.f32.mrf.mxu0
      %1146 = vdwg.mxu0
      %v1147 = vsel %vm983, %v1142, -1e+20
      %v1148 = vsel %vm988, %v1147, -inf
      %1149 = vmax.xlane.f32.xlu0 %v1148
      %v1150 = vpop.xlane.xlu0 %1149
      %v1151 = vsub.f32 %v1147, %v1150
      %v1152 = vmul.f32 %v1151, 1.442695
      %v1153 = vpow.pop %v1152
      %v1154 = vsel %vm988, %v1153, 0.0
      %1155 = vadd.xlane.f32.xlu0 %v1154
      %v1156 = vpop.xlane.xlu0 %1155
      %v1157 = vrcp.pop %v1156
      %v1158 = vmul.f32 %v1153, %v1157
      %v1159 = vpack.c.bf16 %v1158, %v1158
      %1160 = vrot.lane.b32.xlu0 %v984, 56
      %v1161 = vpop.permute.xlu0 %1160
      %v1163 = vsel %vm988, %v1159, 0
      %v1166 = vsel %vm1053, %v1161, 0
      %1168 = vmatprep.subr.bf16.mxu0 0
      %1169 = vmatpush1.bf16.msra.mxu0 0
      %1170 = vmatprep.subr.bf16.mxu0 0
      %1171 = vmatpush1.bf16.msra.mxu0 0
      %1172 = vmatprep.subr.bf16.mxu0 0
      %1173 = vmatpush1.bf16.msra.mxu0 0
      %1174 = vmatprep.subr.bf16.mxu0 0
      %1175 = vmatpush1.bf16.msra.mxu0 0
      %1176 = vmatprep.subr.bf16.mxu0 0
      %1177 = vmatpush1.bf16.msra.mxu0 0
      %1178 = vmatprep.subr.bf16.mxu0 0
      %1179 = vmatpush1.bf16.msra.mxu0 0
      %1180 = vmatprep.subr.bf16.mxu0 0
      %1181 = vmatpush1.bf16.msra.mxu0 0
      %1182 = vmatprep.subr.bf16.mxu0 0
      %1183 = vmatpush1.bf16.msra.mxu0 %v1166
      %1184 = vmatprep.subr.bf16.mxu0 0
      %1185 = vmatpush2.bf16.msra.mxu0 0
      %1186 = vmatprep.subr.bf16.mxu0 0
      %1187 = vmatpush2.bf16.msra.mxu0 0
      %1188 = vmatprep.subr.bf16.mxu0 0
      %1189 = vmatpush2.bf16.msra.mxu0 0
      %1190 = vmatprep.subr.bf16.mxu0 0
      %1191 = vmatpush2.bf16.msra.mxu0 0
      %1192 = vmatprep.subr.bf16.mxu0 0
      %1193 = vmatpush2.bf16.msra.mxu0 0
      %1194 = vmatprep.subr.bf16.mxu0 0
      %1195 = vmatpush2.bf16.msra.mxu0 0
      %1196 = vmatprep.subr.bf16.mxu0 0
      %1197 = vmatpush2.bf16.msra.mxu0 0
      %1198 = vmatprep.subr.bf16.mxu0 0
      %1199 = vmatpush2.bf16.msra.mxu0 0
      %1200 = vmatprep.mubr.bf16.mxu0 0
      %1201 = vmatmul.mubr.bf16.gmra.mxu0 %v1163
      %v1202 = vpop.f32.mrf.mxu0
      %v1203 = vadd.f32 0.0, %v1202
      %v1204 = vpop.f32.mrf.mxu0
      %v1205 = vpop.f32.mrf.mxu0
      %v1206 = vpop.f32.mrf.mxu0
      %1207 = vdwg.mxu0
      %1208 = vrot.lane.b32.xlu0 %v984, 112
      %v1209 = vpop.permute.xlu0 %1208
      %1210 = vrot.lane.b32.xlu0 %v984, 80
      %v1211 = vpop.permute.xlu0 %1210
      %v1213 = vsel %vm988, %v1209, 0
      %v1216 = vsel %vm988, %v1211, 0
      %1218 = vmatprep.subr.bf16.mxu0 0
      %1219 = vmatpush1.bf16.xpose.msra.mxu0 0
      %1220 = vmatprep.subr.bf16.mxu0 0
      %1221 = vmatpush1.bf16.xpose.msra.mxu0 0
      %1222 = vmatprep.subr.bf16.mxu0 0
      %1223 = vmatpush1.bf16.xpose.msra.mxu0 0
      %1224 = vmatprep.subr.bf16.mxu0 0
      %1225 = vmatpush1.bf16.xpose.msra.mxu0 0
      %1226 = vmatprep.subr.bf16.mxu0 0
      %1227 = vmatpush1.bf16.xpose.msra.mxu0 0
      %1228 = vmatprep.subr.bf16.mxu0 0
      %1229 = vmatpush1.bf16.xpose.msra.mxu0 0
      %1230 = vmatprep.subr.bf16.mxu0 0
      %1231 = vmatpush1.bf16.xpose.msra.mxu0 0
      %1232 = vmatprep.subr.bf16.mxu0 0
      %1233 = vmatpush1.bf16.xpose.msra.mxu0 %v1216
      %1234 = vmatprep.subr.bf16.mxu0 0
      %1235 = vmatpush2.bf16.xpose.msra.mxu0 0
      %1236 = vmatprep.subr.bf16.mxu0 0
      %1237 = vmatpush2.bf16.xpose.msra.mxu0 0
      %1238 = vmatprep.subr.bf16.mxu0 0
      %1239 = vmatpush2.bf16.xpose.msra.mxu0 0
      %1240 = vmatprep.subr.bf16.mxu0 0
      %1241 = vmatpush2.bf16.xpose.msra.mxu0 0
      %1242 = vmatprep.subr.bf16.mxu0 0
      %1243 = vmatpush2.bf16.xpose.msra.mxu0 0
      %1244 = vmatprep.subr.bf16.mxu0 0
      %1245 = vmatpush2.bf16.xpose.msra.mxu0 0
      %1246 = vmatprep.subr.bf16.mxu0 0
      %1247 = vmatpush2.bf16.xpose.msra.mxu0 0
      %1248 = vmatprep.subr.bf16.mxu0 0
      %1249 = vmatpush2.bf16.xpose.msra.mxu0 0
      %1250 = vmatprep.mubr.bf16.mxu0 0
      %1251 = vmatmul.mubr.bf16.gmra.mxu0 %v1213
      %v1252 = vpop.f32.mrf.mxu0
      %v1253 = vadd.f32 0.0, %v1252
      %v1254 = vpop.f32.mrf.mxu0
      %v1255 = vpop.f32.mrf.mxu0
      %v1256 = vpop.f32.mrf.mxu0
      %1257 = vdwg.mxu0
      %v1258 = vsel %vm983, %v1253, -1e+20
      %v1259 = vsel %vm988, %v1258, -inf
      %1260 = vmax.xlane.f32.xlu0 %v1259
      %v1261 = vpop.xlane.xlu0 %1260
      %v1262 = vsub.f32 %v1258, %v1261
      %v1263 = vmul.f32 %v1262, 1.442695
      %v1264 = vpow.pop %v1263
      %v1265 = vsel %vm988, %v1264, 0.0
      %1266 = vadd.xlane.f32.xlu0 %v1265
      %v1267 = vpop.xlane.xlu0 %1266
      %v1268 = vrcp.pop %v1267
      %v1269 = vmul.f32 %v1264, %v1268
      %v1270 = vpack.c.bf16 %v1269, %v1269
      %1271 = vrot.lane.b32.xlu0 %v984, 48
      %v1272 = vpop.permute.xlu0 %1271
      %v1274 = vsel %vm988, %v1270, 0
      %v1277 = vsel %vm1053, %v1272, 0
      %1279 = vmatprep.subr.bf16.mxu0 0
      %1280 = vmatpush1.bf16.msra.mxu0 0
      %1281 = vmatprep.subr.bf16.mxu0 0
      %1282 = vmatpush1.bf16.msra.mxu0 0
      %1283 = vmatprep.subr.bf16.mxu0 0
      %1284 = vmatpush1.bf16.msra.mxu0 0
      %1285 = vmatprep.subr.bf16.mxu0 0
      %1286 = vmatpush1.bf16.msra.mxu0 0
      %1287 = vmatprep.subr.bf16.mxu0 0
      %1288 = vmatpush1.bf16.msra.mxu0 0
      %1289 = vmatprep.subr.bf16.mxu0 0
      %1290 = vmatpush1.bf16.msra.mxu0 0
      %1291 = vmatprep.subr.bf16.mxu0 0
      %1292 = vmatpush1.bf16.msra.mxu0 0
      %1293 = vmatprep.subr.bf16.mxu0 0
      %1294 = vmatpush1.bf16.msra.mxu0 %v1277
      %1295 = vmatprep.subr.bf16.mxu0 0
      %1296 = vmatpush2.bf16.msra.mxu0 0
      %1297 = vmatprep.subr.bf16.mxu0 0
      %1298 = vmatpush2.bf16.msra.mxu0 0
      %1299 = vmatprep.subr.bf16.mxu0 0
      %1300 = vmatpush2.bf16.msra.mxu0 0
      %1301 = vmatprep.subr.bf16.mxu0 0
      %1302 = vmatpush2.bf16.msra.mxu0 0
      %1303 = vmatprep.subr.bf16.mxu0 0
      %1304 = vmatpush2.bf16.msra.mxu0 0
      %1305 = vmatprep.subr.bf16.mxu0 0
      %1306 = vmatpush2.bf16.msra.mxu0 0
      %1307 = vmatprep.subr.bf16.mxu0 0
      %1308 = vmatpush2.bf16.msra.mxu0 0
      %1309 = vmatprep.subr.bf16.mxu0 0
      %1310 = vmatpush2.bf16.msra.mxu0 0
      %1311 = vmatprep.mubr.bf16.mxu0 0
      %1312 = vmatmul.mubr.bf16.gmra.mxu0 %v1274
      %v1313 = vpop.f32.mrf.mxu0
      %v1314 = vadd.f32 0.0, %v1313
      %v1315 = vpop.f32.mrf.mxu0
      %v1316 = vpop.f32.mrf.mxu0
      %v1317 = vpop.f32.mrf.mxu0
      %1318 = vdwg.mxu0
      %1319 = vrot.lane.b32.xlu0 %v984, 104
      %v1320 = vpop.permute.xlu0 %1319
      %1321 = vrot.lane.b32.xlu0 %v984, 72
      %v1322 = vpop.permute.xlu0 %1321
      %v1324 = vsel %vm988, %v1320, 0
      %v1327 = vsel %vm988, %v1322, 0
      %1329 = vmatprep.subr.bf16.mxu0 0
      %1330 = vmatpush1.bf16.xpose.msra.mxu0 0
      %1331 = vmatprep.subr.bf16.mxu0 0
      %1332 = vmatpush1.bf16.xpose.msra.mxu0 0
      %1333 = vmatprep.subr.bf16.mxu0 0
      %1334 = vmatpush1.bf16.xpose.msra.mxu0 0
      %1335 = vmatprep.subr.bf16.mxu0 0
      %1336 = vmatpush1.bf16.xpose.msra.mxu0 0
      %1337 = vmatprep.subr.bf16.mxu0 0
      %1338 = vmatpush1.bf16.xpose.msra.mxu0 0
      %1339 = vmatprep.subr.bf16.mxu0 0
      %1340 = vmatpush1.bf16.xpose.msra.mxu0 0
      %1341 = vmatprep.subr.bf16.mxu0 0
      %1342 = vmatpush1.bf16.xpose.msra.mxu0 0
      %1343 = vmatprep.subr.bf16.mxu0 0
      %1344 = vmatpush1.bf16.xpose.msra.mxu0 %v1327
      %1345 = vmatprep.subr.bf16.mxu0 0
      %1346 = vmatpush2.bf16.xpose.msra.mxu0 0
      %1347 = vmatprep.subr.bf16.mxu0 0
      %1348 = vmatpush2.bf16.xpose.msra.mxu0 0
      %1349 = vmatprep.subr.bf16.mxu0 0
      %1350 = vmatpush2.bf16.xpose.msra.mxu0 0
      %1351 = vmatprep.subr.bf16.mxu0 0
      %1352 = vmatpush2.bf16.xpose.msra.mxu0 0
      %1353 = vmatprep.subr.bf16.mxu0 0
      %1354 = vmatpush2.bf16.xpose.msra.mxu0 0
      %1355 = vmatprep.subr.bf16.mxu0 0
      %1356 = vmatpush2.bf16.xpose.msra.mxu0 0
      %1357 = vmatprep.subr.bf16.mxu0 0
      %1358 = vmatpush2.bf16.xpose.msra.mxu0 0
      %1359 = vmatprep.subr.bf16.mxu0 0
      %1360 = vmatpush2.bf16.xpose.msra.mxu0 0
      %1361 = vmatprep.mubr.bf16.mxu0 0
      %1362 = vmatmul.mubr.bf16.gmra.mxu0 %v1324
      %v1363 = vpop.f32.mrf.mxu0
      %v1364 = vadd.f32 0.0, %v1363
      %v1365 = vpop.f32.mrf.mxu0
      %v1366 = vpop.f32.mrf.mxu0
      %v1367 = vpop.f32.mrf.mxu0
      %1368 = vdwg.mxu0
      %v1369 = vsel %vm983, %v1364, -1e+20
      %v1370 = vsel %vm988, %v1369, -inf
      %1371 = vmax.xlane.f32.xlu0 %v1370
      %v1372 = vpop.xlane.xlu0 %1371
      %v1373 = vsub.f32 %v1369, %v1372
      %v1374 = vmul.f32 %v1373, 1.442695
      %v1375 = vpow.pop %v1374
      %v1376 = vsel %vm988, %v1375, 0.0
      %1377 = vadd.xlane.f32.xlu0 %v1376
      %v1378 = vpop.xlane.xlu0 %1377
      %v1379 = vrcp.pop %v1378
      %v1380 = vmul.f32 %v1375, %v1379
      %v1381 = vpack.c.bf16 %v1380, %v1380
      %1382 = vrot.lane.b32.xlu0 %v984, 40
      %v1383 = vpop.permute.xlu0 %1382
      %v1385 = vsel %vm988, %v1381, 0
      %v1388 = vsel %vm1053, %v1383, 0
      %1390 = vmatprep.subr.bf16.mxu0 0
      %1391 = vmatpush1.bf16.msra.mxu0 0
      %1392 = vmatprep.subr.bf16.mxu0 0
      %1393 = vmatpush1.bf16.msra.mxu0 0
      %1394 = vmatprep.subr.bf16.mxu0 0
      %1395 = vmatpush1.bf16.msra.mxu0 0
      %1396 = vmatprep.subr.bf16.mxu0 0
      %1397 = vmatpush1.bf16.msra.mxu0 0
      %1398 = vmatprep.subr.bf16.mxu0 0
      %1399 = vmatpush1.bf16.msra.mxu0 0
      %1400 = vmatprep.subr.bf16.mxu0 0
      %1401 = vmatpush1.bf16.msra.mxu0 0
      %1402 = vmatprep.subr.bf16.mxu0 0
      %1403 = vmatpush1.bf16.msra.mxu0 0
      %1404 = vmatprep.subr.bf16.mxu0 0
      %1405 = vmatpush1.bf16.msra.mxu0 %v1388
      %1406 = vmatprep.subr.bf16.mxu0 0
      %1407 = vmatpush2.bf16.msra.mxu0 0
      %1408 = vmatprep.subr.bf16.mxu0 0
      %1409 = vmatpush2.bf16.msra.mxu0 0
      %1410 = vmatprep.subr.bf16.mxu0 0
      %1411 = vmatpush2.bf16.msra.mxu0 0
      %1412 = vmatprep.subr.bf16.mxu0 0
      %1413 = vmatpush2.bf16.msra.mxu0 0
      %1414 = vmatprep.subr.bf16.mxu0 0
      %1415 = vmatpush2.bf16.msra.mxu0 0
      %1416 = vmatprep.subr.bf16.mxu0 0
      %1417 = vmatpush2.bf16.msra.mxu0 0
      %1418 = vmatprep.subr.bf16.mxu0 0
      %1419 = vmatpush2.bf16.msra.mxu0 0
      %1420 = vmatprep.subr.bf16.mxu0 0
      %1421 = vmatpush2.bf16.msra.mxu0 0
      %1422 = vmatprep.mubr.bf16.mxu0 0
      %1423 = vmatmul.mubr.bf16.gmra.mxu0 %v1385
      %v1424 = vpop.f32.mrf.mxu0
      %v1425 = vadd.f32 0.0, %v1424
      %v1426 = vpop.f32.mrf.mxu0
      %v1427 = vpop.f32.mrf.mxu0
      %v1428 = vpop.f32.mrf.mxu0
      %1429 = vdwg.mxu0
      %1431 = vrot.lane.b32.xlu0 %v1203, 8
      %v1432 = vpop.permute.xlu0 %1431
      %1435 = vrot.lane.b32.xlu0 %v1314, 16
      %v1436 = vpop.permute.xlu0 %1435
      %1439 = vrot.lane.b32.xlu0 %v1425, 24
      %v1440 = vpop.permute.xlu0 %1439
      %v1442 = vsel %vm988, %v1092, %v1432
      %vm1443 = vcmask 130048
      %v1444 = vsel %vm1443, %v1442, %v1436
      %vm1445 = vcmask 195584
      %v1446 = vsel %vm1445, %v1444, %v1440
      %v1447 = vpack.c.bf16 %v1446, %v1446
      %v1449 = vlaneseq
      %v1450 = vshrl.u32 %v1449, 7
      %v1451 = vsub.s32 0, %v1450
      %v1452 = vrot.slane %v921, %v1451
      %v1458 = vunpack.c.l.b16 %v917
      %v1459 = vunpack.c.l.b16 %v918
      %v1460 = vunpack.c.l.b16 %v919
      %v1461 = vunpack.c.l.b16 %v920
      %v1462 = vpack.c.b16 %v1459, %v1458
      %v1463 = vpack.c.b16 %v1461, %v1460
      %v1467 = vsel %vm935, %v1447, 0
      %1469 = vmatprep.subr.bf16.mxu0 0
      %1470 = vmatpush1.bf16.msra.mxu0 0
      %1471 = vmatprep.subr.bf16.mxu0 0
      %1472 = vmatpush1.bf16.msra.mxu0 0
      %1473 = vmatprep.subr.bf16.mxu0 0
      %1474 = vmatpush1.bf16.msra.mxu0 0
      %1475 = vmatprep.subr.bf16.mxu0 0
      %1476 = vmatpush1.bf16.msra.mxu0 0
      %1477 = vmatprep.subr.bf16.mxu0 0
      %1478 = vmatpush1.bf16.msra.mxu0 0
      %1479 = vmatprep.subr.bf16.mxu0 0
      %1480 = vmatpush1.bf16.msra.mxu0 0
      %1481 = vmatprep.subr.bf16.mxu0 0
      %1482 = vmatpush1.bf16.msra.mxu0 %v1463
      %1483 = vmatprep.subr.bf16.mxu0 0
      %1484 = vmatpush1.bf16.msra.mxu0 %v1462
      %1485 = vmatprep.subr.bf16.mxu0 0
      %1486 = vmatpush2.bf16.msra.mxu0 0
      %1487 = vmatprep.subr.bf16.mxu0 0
      %1488 = vmatpush2.bf16.msra.mxu0 0
      %1489 = vmatprep.subr.bf16.mxu0 0
      %1490 = vmatpush2.bf16.msra.mxu0 0
      %1491 = vmatprep.subr.bf16.mxu0 0
      %1492 = vmatpush2.bf16.msra.mxu0 0
      %1493 = vmatprep.subr.bf16.mxu0 0
      %1494 = vmatpush2.bf16.msra.mxu0 0
      %1495 = vmatprep.subr.bf16.mxu0 0
      %1496 = vmatpush2.bf16.msra.mxu0 0
      %1497 = vmatprep.subr.bf16.mxu0 0
      %1498 = vmatpush2.bf16.msra.mxu0 0
      %1499 = vmatprep.subr.bf16.mxu0 0
      %1500 = vmatpush2.bf16.msra.mxu0 0
      %1501 = vmatprep.mubr.bf16.mxu0 0
      %1502 = vmatmul.mubr.bf16.gmra.mxu0 %v1467
      %v1503 = vpop.f32.mrf.mxu0
      %v1504 = vadd.f32 %v1452, %v1503
      %v1505 = vpop.f32.mrf.mxu0
      %v1506 = vpop.f32.mrf.mxu0
      %v1507 = vpop.f32.mrf.mxu0
      %1508 = vdwg.mxu0
      %v1509 = vadd.f32 %v1504, %v909
      %v1510 = vld [vmem:[%s852] sm:$0x1]
      %v1511 = vld [vmem:[%s855] sm:$0x1]
      %v1512 = vsel %vm935, %v1509, 0.0
      %1513 = vadd.xlane.f32.xlu0 %v1512
      %v1514 = vpop.xlane.xlu0 %1513
      %v1515 = vrcp.pop 32.0
      %v1516 = vmul.f32 %v1514, %v1515
      %v1517 = vsub.f32 %v1509, %v1516
      %v1518 = vmul.f32 %v1517, %v1517
      %v1519 = vsel %vm935, %v1518, 0.0
      %1520 = vadd.xlane.f32.xlu0 %v1519
      %v1521 = vpop.xlane.xlu0 %1520
      %v1522 = vmul.f32 %v1521, %v1515
      %v1523 = vadd.f32 %v1522, 1e-05
      %v1524 = vrsqrt.pop %v1523
      %v1525 = vmul.f32 %v1517, %v1524
      %v1527 = vlaneseq
      %v1528 = vshrl.u32 %v1527, 7
      %v1529 = vsub.s32 0, %v1528
      %v1530 = vrot.slane %v1510, %v1529
      %v1532 = vmul.f32 %v1525, %v1530
      %v1534 = vlaneseq
      %v1535 = vshrl.u32 %v1534, 7
      %v1536 = vsub.s32 0, %v1535
      %v1537 = vrot.slane %v1511, %v1536
      %v1539 = vadd.f32 %v1532, %v1537
      %v1540 = vld [vmem:[%s860] sm:$0xf]
      %v1541 = vld [vmem:[%s860 + $0x4] sm:$0xf]
      %v1542 = vld [vmem:[%s860 + $0x8] sm:$0xf]
      %v1543 = vld [vmem:[%s860 + $0xc] sm:$0xf]
      %v1544 = vld [vmem:[%s865] sm:$0xf]
      %v1545 = vld [vmem:[%s865 + $0x4] sm:$0xf]
      %v1546 = vld [vmem:[%s865 + $0x8] sm:$0xf]
      %v1547 = vld [vmem:[%s865 + $0xc] sm:$0xf]
      %v1548 = vld [vmem:[%s868] sm:$0x1]
      %v1549 = vld [vmem:[%s871] sm:$0x1]
      %v1550 = vld [vmem:[%s874] sm:$0x1]
      %v1551 = vld [vmem:[%s879] sm:$0xf]
      %v1552 = vld [vmem:[%s879 + $0x4] sm:$0xf]
      %v1553 = vld [vmem:[%s879 + $0x8] sm:$0xf]
      %v1554 = vld [vmem:[%s879 + $0xc] sm:$0xf]
      %v1555 = vld [vmem:[%s882] sm:$0x1]
      %v1556 = vld [vmem:[%s887] sm:$0xf]
      %v1557 = vld [vmem:[%s887 + $0x4] sm:$0xf]
      %v1558 = vld [vmem:[%s887 + $0x8] sm:$0xf]
      %v1559 = vld [vmem:[%s887 + $0xc] sm:$0xf]
      %v1560 = vld [vmem:[%s887 + $0x10] sm:$0xf]
      %v1561 = vld [vmem:[%s887 + $0x14] sm:$0xf]
      %v1562 = vld [vmem:[%s887 + $0x18] sm:$0xf]
      %v1563 = vld [vmem:[%s887 + $0x1c] sm:$0xf]
      %v1564 = vld [vmem:[%s890] sm:$0x1]
      %v1565 = vld [vmem:[%s893] sm:$0x1]
      %v1566 = vld [vmem:[%s896] sm:$0x1]
      %v1567 = vpack.c.bf16 %v1539, %v1539
      %v1572 = vunpack.c.l.b16 %v1540
      %v1573 = vunpack.c.l.b16 %v1541
      %v1574 = vunpack.c.l.b16 %v1542
      %v1575 = vunpack.c.l.b16 %v1543
      %v1576 = vpack.c.b16 %v1573, %v1572
      %v1577 = vpack.c.b16 %v1575, %v1574
      %v1581 = vsel %vm935, %v1567, 0
      %1583 = vmatprep.subr.bf16.mxu0 0
      %1584 = vmatpush1.bf16.msra.mxu0 0
      %1585 = vmatprep.subr.bf16.mxu0 0
      %1586 = vmatpush1.bf16.msra.mxu0 0
      %1587 = vmatprep.subr.bf16.mxu0 0
      %1588 = vmatpush1.bf16.msra.mxu0 0
      %1589 = vmatprep.subr.bf16.mxu0 0
      %1590 = vmatpush1.bf16.msra.mxu0 0
      %1591 = vmatprep.subr.bf16.mxu0 0
      %1592 = vmatpush1.bf16.msra.mxu0 0
      %1593 = vmatprep.subr.bf16.mxu0 0
      %1594 = vmatpush1.bf16.msra.mxu0 0
      %1595 = vmatprep.subr.bf16.mxu0 0
      %1596 = vmatpush1.bf16.msra.mxu0 %v1577
      %1597 = vmatprep.subr.bf16.mxu0 0
      %1598 = vmatpush1.bf16.msra.mxu0 %v1576
      %1599 = vmatprep.subr.bf16.mxu0 0
      %1600 = vmatpush2.bf16.msra.mxu0 0
      %1601 = vmatprep.subr.bf16.mxu0 0
      %1602 = vmatpush2.bf16.msra.mxu0 0
      %1603 = vmatprep.subr.bf16.mxu0 0
      %1604 = vmatpush2.bf16.msra.mxu0 0
      %1605 = vmatprep.subr.bf16.mxu0 0
      %1606 = vmatpush2.bf16.msra.mxu0 0
      %1607 = vmatprep.subr.bf16.mxu0 0
      %1608 = vmatpush2.bf16.msra.mxu0 0
      %1609 = vmatprep.subr.bf16.mxu0 0
      %1610 = vmatpush2.bf16.msra.mxu0 0
      %1611 = vmatprep.subr.bf16.mxu0 0
      %1612 = vmatpush2.bf16.msra.mxu0 0
      %1613 = vmatprep.subr.bf16.mxu0 0
      %1614 = vmatpush2.bf16.msra.mxu0 0
      %1615 = vmatprep.mubr.bf16.mxu0 0
      %1616 = vmatmul.mubr.bf16.gmra.mxu0 %v1581
      %v1617 = vpop.f32.mrf.mxu0
      %v1618 = vadd.f32 0.0, %v1617
      %v1619 = vpop.f32.mrf.mxu0
      %v1620 = vpop.f32.mrf.mxu0
      %v1621 = vpop.f32.mrf.mxu0
      %1622 = vdwg.mxu0
      %1623 = vrot.lane.b32.xlu0 %v1576, 96
      %v1624 = vpop.permute.xlu0 %1623
      %1625 = vrot.lane.b32.xlu0 %v1577, 96
      %v1626 = vpop.permute.xlu0 %1625
      %v1630 = vsel %vm935, %v910, 0
      %1632 = vmatprep.subr.bf16.mxu0 0
      %1633 = vmatpush1.bf16.msra.mxu0 0
      %1634 = vmatprep.subr.bf16.mxu0 0
      %1635 = vmatpush1.bf16.msra.mxu0 0
      %1636 = vmatprep.subr.bf16.mxu0 0
      %1637 = vmatpush1.bf16.msra.mxu0 0
      %1638 = vmatprep.subr.bf16.mxu0 0
      %1639 = vmatpush1.bf16.msra.mxu0 0
      %1640 = vmatprep.subr.bf16.mxu0 0
      %1641 = vmatpush1.bf16.msra.mxu0 0
      %1642 = vmatprep.subr.bf16.mxu0 0
      %1643 = vmatpush1.bf16.msra.mxu0 0
      %1644 = vmatprep.subr.bf16.mxu0 0
      %1645 = vmatpush1.bf16.msra.mxu0 %v1626
      %1646 = vmatprep.subr.bf16.mxu0 0
      %1647 = vmatpush1.bf16.msra.mxu0 %v1624
      %1648 = vmatprep.subr.bf16.mxu0 0
      %1649 = vmatpush2.bf16.msra.mxu0 0
      %1650 = vmatprep.subr.bf16.mxu0 0
      %1651 = vmatpush2.bf16.msra.mxu0 0
      %1652 = vmatprep.subr.bf16.mxu0 0
      %1653 = vmatpush2.bf16.msra.mxu0 0
      %1654 = vmatprep.subr.bf16.mxu0 0
      %1655 = vmatpush2.bf16.msra.mxu0 0
      %1656 = vmatprep.subr.bf16.mxu0 0
      %1657 = vmatpush2.bf16.msra.mxu0 0
      %1658 = vmatprep.subr.bf16.mxu0 0
      %1659 = vmatpush2.bf16.msra.mxu0 0
      %1660 = vmatprep.subr.bf16.mxu0 0
      %1661 = vmatpush2.bf16.msra.mxu0 0
      %1662 = vmatprep.subr.bf16.mxu0 0
      %1663 = vmatpush2.bf16.msra.mxu0 0
      %1664 = vmatprep.mubr.bf16.mxu0 0
      %1665 = vmatmul.mubr.bf16.gmra.mxu0 %v1630
      %v1666 = vpop.f32.mrf.mxu0
      %v1667 = vadd.f32 0.0, %v1666
      %v1668 = vpop.f32.mrf.mxu0
      %v1669 = vpop.f32.mrf.mxu0
      %v1670 = vpop.f32.mrf.mxu0
      %1671 = vdwg.mxu0
      %v1672 = vpack.c.bf16 %v1618, %v1618
      %v1673 = vpack.c.bf16 %v1667, %v1667
      %v1675 = vsel %vm988, %v1672, 0
      %v1678 = vsel %vm988, %v1673, 0
      %1680 = vmatprep.subr.bf16.mxu0 0
      %1681 = vmatpush1.bf16.xpose.msra.mxu0 0
      %1682 = vmatprep.subr.bf16.mxu0 0
      %1683 = vmatpush1.bf16.xpose.msra.mxu0 0
      %1684 = vmatprep.subr.bf16.mxu0 0
      %1685 = vmatpush1.bf16.xpose.msra.mxu0 0
      %1686 = vmatprep.subr.bf16.mxu0 0
      %1687 = vmatpush1.bf16.xpose.msra.mxu0 0
      %1688 = vmatprep.subr.bf16.mxu0 0
      %1689 = vmatpush1.bf16.xpose.msra.mxu0 0
      %1690 = vmatprep.subr.bf16.mxu0 0
      %1691 = vmatpush1.bf16.xpose.msra.mxu0 0
      %1692 = vmatprep.subr.bf16.mxu0 0
      %1693 = vmatpush1.bf16.xpose.msra.mxu0 0
      %1694 = vmatprep.subr.bf16.mxu0 0
      %1695 = vmatpush1.bf16.xpose.msra.mxu0 %v1678
      %1696 = vmatprep.subr.bf16.mxu0 0
      %1697 = vmatpush2.bf16.xpose.msra.mxu0 0
      %1698 = vmatprep.subr.bf16.mxu0 0
      %1699 = vmatpush2.bf16.xpose.msra.mxu0 0
      %1700 = vmatprep.subr.bf16.mxu0 0
      %1701 = vmatpush2.bf16.xpose.msra.mxu0 0
      %1702 = vmatprep.subr.bf16.mxu0 0
      %1703 = vmatpush2.bf16.xpose.msra.mxu0 0
      %1704 = vmatprep.subr.bf16.mxu0 0
      %1705 = vmatpush2.bf16.xpose.msra.mxu0 0
      %1706 = vmatprep.subr.bf16.mxu0 0
      %1707 = vmatpush2.bf16.xpose.msra.mxu0 0
      %1708 = vmatprep.subr.bf16.mxu0 0
      %1709 = vmatpush2.bf16.xpose.msra.mxu0 0
      %1710 = vmatprep.subr.bf16.mxu0 0
      %1711 = vmatpush2.bf16.xpose.msra.mxu0 0
      %1712 = vmatprep.mubr.bf16.mxu0 0
      %1713 = vmatmul.mubr.bf16.gmra.mxu0 %v1675
      %v1714 = vpop.f32.mrf.mxu0
      %v1715 = vadd.f32 0.0, %v1714
      %v1716 = vpop.f32.mrf.mxu0
      %v1717 = vpop.f32.mrf.mxu0
      %v1718 = vpop.f32.mrf.mxu0
      %1719 = vdwg.mxu0
      %v1720 = vsel %vm912, 1, 0
      %v1721 = vlaneseq
      %v1722 = vshrl.u32 %v1721, 7
      %v1723 = vsub.s32 0, %v1722
      %v1724 = vrot.slane %v1720, %v1723
      %vm1725 = vcmp.eq.s32.totalorder %v1724, 1
      %v1726 = vsel %vm1725, -1e+20, %v1715
      %v1727 = vsel %vm988, %v1726, -inf
      %1728 = vmax.xlane.f32.xlu0 %v1727
      %v1729 = vpop.xlane.xlu0 %1728
      %v1730 = vsub.f32 %v1726, %v1729
      %v1731 = vmul.f32 %v1730, 1.442695
      %v1732 = vpow.pop %v1731
      %v1733 = vsel %vm988, %v1732, 0.0
      %1734 = vadd.xlane.f32.xlu0 %v1733
      %v1735 = vpop.xlane.xlu0 %1734
      %v1736 = vrcp.pop %v1735
      %v1737 = vmul.f32 %v1732, %v1736
      %v1738 = vpack.c.bf16 %v1737, %v1737
      %1740 = vrot.lane.b32.xlu0 %v1673, 96
      %v1741 = vpop.permute.xlu0 %1740
      %v1743 = vsel %vm988, %v1738, 0
      %v1746 = vsel %vm1053, %v1741, 0
      %1748 = vmatprep.subr.bf16.mxu0 0
      %1749 = vmatpush1.bf16.msra.mxu0 0
      %1750 = vmatprep.subr.bf16.mxu0 0
      %1751 = vmatpush1.bf16.msra.mxu0 0
      %1752 = vmatprep.subr.bf16.mxu0 0
      %1753 = vmatpush1.bf16.msra.mxu0 0
      %1754 = vmatprep.subr.bf16.mxu0 0
      %1755 = vmatpush1.bf16.msra.mxu0 0
      %1756 = vmatprep.subr.bf16.mxu0 0
      %1757 = vmatpush1.bf16.msra.mxu0 0
      %1758 = vmatprep.subr.bf16.mxu0 0
      %1759 = vmatpush1.bf16.msra.mxu0 0
      %1760 = vmatprep.subr.bf16.mxu0 0
      %1761 = vmatpush1.bf16.msra.mxu0 0
      %1762 = vmatprep.subr.bf16.mxu0 0
      %1763 = vmatpush1.bf16.msra.mxu0 %v1746
      %1764 = vmatprep.subr.bf16.mxu0 0
      %1765 = vmatpush2.bf16.msra.mxu0 0
      %1766 = vmatprep.subr.bf16.mxu0 0
      %1767 = vmatpush2.bf16.msra.mxu0 0
      %1768 = vmatprep.subr.bf16.mxu0 0
      %1769 = vmatpush2.bf16.msra.mxu0 0
      %1770 = vmatprep.subr.bf16.mxu0 0
      %1771 = vmatpush2.bf16.msra.mxu0 0
      %1772 = vmatprep.subr.bf16.mxu0 0
      %1773 = vmatpush2.bf16.msra.mxu0 0
      %1774 = vmatprep.subr.bf16.mxu0 0
      %1775 = vmatpush2.bf16.msra.mxu0 0
      %1776 = vmatprep.subr.bf16.mxu0 0
      %1777 = vmatpush2.bf16.msra.mxu0 0
      %1778 = vmatprep.subr.bf16.mxu0 0
      %1779 = vmatpush2.bf16.msra.mxu0 0
      %1780 = vmatprep.mubr.bf16.mxu0 0
      %1781 = vmatmul.mubr.bf16.gmra.mxu0 %v1743
      %v1782 = vpop.f32.mrf.mxu0
      %v1783 = vadd.f32 0.0, %v1782
      %v1784 = vpop.f32.mrf.mxu0
      %v1785 = vpop.f32.mrf.mxu0
      %v1786 = vpop.f32.mrf.mxu0
      %1787 = vdwg.mxu0
      %1789 = vrot.lane.b32.xlu0 %v1672, 120
      %v1790 = vpop.permute.xlu0 %1789
      %1791 = vrot.lane.b32.xlu0 %v1673, 120
      %v1792 = vpop.permute.xlu0 %1791
      %v1794 = vsel %vm988, %v1790, 0
      %v1797 = vsel %vm988, %v1792, 0
      %1799 = vmatprep.subr.bf16.mxu0 0
      %1800 = vmatpush1.bf16.xpose.msra.mxu0 0
      %1801 = vmatprep.subr.bf16.mxu0 0
      %1802 = vmatpush1.bf16.xpose.msra.mxu0 0
      %1803 = vmatprep.subr.bf16.mxu0 0
      %1804 = vmatpush1.bf16.xpose.msra.mxu0 0
      %1805 = vmatprep.subr.bf16.mxu0 0
      %1806 = vmatpush1.bf16.xpose.msra.mxu0 0
      %1807 = vmatprep.subr.bf16.mxu0 0
      %1808 = vmatpush1.bf16.xpose.msra.mxu0 0
      %1809 = vmatprep.subr.bf16.mxu0 0
      %1810 = vmatpush1.bf16.xpose.msra.mxu0 0
      %1811 = vmatprep.subr.bf16.mxu0 0
      %1812 = vmatpush1.bf16.xpose.msra.mxu0 0
      %1813 = vmatprep.subr.bf16.mxu0 0
      %1814 = vmatpush1.bf16.xpose.msra.mxu0 %v1797
      %1815 = vmatprep.subr.bf16.mxu0 0
      %1816 = vmatpush2.bf16.xpose.msra.mxu0 0
      %1817 = vmatprep.subr.bf16.mxu0 0
      %1818 = vmatpush2.bf16.xpose.msra.mxu0 0
      %1819 = vmatprep.subr.bf16.mxu0 0
      %1820 = vmatpush2.bf16.xpose.msra.mxu0 0
      %1821 = vmatprep.subr.bf16.mxu0 0
      %1822 = vmatpush2.bf16.xpose.msra.mxu0 0
      %1823 = vmatprep.subr.bf16.mxu0 0
      %1824 = vmatpush2.bf16.xpose.msra.mxu0 0
      %1825 = vmatprep.subr.bf16.mxu0 0
      %1826 = vmatpush2.bf16.xpose.msra.mxu0 0
      %1827 = vmatprep.subr.bf16.mxu0 0
      %1828 = vmatpush2.bf16.xpose.msra.mxu0 0
      %1829 = vmatprep.subr.bf16.mxu0 0
      %1830 = vmatpush2.bf16.xpose.msra.mxu0 0
      %1831 = vmatprep.mubr.bf16.mxu0 0
      %1832 = vmatmul.mubr.bf16.gmra.mxu0 %v1794
      %v1833 = vpop.f32.mrf.mxu0
      %v1834 = vadd.f32 0.0, %v1833
      %v1835 = vpop.f32.mrf.mxu0
      %v1836 = vpop.f32.mrf.mxu0
      %v1837 = vpop.f32.mrf.mxu0
      %1838 = vdwg.mxu0
      %v1839 = vsel %vm1725, -1e+20, %v1834
      %v1840 = vsel %vm988, %v1839, -inf
      %1841 = vmax.xlane.f32.xlu0 %v1840
      %v1842 = vpop.xlane.xlu0 %1841
      %v1843 = vsub.f32 %v1839, %v1842
      %v1844 = vmul.f32 %v1843, 1.442695
      %v1845 = vpow.pop %v1844
      %v1846 = vsel %vm988, %v1845, 0.0
      %1847 = vadd.xlane.f32.xlu0 %v1846
      %v1848 = vpop.xlane.xlu0 %1847
      %v1849 = vrcp.pop %v1848
      %v1850 = vmul.f32 %v1845, %v1849
      %v1851 = vpack.c.bf16 %v1850, %v1850
      %1852 = vrot.lane.b32.xlu0 %v1673, 88
      %v1853 = vpop.permute.xlu0 %1852
      %v1855 = vsel %vm988, %v1851, 0
      %v1858 = vsel %vm1053, %v1853, 0
      %1860 = vmatprep.subr.bf16.mxu0 0
      %1861 = vmatpush1.bf16.msra.mxu0 0
      %1862 = vmatprep.subr.bf16.mxu0 0
      %1863 = vmatpush1.bf16.msra.mxu0 0
      %1864 = vmatprep.subr.bf16.mxu0 0
      %1865 = vmatpush1.bf16.msra.mxu0 0
      %1866 = vmatprep.subr.bf16.mxu0 0
      %1867 = vmatpush1.bf16.msra.mxu0 0
      %1868 = vmatprep.subr.bf16.mxu0 0
      %1869 = vmatpush1.bf16.msra.mxu0 0
      %1870 = vmatprep.subr.bf16.mxu0 0
      %1871 = vmatpush1.bf16.msra.mxu0 0
      %1872 = vmatprep.subr.bf16.mxu0 0
      %1873 = vmatpush1.bf16.msra.mxu0 0
      %1874 = vmatprep.subr.bf16.mxu0 0
      %1875 = vmatpush1.bf16.msra.mxu0 %v1858
      %1876 = vmatprep.subr.bf16.mxu0 0
      %1877 = vmatpush2.bf16.msra.mxu0 0
      %1878 = vmatprep.subr.bf16.mxu0 0
      %1879 = vmatpush2.bf16.msra.mxu0 0
      %1880 = vmatprep.subr.bf16.mxu0 0
      %1881 = vmatpush2.bf16.msra.mxu0 0
      %1882 = vmatprep.subr.bf16.mxu0 0
      %1883 = vmatpush2.bf16.msra.mxu0 0
      %1884 = vmatprep.subr.bf16.mxu0 0
      %1885 = vmatpush2.bf16.msra.mxu0 0
      %1886 = vmatprep.subr.bf16.mxu0 0
      %1887 = vmatpush2.bf16.msra.mxu0 0
      %1888 = vmatprep.subr.bf16.mxu0 0
      %1889 = vmatpush2.bf16.msra.mxu0 0
      %1890 = vmatprep.subr.bf16.mxu0 0
      %1891 = vmatpush2.bf16.msra.mxu0 0
      %1892 = vmatprep.mubr.bf16.mxu0 0
      %1893 = vmatmul.mubr.bf16.gmra.mxu0 %v1855
      %v1894 = vpop.f32.mrf.mxu0
      %v1895 = vadd.f32 0.0, %v1894
      %v1896 = vpop.f32.mrf.mxu0
      %v1897 = vpop.f32.mrf.mxu0
      %v1898 = vpop.f32.mrf.mxu0
      %1899 = vdwg.mxu0
      %1900 = vrot.lane.b32.xlu0 %v1672, 112
      %v1901 = vpop.permute.xlu0 %1900
      %1902 = vrot.lane.b32.xlu0 %v1673, 112
      %v1903 = vpop.permute.xlu0 %1902
      %v1905 = vsel %vm988, %v1901, 0
      %v1908 = vsel %vm988, %v1903, 0
      %1910 = vmatprep.subr.bf16.mxu0 0
      %1911 = vmatpush1.bf16.xpose.msra.mxu0 0
      %1912 = vmatprep.subr.bf16.mxu0 0
      %1913 = vmatpush1.bf16.xpose.msra.mxu0 0
      %1914 = vmatprep.subr.bf16.mxu0 0
      %1915 = vmatpush1.bf16.xpose.msra.mxu0 0
      %1916 = vmatprep.subr.bf16.mxu0 0
      %1917 = vmatpush1.bf16.xpose.msra.mxu0 0
      %1918 = vmatprep.subr.bf16.mxu0 0
      %1919 = vmatpush1.bf16.xpose.msra.mxu0 0
      %1920 = vmatprep.subr.bf16.mxu0 0
      %1921 = vmatpush1.bf16.xpose.msra.mxu0 0
      %1922 = vmatprep.subr.bf16.mxu0 0
      %1923 = vmatpush1.bf16.xpose.msra.mxu0 0
      %1924 = vmatprep.subr.bf16.mxu0 0
      %1925 = vmatpush1.bf16.xpose.msra.mxu0 %v1908
      %1926 = vmatprep.subr.bf16.mxu0 0
      %1927 = vmatpush2.bf16.xpose.msra.mxu0 0
      %1928 = vmatprep.subr.bf16.mxu0 0
      %1929 = vmatpush2.bf16.xpose.msra.mxu0 0
      %1930 = vmatprep.subr.bf16.mxu0 0
      %1931 = vmatpush2.bf16.xpose.msra.mxu0 0
      %1932 = vmatprep.subr.bf16.mxu0 0
      %1933 = vmatpush2.bf16.xpose.msra.mxu0 0
      %1934 = vmatprep.subr.bf16.mxu0 0
      %1935 = vmatpush2.bf16.xpose.msra.mxu0 0
      %1936 = vmatprep.subr.bf16.mxu0 0
      %1937 = vmatpush2.bf16.xpose.msra.mxu0 0
      %1938 = vmatprep.subr.bf16.mxu0 0
      %1939 = vmatpush2.bf16.xpose.msra.mxu0 0
      %1940 = vmatprep.subr.bf16.mxu0 0
      %1941 = vmatpush2.bf16.xpose.msra.mxu0 0
      %1942 = vmatprep.mubr.bf16.mxu0 0
      %1943 = vmatmul.mubr.bf16.gmra.mxu0 %v1905
      %v1944 = vpop.f32.mrf.mxu0
      %v1945 = vadd.f32 0.0, %v1944
      %v1946 = vpop.f32.mrf.mxu0
      %v1947 = vpop.f32.mrf.mxu0
      %v1948 = vpop.f32.mrf.mxu0
      %1949 = vdwg.mxu0
      %v1950 = vsel %vm1725, -1e+20, %v1945
      %v1951 = vsel %vm988, %v1950, -inf
      %1952 = vmax.xlane.f32.xlu0 %v1951
      %v1953 = vpop.xlane.xlu0 %1952
      %v1954 = vsub.f32 %v1950, %v1953
      %v1955 = vmul.f32 %v1954, 1.442695
      %v1956 = vpow.pop %v1955
      %v1957 = vsel %vm988, %v1956, 0.0
      %1958 = vadd.xlane.f32.xlu0 %v1957
      %v1959 = vpop.xlane.xlu0 %1958
      %v1960 = vrcp.pop %v1959
      %v1961 = vmul.f32 %v1956, %v1960
      %v1962 = vpack.c.bf16 %v1961, %v1961
      %1963 = vrot.lane.b32.xlu0 %v1673, 80
      %v1964 = vpop.permute.xlu0 %1963
      %v1966 = vsel %vm988, %v1962, 0
      %v1969 = vsel %vm1053, %v1964, 0
      %1971 = vmatprep.subr.bf16.mxu0 0
      %1972 = vmatpush1.bf16.msra.mxu0 0
      %1973 = vmatprep.subr.bf16.mxu0 0
      %1974 = vmatpush1.bf16.msra.mxu0 0
      %1975 = vmatprep.subr.bf16.mxu0 0
      %1976 = vmatpush1.bf16.msra.mxu0 0
      %1977 = vmatprep.subr.bf16.mxu0 0
      %1978 = vmatpush1.bf16.msra.mxu0 0
      %1979 = vmatprep.subr.bf16.mxu0 0
      %1980 = vmatpush1.bf16.msra.mxu0 0
      %1981 = vmatprep.subr.bf16.mxu0 0
      %1982 = vmatpush1.bf16.msra.mxu0 0
      %1983 = vmatprep.subr.bf16.mxu0 0
      %1984 = vmatpush1.bf16.msra.mxu0 0
      %1985 = vmatprep.subr.bf16.mxu0 0
      %1986 = vmatpush1.bf16.msra.mxu0 %v1969
      %1987 = vmatprep.subr.bf16.mxu0 0
      %1988 = vmatpush2.bf16.msra.mxu0 0
      %1989 = vmatprep.subr.bf16.mxu0 0
      %1990 = vmatpush2.bf16.msra.mxu0 0
      %1991 = vmatprep.subr.bf16.mxu0 0
      %1992 = vmatpush2.bf16.msra.mxu0 0
      %1993 = vmatprep.subr.bf16.mxu0 0
      %1994 = vmatpush2.bf16.msra.mxu0 0
      %1995 = vmatprep.subr.bf16.mxu0 0
      %1996 = vmatpush2.bf16.msra.mxu0 0
      %1997 = vmatprep.subr.bf16.mxu0 0
      %1998 = vmatpush2.bf16.msra.mxu0 0
      %1999 = vmatprep.subr.bf16.mxu0 0
      %2000 = vmatpush2.bf16.msra.mxu0 0
      %2001 = vmatprep.subr.bf16.mxu0 0
      %2002 = vmatpush2.bf16.msra.mxu0 0
      %2003 = vmatprep.mubr.bf16.mxu0 0
      %2004 = vmatmul.mubr.bf16.gmra.mxu0 %v1966
      %v2005 = vpop.f32.mrf.mxu0
      %v2006 = vadd.f32 0.0, %v2005
      %v2007 = vpop.f32.mrf.mxu0
      %v2008 = vpop.f32.mrf.mxu0
      %v2009 = vpop.f32.mrf.mxu0
      %2010 = vdwg.mxu0
      %2011 = vrot.lane.b32.xlu0 %v1672, 104
      %v2012 = vpop.permute.xlu0 %2011
      %2013 = vrot.lane.b32.xlu0 %v1673, 104
      %v2014 = vpop.permute.xlu0 %2013
      %v2016 = vsel %vm988, %v2012, 0
      %v2019 = vsel %vm988, %v2014, 0
      %2021 = vmatprep.subr.bf16.mxu0 0
      %2022 = vmatpush1.bf16.xpose.msra.mxu0 0
      %2023 = vmatprep.subr.bf16.mxu0 0
      %2024 = vmatpush1.bf16.xpose.msra.mxu0 0
      %2025 = vmatprep.subr.bf16.mxu0 0
      %2026 = vmatpush1.bf16.xpose.msra.mxu0 0
      %2027 = vmatprep.subr.bf16.mxu0 0
      %2028 = vmatpush1.bf16.xpose.msra.mxu0 0
      %2029 = vmatprep.subr.bf16.mxu0 0
      %2030 = vmatpush1.bf16.xpose.msra.mxu0 0
      %2031 = vmatprep.subr.bf16.mxu0 0
      %2032 = vmatpush1.bf16.xpose.msra.mxu0 0
      %2033 = vmatprep.subr.bf16.mxu0 0
      %2034 = vmatpush1.bf16.xpose.msra.mxu0 0
      %2035 = vmatprep.subr.bf16.mxu0 0
      %2036 = vmatpush1.bf16.xpose.msra.mxu0 %v2019
      %2037 = vmatprep.subr.bf16.mxu0 0
      %2038 = vmatpush2.bf16.xpose.msra.mxu0 0
      %2039 = vmatprep.subr.bf16.mxu0 0
      %2040 = vmatpush2.bf16.xpose.msra.mxu0 0
      %2041 = vmatprep.subr.bf16.mxu0 0
      %2042 = vmatpush2.bf16.xpose.msra.mxu0 0
      %2043 = vmatprep.subr.bf16.mxu0 0
      %2044 = vmatpush2.bf16.xpose.msra.mxu0 0
      %2045 = vmatprep.subr.bf16.mxu0 0
      %2046 = vmatpush2.bf16.xpose.msra.mxu0 0
      %2047 = vmatprep.subr.bf16.mxu0 0
      %2048 = vmatpush2.bf16.xpose.msra.mxu0 0
      %2049 = vmatprep.subr.bf16.mxu0 0
      %2050 = vmatpush2.bf16.xpose.msra.mxu0 0
      %2051 = vmatprep.subr.bf16.mxu0 0
      %2052 = vmatpush2.bf16.xpose.msra.mxu0 0
      %2053 = vmatprep.mubr.bf16.mxu0 0
      %2054 = vmatmul.mubr.bf16.gmra.mxu0 %v2016
      %v2055 = vpop.f32.mrf.mxu0
      %v2056 = vadd.f32 0.0, %v2055
      %v2057 = vpop.f32.mrf.mxu0
      %v2058 = vpop.f32.mrf.mxu0
      %v2059 = vpop.f32.mrf.mxu0
      %2060 = vdwg.mxu0
      %v2061 = vsel %vm1725, -1e+20, %v2056
      %v2062 = vsel %vm988, %v2061, -inf
      %2063 = vmax.xlane.f32.xlu0 %v2062
      %v2064 = vpop.xlane.xlu0 %2063
      %v2065 = vsub.f32 %v2061, %v2064
      %v2066 = vmul.f32 %v2065, 1.442695
      %v2067 = vpow.pop %v2066
      %v2068 = vsel %vm988, %v2067, 0.0
      %2069 = vadd.xlane.f32.xlu0 %v2068
      %v2070 = vpop.xlane.xlu0 %2069
      %v2071 = vrcp.pop %v2070
      %v2072 = vmul.f32 %v2067, %v2071
      %v2073 = vpack.c.bf16 %v2072, %v2072
      %2074 = vrot.lane.b32.xlu0 %v1673, 72
      %v2075 = vpop.permute.xlu0 %2074
      %v2077 = vsel %vm988, %v2073, 0
      %v2080 = vsel %vm1053, %v2075, 0
      %2082 = vmatprep.subr.bf16.mxu0 0
      %2083 = vmatpush1.bf16.msra.mxu0 0
      %2084 = vmatprep.subr.bf16.mxu0 0
      %2085 = vmatpush1.bf16.msra.mxu0 0
      %2086 = vmatprep.subr.bf16.mxu0 0
      %2087 = vmatpush1.bf16.msra.mxu0 0
      %2088 = vmatprep.subr.bf16.mxu0 0
      %2089 = vmatpush1.bf16.msra.mxu0 0
      %2090 = vmatprep.subr.bf16.mxu0 0
      %2091 = vmatpush1.bf16.msra.mxu0 0
      %2092 = vmatprep.subr.bf16.mxu0 0
      %2093 = vmatpush1.bf16.msra.mxu0 0
      %2094 = vmatprep.subr.bf16.mxu0 0
      %2095 = vmatpush1.bf16.msra.mxu0 0
      %2096 = vmatprep.subr.bf16.mxu0 0
      %2097 = vmatpush1.bf16.msra.mxu0 %v2080
      %2098 = vmatprep.subr.bf16.mxu0 0
      %2099 = vmatpush2.bf16.msra.mxu0 0
      %2100 = vmatprep.subr.bf16.mxu0 0
      %2101 = vmatpush2.bf16.msra.mxu0 0
      %2102 = vmatprep.subr.bf16.mxu0 0
      %2103 = vmatpush2.bf16.msra.mxu0 0
      %2104 = vmatprep.subr.bf16.mxu0 0
      %2105 = vmatpush2.bf16.msra.mxu0 0
      %2106 = vmatprep.subr.bf16.mxu0 0
      %2107 = vmatpush2.bf16.msra.mxu0 0
      %2108 = vmatprep.subr.bf16.mxu0 0
      %2109 = vmatpush2.bf16.msra.mxu0 0
      %2110 = vmatprep.subr.bf16.mxu0 0
      %2111 = vmatpush2.bf16.msra.mxu0 0
      %2112 = vmatprep.subr.bf16.mxu0 0
      %2113 = vmatpush2.bf16.msra.mxu0 0
      %2114 = vmatprep.mubr.bf16.mxu0 0
      %2115 = vmatmul.mubr.bf16.gmra.mxu0 %v2077
      %v2116 = vpop.f32.mrf.mxu0
      %v2117 = vadd.f32 0.0, %v2116
      %v2118 = vpop.f32.mrf.mxu0
      %v2119 = vpop.f32.mrf.mxu0
      %v2120 = vpop.f32.mrf.mxu0
      %2121 = vdwg.mxu0
      %2123 = vrot.lane.b32.xlu0 %v1895, 8
      %v2124 = vpop.permute.xlu0 %2123
      %2127 = vrot.lane.b32.xlu0 %v2006, 16
      %v2128 = vpop.permute.xlu0 %2127
      %2131 = vrot.lane.b32.xlu0 %v2117, 24
      %v2132 = vpop.permute.xlu0 %2131
      %v2134 = vsel %vm988, %v1783, %v2124
      %v2135 = vsel %vm1443, %v2134, %v2128
      %v2136 = vsel %vm1445, %v2135, %v2132
      %v2137 = vpack.c.bf16 %v2136, %v2136
      %v2139 = vlaneseq
      %v2140 = vshrl.u32 %v2139, 7
      %v2141 = vsub.s32 0, %v2140
      %v2142 = vrot.slane %v1548, %v2141
      %v2148 = vunpack.c.l.b16 %v1544
      %v2149 = vunpack.c.l.b16 %v1545
      %v2150 = vunpack.c.l.b16 %v1546
      %v2151 = vunpack.c.l.b16 %v1547
      %v2152 = vpack.c.b16 %v2149, %v2148
      %v2153 = vpack.c.b16 %v2151, %v2150
      %v2157 = vsel %vm935, %v2137, 0
      %2159 = vmatprep.subr.bf16.mxu0 0
      %2160 = vmatpush1.bf16.msra.mxu0 0
      %2161 = vmatprep.subr.bf16.mxu0 0
      %2162 = vmatpush1.bf16.msra.mxu0 0
      %2163 = vmatprep.subr.bf16.mxu0 0
      %2164 = vmatpush1.bf16.msra.mxu0 0
      %2165 = vmatprep.subr.bf16.mxu0 0
      %2166 = vmatpush1.bf16.msra.mxu0 0
      %2167 = vmatprep.subr.bf16.mxu0 0
      %2168 = vmatpush1.bf16.msra.mxu0 0
      %2169 = vmatprep.subr.bf16.mxu0 0
      %2170 = vmatpush1.bf16.msra.mxu0 0
      %2171 = vmatprep.subr.bf16.mxu0 0
      %2172 = vmatpush1.bf16.msra.mxu0 %v2153
      %2173 = vmatprep.subr.bf16.mxu0 0
      %2174 = vmatpush1.bf16.msra.mxu0 %v2152
      %2175 = vmatprep.subr.bf16.mxu0 0
      %2176 = vmatpush2.bf16.msra.mxu0 0
      %2177 = vmatprep.subr.bf16.mxu0 0
      %2178 = vmatpush2.bf16.msra.mxu0 0
      %2179 = vmatprep.subr.bf16.mxu0 0
      %2180 = vmatpush2.bf16.msra.mxu0 0
      %2181 = vmatprep.subr.bf16.mxu0 0
      %2182 = vmatpush2.bf16.msra.mxu0 0
      %2183 = vmatprep.subr.bf16.mxu0 0
      %2184 = vmatpush2.bf16.msra.mxu0 0
      %2185 = vmatprep.subr.bf16.mxu0 0
      %2186 = vmatpush2.bf16.msra.mxu0 0
      %2187 = vmatprep.subr.bf16.mxu0 0
      %2188 = vmatpush2.bf16.msra.mxu0 0
      %2189 = vmatprep.subr.bf16.mxu0 0
      %2190 = vmatpush2.bf16.msra.mxu0 0
      %2191 = vmatprep.mubr.bf16.mxu0 0
      %2192 = vmatmul.mubr.bf16.gmra.mxu0 %v2157
      %v2193 = vpop.f32.mrf.mxu0
      %v2194 = vadd.f32 %v2142, %v2193
      %v2195 = vpop.f32.mrf.mxu0
      %v2196 = vpop.f32.mrf.mxu0
      %v2197 = vpop.f32.mrf.mxu0
      %2198 = vdwg.mxu0
      %v2199 = vadd.f32 %v2194, %v1539
      %v2200 = vsel %vm935, %v2199, 0.0
      %2201 = vadd.xlane.f32.xlu0 %v2200
      %v2202 = vpop.xlane.xlu0 %2201
      %v2203 = vmul.f32 %v2202, %v1515
      %v2204 = vsub.f32 %v2199, %v2203
      %v2205 = vmul.f32 %v2204, %v2204
      %v2206 = vsel %vm935, %v2205, 0.0
      %2207 = vadd.xlane.f32.xlu0 %v2206
      %v2208 = vpop.xlane.xlu0 %2207
      %v2209 = vmul.f32 %v2208, %v1515
      %v2210 = vadd.f32 %v2209, 1e-05
      %v2211 = vrsqrt.pop %v2210
      %v2212 = vmul.f32 %v2204, %v2211
      %v2214 = vlaneseq
      %v2215 = vshrl.u32 %v2214, 7
      %v2216 = vsub.s32 0, %v2215
      %v2217 = vrot.slane %v1549, %v2216
      %v2219 = vmul.f32 %v2212, %v2217
      %v2221 = vlaneseq
      %v2222 = vshrl.u32 %v2221, 7
      %v2223 = vsub.s32 0, %v2222
      %v2224 = vrot.slane %v1550, %v2223
      %v2226 = vadd.f32 %v2219, %v2224
      %v2227 = vpack.c.bf16 %v2226, %v2226
      %v2229 = vlaneseq
      %v2230 = vshrl.u32 %v2229, 7
      %v2231 = vsub.s32 0, %v2230
      %v2232 = vrot.slane %v1555, %v2231
      %v2238 = vunpack.c.l.b16 %v1551
      %v2239 = vunpack.c.l.b16 %v1552
      %v2240 = vunpack.c.l.b16 %v1553
      %v2241 = vunpack.c.l.b16 %v1554
      %v2242 = vpack.c.b16 %v2239, %v2238
      %v2243 = vpack.c.b16 %v2241, %v2240
      %v2247 = vsel %vm935, %v2227, 0
      %2249 = vmatprep.subr.bf16.mxu0 0
      %2250 = vmatpush1.bf16.msra.mxu0 0
      %2251 = vmatprep.subr.bf16.mxu0 0
      %2252 = vmatpush1.bf16.msra.mxu0 0
      %2253 = vmatprep.subr.bf16.mxu0 0
      %2254 = vmatpush1.bf16.msra.mxu0 0
      %2255 = vmatprep.subr.bf16.mxu0 0
      %2256 = vmatpush1.bf16.msra.mxu0 0
      %2257 = vmatprep.subr.bf16.mxu0 0
      %2258 = vmatpush1.bf16.msra.mxu0 0
      %2259 = vmatprep.subr.bf16.mxu0 0
      %2260 = vmatpush1.bf16.msra.mxu0 0
      %2261 = vmatprep.subr.bf16.mxu0 0
      %2262 = vmatpush1.bf16.msra.mxu0 %v2243
      %2263 = vmatprep.subr.bf16.mxu0 0
      %2264 = vmatpush1.bf16.msra.mxu0 %v2242
      %2265 = vmatprep.subr.bf16.mxu0 0
      %2266 = vmatpush2.bf16.msra.mxu0 0
      %2267 = vmatprep.subr.bf16.mxu0 0
      %2268 = vmatpush2.bf16.msra.mxu0 0
      %2269 = vmatprep.subr.bf16.mxu0 0
      %2270 = vmatpush2.bf16.msra.mxu0 0
      %2271 = vmatprep.subr.bf16.mxu0 0
      %2272 = vmatpush2.bf16.msra.mxu0 0
      %2273 = vmatprep.subr.bf16.mxu0 0
      %2274 = vmatpush2.bf16.msra.mxu0 0
      %2275 = vmatprep.subr.bf16.mxu0 0
      %2276 = vmatpush2.bf16.msra.mxu0 0
      %2277 = vmatprep.subr.bf16.mxu0 0
      %2278 = vmatpush2.bf16.msra.mxu0 0
      %2279 = vmatprep.subr.bf16.mxu0 0
      %2280 = vmatpush2.bf16.msra.mxu0 0
      %2281 = vmatprep.mubr.bf16.mxu0 0
      %2282 = vmatmul.mubr.bf16.gmra.mxu0 %v2247
      %v2283 = vpop.f32.mrf.mxu0
      %v2284 = vadd.f32 %v2232, %v2283
      %v2285 = vpop.f32.mrf.mxu0
      %v2286 = vpop.f32.mrf.mxu0
      %v2287 = vpop.f32.mrf.mxu0
      %2288 = vdwg.mxu0
      %v2289 = vmax.f32 %v2284, 0.0
      %v2290 = vpack.c.bf16 %v2289, %v2289
      %v2292 = vlaneseq
      %v2293 = vshrl.u32 %v2292, 7
      %v2294 = vsub.s32 0, %v2293
      %v2295 = vrot.slane %v1564, %v2294
      %v2305 = vunpack.c.l.b16 %v1556
      %v2306 = vunpack.c.l.b16 %v1557
      %v2307 = vunpack.c.l.b16 %v1558
      %v2308 = vunpack.c.l.b16 %v1559
      %v2309 = vunpack.c.l.b16 %v1560
      %v2310 = vunpack.c.l.b16 %v1561
      %v2311 = vunpack.c.l.b16 %v1562
      %v2312 = vunpack.c.l.b16 %v1563
      %v2313 = vpack.c.b16 %v2306, %v2305
      %v2314 = vpack.c.b16 %v2308, %v2307
      %v2315 = vpack.c.b16 %v2310, %v2309
      %v2316 = vpack.c.b16 %v2312, %v2311
      %vm2321 = vcmask 523264
      %v2323 = vsel %vm2321, %v2290, 0
      %2325 = vmatprep.subr.bf16.mxu0 0
      %2326 = vmatpush1.bf16.msra.mxu0 0
      %2327 = vmatprep.subr.bf16.mxu0 0
      %2328 = vmatpush1.bf16.msra.mxu0 0
      %2329 = vmatprep.subr.bf16.mxu0 0
      %2330 = vmatpush1.bf16.msra.mxu0 0
      %2331 = vmatprep.subr.bf16.mxu0 0
      %2332 = vmatpush1.bf16.msra.mxu0 0
      %2333 = vmatprep.subr.bf16.mxu0 0
      %2334 = vmatpush1.bf16.msra.mxu0 %v2316
      %2335 = vmatprep.subr.bf16.mxu0 0
      %2336 = vmatpush1.bf16.msra.mxu0 %v2315
      %2337 = vmatprep.subr.bf16.mxu0 0
      %2338 = vmatpush1.bf16.msra.mxu0 %v2314
      %2339 = vmatprep.subr.bf16.mxu0 0
      %2340 = vmatpush1.bf16.msra.mxu0 %v2313
      %2341 = vmatprep.subr.bf16.mxu0 0
      %2342 = vmatpush2.bf16.msra.mxu0 0
      %2343 = vmatprep.subr.bf16.mxu0 0
      %2344 = vmatpush2.bf16.msra.mxu0 0
      %2345 = vmatprep.subr.bf16.mxu0 0
      %2346 = vmatpush2.bf16.msra.mxu0 0
      %2347 = vmatprep.subr.bf16.mxu0 0
      %2348 = vmatpush2.bf16.msra.mxu0 0
      %2349 = vmatprep.subr.bf16.mxu0 0
      %2350 = vmatpush2.bf16.msra.mxu0 0
      %2351 = vmatprep.subr.bf16.mxu0 0
      %2352 = vmatpush2.bf16.msra.mxu0 0
      %2353 = vmatprep.subr.bf16.mxu0 0
      %2354 = vmatpush2.bf16.msra.mxu0 0
      %2355 = vmatprep.subr.bf16.mxu0 0
      %2356 = vmatpush2.bf16.msra.mxu0 0
      %2357 = vmatprep.mubr.bf16.mxu0 0
      %2358 = vmatmul.mubr.bf16.gmra.mxu0 %v2323
      %v2359 = vpop.f32.mrf.mxu0
      %v2360 = vadd.f32 %v2295, %v2359
      %v2361 = vpop.f32.mrf.mxu0
      %v2362 = vpop.f32.mrf.mxu0
      %v2363 = vpop.f32.mrf.mxu0
      %2364 = vdwg.mxu0
      %v2365 = vadd.f32 %v2360, %v2226
      %v2366 = vsel %vm935, %v2365, 0.0
      %2367 = vadd.xlane.f32.xlu0 %v2366
      %v2368 = vpop.xlane.xlu0 %2367
      %v2369 = vmul.f32 %v2368, %v1515
      %v2370 = vsub.f32 %v2365, %v2369
      %v2371 = vmul.f32 %v2370, %v2370
      %v2372 = vsel %vm935, %v2371, 0.0
      %2373 = vadd.xlane.f32.xlu0 %v2372
      %v2374 = vpop.xlane.xlu0 %2373
      %v2375 = vmul.f32 %v2374, %v1515
      %v2376 = vadd.f32 %v2375, 1e-05
      %v2377 = vrsqrt.pop %v2376
      %v2378 = vmul.f32 %v2370, %v2377
      %v2380 = vlaneseq
      %v2381 = vshrl.u32 %v2380, 7
      %v2382 = vsub.s32 0, %v2381
      %v2383 = vrot.slane %v1565, %v2382
      %v2385 = vmul.f32 %v2378, %v2383
      %v2387 = vlaneseq
      %v2388 = vshrl.u32 %v2387, 7
      %v2389 = vsub.s32 0, %v2388
      %v2390 = vrot.slane %v1566, %v2389
      %v2392 = vadd.f32 %v2385, %v2390
      %2393 = vst.msk [vmem:[#allocation2] sm:$0xff] %vm935, %v2392
      %p2394 = scmp.eq.s32.totalorder %s35, 1
      // Predicated region
      $region101: #{_lambda_.4} parent=95 // pred_check
        %p2395 = pneg %p2394
      $region102: #{_lambda_.4} parent=95 // pred_check_branch
        %2397 = sbr.rel (%p2395) target = $region104
      $region103: #{_lambda_.4} parent=95 // pred_region
        %v2398 = vpack.c.bf16 %v2392, %v2392
        %vm2399 = vcmask 257024
        %2400 = vst.msk [vmem:[%s900] sm:$0xf] %vm2399, %v2398
      $region104: #{_lambda_.4} parent=95 // pred_fallthru
        _
      %p2401 = scmp.lt.s32.totalorder %s34, 1
      %s2402 = scalar_select %p2401, %s34, 1
      %s2403 = smul.addr %s2402, 4
      %s2404 = scalar_lea.vmem %s19, %s2403
      // Predicated region
      $region105: #{_lambda_.4} parent=95 // pred_check
        %p2405 = pneg %p554
      $region106: #{_lambda_.4} parent=95 // pred_check_branch
        %2407 = sbr.rel (%p2405) target = $region108
      $region107: #{_lambda_.4} parent=95 // pred_region
        _
      $region108: #{_lambda_.4} parent=95 // pred_fallthru
        _
    $region96: #{_lambda_.4} parent=5 // pred_fallthru
      _
    %p2408 = scmp.le.s32.totalorder 2, %s25
    // Predicated region
    $region109: #{_lambda_.4} parent=5 // pred_check
      %p2409 = pneg %p2408
    $region110: #{_lambda_.4} parent=5 // pred_check_branch
      %2411 = sbr.rel (%p2409) target = $region112
    $region111: #{_lambda_.4} parent=5 // pred_region
      %s2412 = ssub.s32 %s25, 2
      // Predicated region
      $region113: #{_lambda_.4} parent=111 // pred_check
        %p2413 = pneg %p560
      $region114: #{_lambda_.4} parent=111 // pred_check_branch
        %2415 = sbr.rel (%p2413) target = $region116
      $region115: #{_lambda_.4} parent=111 // pred_region
        %p2416 = scmp.lt.s32.totalorder %s36, 1
        %s2417 = scalar_select %p2416, %s36, 1
        %s2418 = smul.addr %s2417, 4
        %s2419 = scalar_lea.vmem %s19, %s2418
      $region116: #{_lambda_.4} parent=111 // pred_fallthru
        _
    $region112: #{_lambda_.4} parent=5 // pred_fallthru
      _
  $region6: #{_lambda_.4} parent=0 // loop_footer
    %s29 = sadd.s32 1, %s25
  $region7: #{_lambda_.4} parent=0 // loop_footer_branch
    %24 = sbr.rel target = $region3
  $region8: #{_lambda_.4} parent=0 // loop_exit
    _

</llo_original>
